<compile_context>
chip_gen: v7x
topology: tpu7x:2x2x1
jax: 0.10.0
libtpu: 0.0.40
codegen_flags: <defaults>
</compile_context>

<pallas_src>
import functools

import jax
import jax.numpy as jnp
from jax import lax
from jax.experimental import pallas as pl
from jax.experimental.pallas import tpu as pltpu


# ----------------------------- fused Pallas kernel --------------------------

def _lenet_fused_kernel(x_ref, t1_ref, b1_ref, c1_ref, t2_ref, b2_ref,
                        c2_ref, g1_ref, bf1_ref, wf2_ref, bf2_ref, o_ref):
    """Whole LeNet forward for one batch tile (bt images), entirely in VMEM.

    Activation "sheets" use rows ordered (spatial_row, batch) so that 2x2
    row pooling and the conv2 / fc1 row windows are aligned sublane slices:
      y1 : (24*bt, 240)  rows=(i , b)  cols=(j  * 10 + c1out)
      a1 : (12*bt, 128)  rows=(i1, b)  cols=(j1 * 10 + c1out), cols 120.. = 0
      y2 : ( 8*bt, 160)  rows=(i2, b)  cols=(j2 * 20 + c2out)
      a2 : ( 4*bt, 128)  rows=(i3, b)  cols=(j3 * 20 + c2out), cols  80.. = 0
    """
    f32 = jnp.float32
    bt = x_ref.shape[1]

    # ---- conv1 (1 -> 10, k=5): ONE tap-fused Toeplitz matmul, K = 5*28 = 140
    xs = x_ref[...].reshape(24 * bt, 140)                                 # rows = (i, b)
    y1 = jnp.dot(xs, t1_ref[...], preferred_element_type=f32) + b1_ref[...]   # (24*bt, 240)

    # ---- max_pool2d(2) + ReLU
    # row pairs: with (i, b) row order, even/odd i are bt-row slabs -> pure VPU max
    y1 = y1.reshape(12, 2 * bt, 240)
    p1 = jnp.maximum(y1[:, :bt, :], y1[:, bt:, :]).reshape(12 * bt, 240)
    # column (width) pairs via tiny batch-independent 0/1 selector matmuls
    a1 = jnp.maximum(
        jnp.maximum(jnp.dot(p1, c1_ref[0], preferred_element_type=f32),
                    jnp.dot(p1, c1_ref[1], preferred_element_type=f32)), 0.0)  # (12*bt, 128)

    # ---- conv2 (10 -> 20, k=5): ONE tap-fused matmul, K = 5*128 = 640
    #      (Dropout2d == identity in eval mode, matching the reference)
    a1 = a1.reshape(12, bt, 128)
    zs = jnp.concatenate([a1[di:di + 8] for di in range(5)], axis=-1)     # (8, bt, 640)
    y2 = jnp.dot(zs.reshape(8 * bt, 640), t2_ref[...],
                 preferred_element_type=f32) + b2_ref[...]                # (8*bt, 160)

    # ---- max_pool2d(2) + ReLU
    y2 = y2.reshape(4, 2 * bt, 160)
    p2 = jnp.maximum(y2[:, :bt, :], y2[:, bt:, :]).reshape(4 * bt, 160)
    a2 = jnp.maximum(
        jnp.maximum(jnp.dot(p2, c2_ref[0], preferred_element_type=f32),
                    jnp.dot(p2, c2_ref[1], preferred_element_type=f32)), 0.0)  # (4*bt, 128)

    # ---- x.view(-1, 320) -> fc1 -> ReLU  (flatten order folded into g1)
    #      F.dropout == identity in eval mode
    a2 = a2.reshape(4, bt, 128)
    flat = jnp.concatenate([a2[i3] for i3 in range(4)], axis=-1)          # (bt, 512)
    h = jnp.maximum(jnp.dot(flat, g1_ref[...], preferred_element_type=f32)
                    + bf1_ref[...], 0.0)                                  # (bt, 50)
    # TODO(synk): training-mode F.dropout / nn.Dropout2d masks (pltpu.prng_*) not implemented.

    # ---- fc2
    o_ref[...] = jnp.dot(h, wf2_ref[...], preferred_element_type=f32) + bf2_ref[...]


# ------------------- host-side (one-time) constant preparation --------------

def prepare_lenet_operands(params):
    """Reshuffle PyTorch-layout weights into the matmul operands used by the
    fused kernel.  Called ONCE (outside the jitted forward); all operands are
    batch-tile independent and total ~1.1 MB (VMEM resident)."""
    f32 = jnp.float32
    w1 = params["w_conv1"].astype(f32)          # (10, 1, 5, 5)   (co, ci, di, dj)
    w2 = params["w_conv2"].astype(f32)          # (20, 10, 5, 5)

    # conv1 fused-tap Toeplitz:  T1[di*28 + w, j*10 + co] = w1[co, 0, di, w - j]
    w1p = jnp.transpose(w1[:, 0], (1, 2, 0))                                # (di, dj, co)
    jg, dg = jnp.meshgrid(jnp.arange(24), jnp.arange(5), indexing="ij")     # (24, 5)
    t1 = jnp.zeros((5, 28, 24, 10), f32)
    t1 = t1.at[:, jg + dg, jg, :].set(
        jnp.broadcast_to(w1p[:, None, :, :], (5, 24, 5, 10)))
    t1 = t1.reshape(140, 240)

    # pool1 column-pair selectors over cols (j*10+co), output padded 120 -> 128
    j1 = jnp.arange(12)[:, None]
    ch = jnp.arange(10)[None, :]
    dst1 = (j1 * 10 + ch).reshape(-1)
    c1 = jnp.zeros((2, 240, 128), f32)
    c1 = c1.at[0, (2 * j1 * 10 + ch).reshape(-1), dst1].set(1.0)
    c1 = c1.at[1, ((2 * j1 + 1) * 10 + ch).reshape(-1), dst1].set(1.0)

    # conv2 fused-tap Toeplitz on 128-padded a1 columns:
    #   T2[di*128 + j1*10 + c, j2*20 + co] = w2[co, c, di, j1 - j2]
    w2p = jnp.transpose(w2, (2, 3, 1, 0))                                   # (di, dj, c, co)
    j2g, d2g = jnp.meshgrid(jnp.arange(8), jnp.arange(5), indexing="ij")    # (8, 5)
    t2 = jnp.zeros((5, 12, 8, 10, 20), f32)                                 # [di, j1, j2, c, co]
    t2 = t2.at[:, j2g + d2g, j2g, :, :].set(
        jnp.broadcast_to(w2p[:, None, :, :, :], (5, 8, 5, 10, 20)))
    t2 = jnp.transpose(t2, (0, 1, 3, 2, 4)).reshape(5, 120, 160)            # rows=(j1,c)
    t2 = jnp.pad(t2, ((0, 0), (0, 8), (0, 0))).reshape(640, 160)

    # pool2 column-pair selectors over cols (j2*20+co), output padded 80 -> 128
    j3 = jnp.arange(4)[:, None]
    co = jnp.arange(20)[None, :]
    dst2 = (j3 * 20 + co).reshape(-1)
    c2 = jnp.zeros((2, 160, 128), f32)
    c2 = c2.at[0, (2 * j3 * 20 + co).reshape(-1), dst2].set(1.0)
    c2 = c2.at[1, ((2 * j3 + 1) * 20 + co).reshape(-1), dst2].set(1.0)

    # fc1 weight with the kernel's (i3, j3, co) flatten order, 128-padded i3 blocks:
    #   G1[i3*128 + j3*20 + co, n] = w_fc1[n, co*16 + i3*4 + j3]
    g1 = jnp.transpose(params["w_fc1"].astype(f32).reshape(50, 20, 4, 4),
                       (2, 3, 1, 0)).reshape(4, 80, 50)                     # (i3, j3*20+co, n)
    g1 = jnp.pad(g1, ((0, 0), (0, 48), (0, 0))).reshape(512, 50)

    return (t1,
            jnp.tile(params["b_conv1"].astype(f32), 24)[None, :],           # (1, 240)
            c1, t2,
            jnp.tile(params["b_conv2"].astype(f32), 8)[None, :],            # (1, 160)
            c2, g1,
            params["b_fc1"].astype(f32)[None, :],                           # (1, 50)
            params["w_fc2"].astype(f32).T,                                  # (50, 10)
            params["b_fc2"].astype(f32)[None, :])                           # (1, 10)


def _full_block_spec(arr):
    n = arr.ndim
    return pl.BlockSpec(arr.shape, lambda b, _n=n: (0,) * _n)


@functools.partial(jax.jit, static_argnames=("batch_tile",))
def lenet_forward(x, ops, batch_tile=32):
    """x: (B, 1, 28, 28) float32 NCHW, ops: prepare_lenet_operands(params).
    Returns (B, 10) logits."""
    B = x.shape[0]
    assert B % batch_tile == 0, "batch must be a multiple of batch_tile"
    assert batch_tile % 8 == 0, "batch_tile must be a multiple of 8"

    # Wrapper-side layout plumbing (cheap XLA ops, ~13 KB/image): im2col the
    # five conv1 row taps along the last axis and put rows in (H, B) order so
    # the kernel's conv1 is a single dense matmul and all in-kernel row ops
    # are 8-sublane-aligned slices.
    x3 = x.reshape(B, 28, 28).astype(jnp.float32)                # Cin == 1
    xcat = jnp.concatenate([x3[:, di:di + 24, :] for di in range(5)], axis=-1)
    x_in = jnp.transpose(xcat, (1, 0, 2))                        # (24, B, 140)

    in_specs = [pl.BlockSpec((24, batch_tile, 140), lambda b: (0, b, 0))]
    in_specs += [_full_block_spec(a) for a in ops]

    return pl.pallas_call(
        _lenet_fused_kernel,
        out_shape=jax.ShapeDtypeStruct((B, 10), jnp.float32),
        grid=(B // batch_tile,),
        in_specs=in_specs,
        out_specs=pl.BlockSpec((batch_tile, 10), lambda b: (b, 0)),
        compiler_params=pltpu.CompilerParams(
            dimension_semantics=("parallel",)),
    )(x_in, *ops)


# ------------------------------ reference & init ----------------------------

def init_params(key):
    """Deterministic init, PyTorch shape conventions."""
    ks = jax.random.split(key, 8)

    def u(k, shape, fan_in):
        bound = 1.0 / (float(fan_in) ** 0.5)
        return jax.random.uniform(k, shape, jnp.float32, -bound, bound)

    return {
        "w_conv1": u(ks[0], (10, 1, 5, 5), 25),      # Conv2d(1, 10, 5)
        "b_conv1": u(ks[1], (10,), 25),
        "w_conv2": u(ks[2], (20, 10, 5, 5), 250),    # Conv2d(10, 20, 5)
        "b_conv2": u(ks[3], (20,), 250),
        "w_fc1": u(ks[4], (50, 320), 320),           # Linear(320, 50)
        "b_fc1": u(ks[5], (50,), 320),
        "w_fc2": u(ks[6], (10, 50), 50),             # Linear(50, 10)
        "b_fc2": u(ks[7], (10,), 50),
    }


def lenet_reference(x, params):
    """Pure-JAX reference reproducing the PyTorch forward (eval mode)."""
    dn = ("NCHW", "OIHW", "NCHW")
    y = lax.conv_general_dilated(x, params["w_conv1"], (1, 1), "VALID",
                                 dimension_numbers=dn)
    y = y + params["b_conv1"][None, :, None, None]
    y = lax.reduce_window(y, -jnp.inf, lax.max, (1, 1, 2, 2), (1, 1, 2, 2), "VALID")
    y = jnp.maximum(y, 0.0)
    y = lax.conv_general_dilated(y, params["w_conv2"], (1, 1), "VALID",
                                 dimension_numbers=dn)
    y = y + params["b_conv2"][None, :, None, None]
    y = lax.reduce_window(y, -jnp.inf, lax.max, (1, 1, 2, 2), (1, 1, 2, 2), "VALID")
    y = jnp.maximum(y, 0.0)
    f = y.reshape(x.shape[0], 320)
    h = jnp.maximum(f @ params["w_fc1"].T + params["b_fc1"], 0.0)
    return h @ params["w_fc2"].T + params["b_fc2"]


if __name__ == "__main__":
    key = jax.random.PRNGKey(0)
    pkey, xkey = jax.random.split(key)
    params = init_params(pkey)

    # Constants prepared ONCE, outside the jitted forward (review item 7).
    ops = prepare_lenet_operands(params)
    ops = jax.block_until_ready(ops)

    # MNIST-shaped input (the 320-feature flatten forces 1x28x28); batch = 64
    # with batch_tile = 32 -> grid = (2,) parallel steps (feeds both v7x TCs).
    x = jax.random.normal(xkey, (64, 1, 28, 28), jnp.float32)

    out = lenet_forward(x, ops, batch_tile=32)
    out = jax.block_until_ready(out)

    ref = lenet_reference(x, params)
    assert out.shape == (64, 10), out.shape
    err = float(jnp.max(jnp.abs(out - ref)))
    assert err < 1e-3, f"max abs err {err}"

    print("KERNEL_OK")
</pallas_src>

<mosaic_0001>
module attributes {stable_mosaic.version = 11 : i64} {
  func.func @_lenet_fused_kernel(%arg0: i32, %arg1: memref<24x32x140xf32, #tpu.memory_space<vmem>>, %arg2: memref<140x240xf32, #tpu.memory_space<vmem>>, %arg3: memref<1x240xf32, #tpu.memory_space<vmem>>, %arg4: memref<2x240x128xf32, #tpu.memory_space<vmem>>, %arg5: memref<640x160xf32, #tpu.memory_space<vmem>>, %arg6: memref<1x160xf32, #tpu.memory_space<vmem>>, %arg7: memref<2x160x128xf32, #tpu.memory_space<vmem>>, %arg8: memref<512x50xf32, #tpu.memory_space<vmem>>, %arg9: memref<1x50xf32, #tpu.memory_space<vmem>>, %arg10: memref<50x10xf32, #tpu.memory_space<vmem>>, %arg11: memref<1x10xf32, #tpu.memory_space<vmem>>, %arg12: memref<32x10xf32, #tpu.memory_space<vmem>>) attributes {dimension_semantics = [#tpu.dimension_semantics<parallel>], iteration_bounds = array<i64: 2>, scalar_prefetch = 0 : i64, scratch_operands = 0 : i64, tpu.core_type = #tpu.core_type<tc>, window_params = [{transform_indices = @transform_0, window_bounds = array<i64: 24, 32, 140>}, {pipeline_mode = #tpu.pipeline_mode<synchronous>, transform_indices = @transform_1, window_bounds = array<i64: 140, 240>}, {pipeline_mode = #tpu.pipeline_mode<synchronous>, transform_indices = @transform_2, window_bounds = array<i64: 1, 240>}, {pipeline_mode = #tpu.pipeline_mode<synchronous>, transform_indices = @transform_3, window_bounds = array<i64: 2, 240, 128>}, {pipeline_mode = #tpu.pipeline_mode<synchronous>, transform_indices = @transform_4, window_bounds = array<i64: 640, 160>}, {pipeline_mode = #tpu.pipeline_mode<synchronous>, transform_indices = @transform_5, window_bounds = array<i64: 1, 160>}, {pipeline_mode = #tpu.pipeline_mode<synchronous>, transform_indices = @transform_6, window_bounds = array<i64: 2, 160, 128>}, {pipeline_mode = #tpu.pipeline_mode<synchronous>, transform_indices = @transform_7, window_bounds = array<i64: 512, 50>}, {pipeline_mode = #tpu.pipeline_mode<synchronous>, transform_indices = @transform_8, window_bounds = array<i64: 1, 50>}, {pipeline_mode = #tpu.pipeline_mode<synchronous>, transform_indices = @transform_9, window_bounds = array<i64: 50, 10>}, {pipeline_mode = #tpu.pipeline_mode<synchronous>, transform_indices = @transform_10, window_bounds = array<i64: 1, 10>}, {transform_indices = @transform_11, window_bounds = array<i64: 32, 10>}]} {
    %c0 = arith.constant 0 : index
    %c0_0 = arith.constant 0 : index
    %c0_1 = arith.constant 0 : index
    %0 = vector.load %arg1[%c0, %c0_0, %c0_1] : memref<24x32x140xf32, #tpu.memory_space<vmem>>, vector<24x32x140xf32>
    %1 = vector.shape_cast %0 : vector<24x32x140xf32> to vector<768x140xf32>
    %c0_2 = arith.constant 0 : index
    %c0_3 = arith.constant 0 : index
    %2 = vector.load %arg2[%c0_2, %c0_3] : memref<140x240xf32, #tpu.memory_space<vmem>>, vector<140x240xf32>
    %cst = arith.constant dense<0.000000e+00> : vector<768x240xf32>
    %3 = tpu.matmul %1, %2, %cst {dimension_numbers = #tpu.dot_dimension_numbers<[1], [0], [0], [1], [0, 0, 1, 1], [], []>} : vector<768x140xf32>, vector<140x240xf32>, vector<768x240xf32> -> vector<768x240xf32>
    %c0_4 = arith.constant 0 : index
    %c0_5 = arith.constant 0 : index
    %4 = vector.load %arg3[%c0_4, %c0_5] : memref<1x240xf32, #tpu.memory_space<vmem>>, vector<1x240xf32>
    %5 = vector.broadcast %4 : vector<1x240xf32> to vector<768x240xf32>
    %6 = arith.addf %3, %5 : vector<768x240xf32>
    %7 = vector.shape_cast %6 : vector<768x240xf32> to vector<12x64x240xf32>
    %8 = vector.extract_strided_slice %7 {offsets = [0, 0, 0], sizes = [12, 32, 240], strides = [1, 1, 1]} : vector<12x64x240xf32> to vector<12x32x240xf32>
    %9 = vector.extract_strided_slice %7 {offsets = [0, 32, 0], sizes = [12, 32, 240], strides = [1, 1, 1]} : vector<12x64x240xf32> to vector<12x32x240xf32>
    %10 = arith.maximumf %8, %9 : vector<12x32x240xf32>
    %11 = vector.shape_cast %10 : vector<12x32x240xf32> to vector<384x240xf32>
    %c0_6 = arith.constant 0 : index
    %c0_7 = arith.constant 0 : index
    %c0_8 = arith.constant 0 : index
    %12 = vector.load %arg4[%c0_6, %c0_7, %c0_8] : memref<2x240x128xf32, #tpu.memory_space<vmem>>, vector<1x240x128xf32>
    %13 = vector.shape_cast %12 : vector<1x240x128xf32> to vector<240x128xf32>
    %cst_9 = arith.constant dense<0.000000e+00> : vector<384x128xf32>
    %14 = tpu.matmul %11, %13, %cst_9 {dimension_numbers = #tpu.dot_dimension_numbers<[1], [0], [0], [1], [0, 0, 1, 1], [], []>} : vector<384x240xf32>, vector<240x128xf32>, vector<384x128xf32> -> vector<384x128xf32>
    %c1 = arith.constant 1 : index
    %c0_10 = arith.constant 0 : index
    %c0_11 = arith.constant 0 : index
    %15 = vector.load %arg4[%c1, %c0_10, %c0_11] : memref<2x240x128xf32, #tpu.memory_space<vmem>>, vector<1x240x128xf32>
    %16 = vector.shape_cast %15 : vector<1x240x128xf32> to vector<240x128xf32>
    %cst_12 = arith.constant dense<0.000000e+00> : vector<384x128xf32>
    %17 = tpu.matmul %11, %16, %cst_12 {dimension_numbers = #tpu.dot_dimension_numbers<[1], [0], [0], [1], [0, 0, 1, 1], [], []>} : vector<384x240xf32>, vector<240x128xf32>, vector<384x128xf32> -> vector<384x128xf32>
    %18 = arith.maximumf %14, %17 : vector<384x128xf32>
    %cst_13 = arith.constant 0.000000e+00 : f32
    %19 = vector.broadcast %cst_13 : f32 to vector<384x128xf32>
    %20 = arith.maximumf %18, %19 : vector<384x128xf32>
    %21 = vector.shape_cast %20 : vector<384x128xf32> to vector<12x32x128xf32>
    %22 = vector.extract_strided_slice %21 {offsets = [0, 0, 0], sizes = [8, 32, 128], strides = [1, 1, 1]} : vector<12x32x128xf32> to vector<8x32x128xf32>
    %23 = vector.extract_strided_slice %21 {offsets = [1, 0, 0], sizes = [8, 32, 128], strides = [1, 1, 1]} : vector<12x32x128xf32> to vector<8x32x128xf32>
    %24 = vector.extract_strided_slice %21 {offsets = [2, 0, 0], sizes = [8, 32, 128], strides = [1, 1, 1]} : vector<12x32x128xf32> to vector<8x32x128xf32>
    %25 = vector.extract_strided_slice %21 {offsets = [3, 0, 0], sizes = [8, 32, 128], strides = [1, 1, 1]} : vector<12x32x128xf32> to vector<8x32x128xf32>
    %26 = vector.extract_strided_slice %21 {offsets = [4, 0, 0], sizes = [8, 32, 128], strides = [1, 1, 1]} : vector<12x32x128xf32> to vector<8x32x128xf32>
    %27 = tpu.concatenate %22, %23, %24, %25, %26 in 2 : vector<8x32x128xf32>, vector<8x32x128xf32>, vector<8x32x128xf32>, vector<8x32x128xf32>, vector<8x32x128xf32> -> vector<8x32x640xf32>
    %28 = vector.shape_cast %27 : vector<8x32x640xf32> to vector<256x640xf32>
    %c0_14 = arith.constant 0 : index
    %c0_15 = arith.constant 0 : index
    %29 = vector.load %arg5[%c0_14, %c0_15] : memref<640x160xf32, #tpu.memory_space<vmem>>, vector<640x160xf32>
    %cst_16 = arith.constant dense<0.000000e+00> : vector<256x160xf32>
    %30 = tpu.matmul %28, %29, %cst_16 {dimension_numbers = #tpu.dot_dimension_numbers<[1], [0], [0], [1], [0, 0, 1, 1], [], []>} : vector<256x640xf32>, vector<640x160xf32>, vector<256x160xf32> -> vector<256x160xf32>
    %c0_17 = arith.constant 0 : index
    %c0_18 = arith.constant 0 : index
    %31 = vector.load %arg6[%c0_17, %c0_18] : memref<1x160xf32, #tpu.memory_space<vmem>>, vector<1x160xf32>
    %32 = vector.broadcast %31 : vector<1x160xf32> to vector<256x160xf32>
    %33 = arith.addf %30, %32 : vector<256x160xf32>
    %34 = vector.shape_cast %33 : vector<256x160xf32> to vector<4x64x160xf32>
    %35 = vector.extract_strided_slice %34 {offsets = [0, 0, 0], sizes = [4, 32, 160], strides = [1, 1, 1]} : vector<4x64x160xf32> to vector<4x32x160xf32>
    %36 = vector.extract_strided_slice %34 {offsets = [0, 32, 0], sizes = [4, 32, 160], strides = [1, 1, 1]} : vector<4x64x160xf32> to vector<4x32x160xf32>
    %37 = arith.maximumf %35, %36 : vector<4x32x160xf32>
    %38 = vector.shape_cast %37 : vector<4x32x160xf32> to vector<128x160xf32>
    %c0_19 = arith.constant 0 : index
    %c0_20 = arith.constant 0 : index
    %c0_21 = arith.constant 0 : index
    %39 = vector.load %arg7[%c0_19, %c0_20, %c0_21] : memref<2x160x128xf32, #tpu.memory_space<vmem>>, vector<1x160x128xf32>
    %40 = vector.shape_cast %39 : vector<1x160x128xf32> to vector<160x128xf32>
    %cst_22 = arith.constant dense<0.000000e+00> : vector<128x128xf32>
    %41 = tpu.matmul %38, %40, %cst_22 {dimension_numbers = #tpu.dot_dimension_numbers<[1], [0], [0], [1], [0, 0, 1, 1], [], []>} : vector<128x160xf32>, vector<160x128xf32>, vector<128x128xf32> -> vector<128x128xf32>
    %c1_23 = arith.constant 1 : index
    %c0_24 = arith.constant 0 : index
    %c0_25 = arith.constant 0 : index
    %42 = vector.load %arg7[%c1_23, %c0_24, %c0_25] : memref<2x160x128xf32, #tpu.memory_space<vmem>>, vector<1x160x128xf32>
    %43 = vector.shape_cast %42 : vector<1x160x128xf32> to vector<160x128xf32>
    %cst_26 = arith.constant dense<0.000000e+00> : vector<128x128xf32>
    %44 = tpu.matmul %38, %43, %cst_26 {dimension_numbers = #tpu.dot_dimension_numbers<[1], [0], [0], [1], [0, 0, 1, 1], [], []>} : vector<128x160xf32>, vector<160x128xf32>, vector<128x128xf32> -> vector<128x128xf32>
    %45 = arith.maximumf %41, %44 : vector<128x128xf32>
    %cst_27 = arith.constant 0.000000e+00 : f32
    %46 = vector.broadcast %cst_27 : f32 to vector<128x128xf32>
    %47 = arith.maximumf %45, %46 : vector<128x128xf32>
    %48 = vector.shape_cast %47 : vector<128x128xf32> to vector<4x32x128xf32>
    %49 = vector.extract_strided_slice %48 {offsets = [0, 0, 0], sizes = [1, 32, 128], strides = [1, 1, 1]} : vector<4x32x128xf32> to vector<1x32x128xf32>
    %50 = vector.shape_cast %49 : vector<1x32x128xf32> to vector<32x128xf32>
    %51 = vector.extract_strided_slice %48 {offsets = [1, 0, 0], sizes = [1, 32, 128], strides = [1, 1, 1]} : vector<4x32x128xf32> to vector<1x32x128xf32>
    %52 = vector.shape_cast %51 : vector<1x32x128xf32> to vector<32x128xf32>
    %53 = vector.extract_strided_slice %48 {offsets = [2, 0, 0], sizes = [1, 32, 128], strides = [1, 1, 1]} : vector<4x32x128xf32> to vector<1x32x128xf32>
    %54 = vector.shape_cast %53 : vector<1x32x128xf32> to vector<32x128xf32>
    %55 = vector.extract_strided_slice %48 {offsets = [3, 0, 0], sizes = [1, 32, 128], strides = [1, 1, 1]} : vector<4x32x128xf32> to vector<1x32x128xf32>
    %56 = vector.shape_cast %55 : vector<1x32x128xf32> to vector<32x128xf32>
    %57 = tpu.concatenate %50, %52, %54, %56 in 1 : vector<32x128xf32>, vector<32x128xf32>, vector<32x128xf32>, vector<32x128xf32> -> vector<32x512xf32>
    %c0_28 = arith.constant 0 : index
    %c0_29 = arith.constant 0 : index
    %58 = vector.load %arg8[%c0_28, %c0_29] : memref<512x50xf32, #tpu.memory_space<vmem>>, vector<512x50xf32>
    %cst_30 = arith.constant dense<0.000000e+00> : vector<32x50xf32>
    %59 = tpu.matmul %57, %58, %cst_30 {dimension_numbers = #tpu.dot_dimension_numbers<[1], [0], [0], [1], [0, 0, 1, 1], [], []>} : vector<32x512xf32>, vector<512x50xf32>, vector<32x50xf32> -> vector<32x50xf32>
    %c0_31 = arith.constant 0 : index
    %c0_32 = arith.constant 0 : index
    %60 = vector.load %arg9[%c0_31, %c0_32] : memref<1x50xf32, #tpu.memory_space<vmem>>, vector<1x50xf32>
    %61 = vector.broadcast %60 : vector<1x50xf32> to vector<32x50xf32>
    %62 = arith.addf %59, %61 : vector<32x50xf32>
    %cst_33 = arith.constant 0.000000e+00 : f32
    %63 = vector.broadcast %cst_33 : f32 to vector<32x50xf32>
    %64 = arith.maximumf %62, %63 : vector<32x50xf32>
    %c0_34 = arith.constant 0 : index
    %c0_35 = arith.constant 0 : index
    %65 = vector.load %arg10[%c0_34, %c0_35] : memref<50x10xf32, #tpu.memory_space<vmem>>, vector<50x10xf32>
    %cst_36 = arith.constant dense<0.000000e+00> : vector<32x10xf32>
    %66 = tpu.matmul %64, %65, %cst_36 {dimension_numbers = #tpu.dot_dimension_numbers<[1], [0], [0], [1], [0, 0, 1, 1], [], []>} : vector<32x50xf32>, vector<50x10xf32>, vector<32x10xf32> -> vector<32x10xf32>
    %c0_37 = arith.constant 0 : index
    %c0_38 = arith.constant 0 : index
    %67 = vector.load %arg11[%c0_37, %c0_38] : memref<1x10xf32, #tpu.memory_space<vmem>>, vector<1x10xf32>
    %68 = vector.broadcast %67 : vector<1x10xf32> to vector<32x10xf32>
    %69 = arith.addf %66, %68 : vector<32x10xf32>
    %c0_39 = arith.constant 0 : index
    %c0_40 = arith.constant 0 : index
    %70 = vector.load %arg12[%c0_39, %c0_40] : memref<32x10xf32, #tpu.memory_space<vmem>>, vector<32x10xf32>
    tpu.vector_store %arg12[%c0_39, %c0_40], %69 {strides = array<i32>} : memref<32x10xf32, #tpu.memory_space<vmem>>, vector<32x10xf32>,
    return
  }
  func.func @transform_0(%arg0: i32) -> (i32, i32, i32) {
    %c0_i32 = arith.constant 0 : i32
    %c0_i32_0 = arith.constant 0 : i32
    %c0_i32_1 = arith.constant 0 : i32
    return %c0_i32, %arg0, %c0_i32_0 : i32, i32, i32
  }
  func.func @transform_1(%arg0: i32) -> (i32, i32) {
    %c0_i32 = arith.constant 0 : i32
    %c0_i32_0 = arith.constant 0 : i32
    %c0_i32_1 = arith.constant 0 : i32
    return %c0_i32, %c0_i32_0 : i32, i32
  }
  func.func @transform_2(%arg0: i32) -> (i32, i32) {
    %c0_i32 = arith.constant 0 : i32
    %c0_i32_0 = arith.constant 0 : i32
    %c0_i32_1 = arith.constant 0 : i32
    return %c0_i32, %c0_i32_0 : i32, i32
  }
  func.func @transform_3(%arg0: i32) -> (i32, i32, i32) {
    %c0_i32 = arith.constant 0 : i32
    %c0_i32_0 = arith.constant 0 : i32
    %c0_i32_1 = arith.constant 0 : i32
    %c0_i32_2 = arith.constant 0 : i32
    return %c0_i32, %c0_i32_0, %c0_i32_1 : i32, i32, i32
  }
  func.func @transform_4(%arg0: i32) -> (i32, i32) {
    %c0_i32 = arith.constant 0 : i32
    %c0_i32_0 = arith.constant 0 : i32
    %c0_i32_1 = arith.constant 0 : i32
    return %c0_i32, %c0_i32_0 : i32, i32
  }
  func.func @transform_5(%arg0: i32) -> (i32, i32) {
    %c0_i32 = arith.constant 0 : i32
    %c0_i32_0 = arith.constant 0 : i32
    %c0_i32_1 = arith.constant 0 : i32
    return %c0_i32, %c0_i32_0 : i32, i32
  }
  func.func @transform_6(%arg0: i32) -> (i32, i32, i32) {
    %c0_i32 = arith.constant 0 : i32
    %c0_i32_0 = arith.constant 0 : i32
    %c0_i32_1 = arith.constant 0 : i32
    %c0_i32_2 = arith.constant 0 : i32
    return %c0_i32, %c0_i32_0, %c0_i32_1 : i32, i32, i32
  }
  func.func @transform_7(%arg0: i32) -> (i32, i32) {
    %c0_i32 = arith.constant 0 : i32
    %c0_i32_0 = arith.constant 0 : i32
    %c0_i32_1 = arith.constant 0 : i32
    return %c0_i32, %c0_i32_0 : i32, i32
  }
  func.func @transform_8(%arg0: i32) -> (i32, i32) {
    %c0_i32 = arith.constant 0 : i32
    %c0_i32_0 = arith.constant 0 : i32
    %c0_i32_1 = arith.constant 0 : i32
    return %c0_i32, %c0_i32_0 : i32, i32
  }
  func.func @transform_9(%arg0: i32) -> (i32, i32) {
    %c0_i32 = arith.constant 0 : i32
    %c0_i32_0 = arith.constant 0 : i32
    %c0_i32_1 = arith.constant 0 : i32
    return %c0_i32, %c0_i32_0 : i32, i32
  }
  func.func @transform_10(%arg0: i32) -> (i32, i32) {
    %c0_i32 = arith.constant 0 : i32
    %c0_i32_0 = arith.constant 0 : i32
    %c0_i32_1 = arith.constant 0 : i32
    return %c0_i32, %c0_i32_0 : i32, i32
  }
  func.func @transform_11(%arg0: i32) -> (i32, i32) {
    %c0_i32 = arith.constant 0 : i32
    %c0_i32_0 = arith.constant 0 : i32
    return %arg0, %c0_i32 : i32, i32
  }
}

</mosaic_0001>

<llo_original>
// kernel: lenet_forward.1
$region0: #{lenet_forward.1}
  #allocation0 [shape = 'u32[]', space=smem, size = 0x4, offset = 0x4, fixed_abs, tag = 'smem constant byte address 0x4 - core index']
  #allocation1 [shape = 'u32[144,128]{1,0:T(1,128)}', space=vmem, size = 0x12000, scoped, tag = 'internal scratch']
  %s0 = inlined_call_operand.vmem [shape: f32[24,64,140], index: 0, kind: input, shape index: {}]
  %s1 = inlined_call_operand.vmem [shape: f32[140,240], index: 1, kind: input, shape index: {}]
  %s2 = inlined_call_operand.vmem [shape: f32[1,240], index: 2, kind: input, shape index: {}]
  %s3 = inlined_call_operand.vmem [shape: f32[2,240,128], index: 3, kind: input, shape index: {}]
  %s4 = inlined_call_operand.vmem [shape: f32[640,160], index: 4, kind: input, shape index: {}]
  %s5 = inlined_call_operand.vmem [shape: f32[1,160], index: 5, kind: input, shape index: {}]
  %s6 = inlined_call_operand.vmem [shape: f32[2,160,128], index: 6, kind: input, shape index: {}]
  %s7 = inlined_call_operand.vmem [shape: f32[512,50], index: 7, kind: input, shape index: {}]
  %s8 = inlined_call_operand.vmem [shape: f32[1,50], index: 8, kind: input, shape index: {}]
  %s9 = inlined_call_operand.vmem [shape: f32[50,10], index: 9, kind: input, shape index: {}]
  %s10 = inlined_call_operand.vmem [shape: f32[1,10], index: 10, kind: input, shape index: {}]
  %s11 = inlined_call_operand.vmem [shape: f32[64,10], index: 11, kind: output, shape index: {}]
  %s12 = sld [smem:[#allocation0]]
  $region100: #{lenet_forward.1} parent=0
    _
  %s14 = ssub.s32 1, %s12
  %s15 = scalar_select 0, %s14, %s12
  $region1: #{lenet_forward.1} parent=0
    #allocation2 [shape = 'u8[1572864]{0}', space=vmem, size = 0x180000, scoped, tag = 'input window, operand 0']
    loop: start=0, step=1, limit=4
    $region2: #{lenet_forward.1} parent=1 // loop_pre_header
      _
    $region3: #{lenet_forward.1} parent=1 // loop_header
      %s17 = sphi 0, %s21
      %p18 = scmp.ge.s32.totalorder %s17, 4
      %s27 = sphi 0, %s29
      %s30 = sphi 0, %s27
      %s31 = sphi 0, %s30
      %s47 = sphi 0, %s31
      %s51 = sphi 0, %s51
      %s53 = sphi 0, %s51
      %s54 = sphi 0, %s53
      %s68 = sphi 0, %s54
      %s72 = sphi 0, %s72
      %s74 = sphi 0, %s72
      %s75 = sphi 0, %s74
      %s89 = sphi 0, %s75
      %s93 = sphi 0, %s93
      %s95 = sphi 0, %s93
      %s96 = sphi 0, %s95
      %s110 = sphi 0, %s96
      %s114 = sphi 0, %s114
      %s116 = sphi 0, %s114
      %s117 = sphi 0, %s116
      %s131 = sphi 0, %s117
      %s135 = sphi 0, %s135
      %s137 = sphi 0, %s135
      %s138 = sphi 0, %s137
      %s152 = sphi 0, %s138
      %s156 = sphi 0, %s156
      %s158 = sphi 0, %s156
      %s159 = sphi 0, %s158
      %s173 = sphi 0, %s159
      %s177 = sphi 0, %s177
      %s179 = sphi 0, %s177
      %s180 = sphi 0, %s179
      %s194 = sphi 0, %s180
      %s198 = sphi 0, %s198
      %s200 = sphi 0, %s198
      %s201 = sphi 0, %s200
      %s215 = sphi 0, %s201
      %s219 = sphi 0, %s219
      %s221 = sphi 0, %s219
      %s222 = sphi 0, %s221
      %s236 = sphi 0, %s222
      %s240 = sphi 0, %s240
      %s242 = sphi 0, %s240
      %s243 = sphi 0, %s242
      %s257 = sphi 0, %s243
      %s263 = sphi 0, %s265
      %s266 = sphi 0, %s263
      %s267 = sphi 0, %s266
      %s283 = sphi 0, %s267
    $region4: #{lenet_forward.1} parent=1 // loop_header_branch
      %20 = sbr.rel (%p18) target = $region8
    $region5: #{lenet_forward.1} parent=1 // loop_body
      %s22 = ssub.s32 %s17, 1
      %s23 = ssub.s32 %s17, 2
      %s24 = sadd.s32 %s17, 1
      %s25 = ssub.s32 %s17, %s24
      %p26 = scmp.eq.s32.totalorder %s25, 0
      %s28 = sadd.s32 %s27, 1
      %s29 = scalar_select %p26, %s27, %s28
      %p32 = pneg %p26
      %p33 = scmp.eq.s32.totalorder %s17, 1
      %p34 = por %p32, %p33
      %p35 = scmp.ne.s32.totalorder %s27, %s30
      %p36 = scmp.eq.s32.totalorder %s17, 0
      %p37 = por %p35, %p36
      %p38 = scmp.ne.s32.totalorder %s27, %s30
      %p39 = scmp.eq.s32.totalorder %s22, 1
      %p40 = por %p38, %p39
      %p41 = scmp.ne.s32.totalorder %s30, %s31
      %p42 = scmp.eq.s32.totalorder %s22, 0
      %p43 = por %p41, %p42
      %p44 = scmp.ne.s32.totalorder %s30, %s31
      %p45 = scmp.eq.s32.totalorder %s23, 1
      %p46 = por %p44, %p45
      %p48 = scmp.ne.s32.totalorder %s31, %s47
      %p49 = scmp.eq.s32.totalorder %s23, 0
      %p50 = por %p48, %p49
      %s52 = sadd.s32 %s51, 1
      %p55 = scmp.eq.s32.totalorder %s17, 1
      %p56 = scmp.ne.s32.totalorder %s51, %s53
      %p57 = scmp.eq.s32.totalorder %s17, 0
      %p58 = por %p56, %p57
      %p59 = scmp.ne.s32.totalorder %s51, %s53
      %p60 = scmp.eq.s32.totalorder %s22, 1
      %p61 = por %p59, %p60
      %p62 = scmp.ne.s32.totalorder %s53, %s54
      %p63 = scmp.eq.s32.totalorder %s22, 0
      %p64 = por %p62, %p63
      %p65 = scmp.ne.s32.totalorder %s53, %s54
      %p66 = scmp.eq.s32.totalorder %s23, 1
      %p67 = por %p65, %p66
      %p69 = scmp.ne.s32.totalorder %s54, %s68
      %p70 = scmp.eq.s32.totalorder %s23, 0
      %p71 = por %p69, %p70
      %s73 = sadd.s32 %s72, 1
      %p76 = scmp.eq.s32.totalorder %s17, 1
      %p77 = scmp.ne.s32.totalorder %s72, %s74
      %p78 = scmp.eq.s32.totalorder %s17, 0
      %p79 = por %p77, %p78
      %p80 = scmp.ne.s32.totalorder %s72, %s74
      %p81 = scmp.eq.s32.totalorder %s22, 1
      %p82 = por %p80, %p81
      %p83 = scmp.ne.s32.totalorder %s74, %s75
      %p84 = scmp.eq.s32.totalorder %s22, 0
      %p85 = por %p83, %p84
      %p86 = scmp.ne.s32.totalorder %s74, %s75
      %p87 = scmp.eq.s32.totalorder %s23, 1
      %p88 = por %p86, %p87
      %p90 = scmp.ne.s32.totalorder %s75, %s89
      %p91 = scmp.eq.s32.totalorder %s23, 0
      %p92 = por %p90, %p91
      %s94 = sadd.s32 %s93, 1
      %p97 = scmp.eq.s32.totalorder %s17, 1
      %p98 = scmp.ne.s32.totalorder %s93, %s95
      %p99 = scmp.eq.s32.totalorder %s17, 0
      %p100 = por %p98, %p99
      %p101 = scmp.ne.s32.totalorder %s93, %s95
      %p102 = scmp.eq.s32.totalorder %s22, 1
      %p103 = por %p101, %p102
      %p104 = scmp.ne.s32.totalorder %s95, %s96
      %p105 = scmp.eq.s32.totalorder %s22, 0
      %p106 = por %p104, %p105
      %p107 = scmp.ne.s32.totalorder %s95, %s96
      %p108 = scmp.eq.s32.totalorder %s23, 1
      %p109 = por %p107, %p108
      %p111 = scmp.ne.s32.totalorder %s96, %s110
      %p112 = scmp.eq.s32.totalorder %s23, 0
      %p113 = por %p111, %p112
      %s115 = sadd.s32 %s114, 1
      %p118 = scmp.eq.s32.totalorder %s17, 1
      %p119 = scmp.ne.s32.totalorder %s114, %s116
      %p120 = scmp.eq.s32.totalorder %s17, 0
      %p121 = por %p119, %p120
      %p122 = scmp.ne.s32.totalorder %s114, %s116
      %p123 = scmp.eq.s32.totalorder %s22, 1
      %p124 = por %p122, %p123
      %p125 = scmp.ne.s32.totalorder %s116, %s117
      %p126 = scmp.eq.s32.totalorder %s22, 0
      %p127 = por %p125, %p126
      %p128 = scmp.ne.s32.totalorder %s116, %s117
      %p129 = scmp.eq.s32.totalorder %s23, 1
      %p130 = por %p128, %p129
      %p132 = scmp.ne.s32.totalorder %s117, %s131
      %p133 = scmp.eq.s32.totalorder %s23, 0
      %p134 = por %p132, %p133
      %s136 = sadd.s32 %s135, 1
      %p139 = scmp.eq.s32.totalorder %s17, 1
      %p140 = scmp.ne.s32.totalorder %s135, %s137
      %p141 = scmp.eq.s32.totalorder %s17, 0
      %p142 = por %p140, %p141
      %p143 = scmp.ne.s32.totalorder %s135, %s137
      %p144 = scmp.eq.s32.totalorder %s22, 1
      %p145 = por %p143, %p144
      %p146 = scmp.ne.s32.totalorder %s137, %s138
      %p147 = scmp.eq.s32.totalorder %s22, 0
      %p148 = por %p146, %p147
      %p149 = scmp.ne.s32.totalorder %s137, %s138
      %p150 = scmp.eq.s32.totalorder %s23, 1
      %p151 = por %p149, %p150
      %p153 = scmp.ne.s32.totalorder %s138, %s152
      %p154 = scmp.eq.s32.totalorder %s23, 0
      %p155 = por %p153, %p154
      %s157 = sadd.s32 %s156, 1
      %p160 = scmp.eq.s32.totalorder %s17, 1
      %p161 = scmp.ne.s32.totalorder %s156, %s158
      %p162 = scmp.eq.s32.totalorder %s17, 0
      %p163 = por %p161, %p162
      %p164 = scmp.ne.s32.totalorder %s156, %s158
      %p165 = scmp.eq.s32.totalorder %s22, 1
      %p166 = por %p164, %p165
      %p167 = scmp.ne.s32.totalorder %s158, %s159
      %p168 = scmp.eq.s32.totalorder %s22, 0
      %p169 = por %p167, %p168
      %p170 = scmp.ne.s32.totalorder %s158, %s159
      %p171 = scmp.eq.s32.totalorder %s23, 1
      %p172 = por %p170, %p171
      %p174 = scmp.ne.s32.totalorder %s159, %s173
      %p175 = scmp.eq.s32.totalorder %s23, 0
      %p176 = por %p174, %p175
      %s178 = sadd.s32 %s177, 1
      %p181 = scmp.eq.s32.totalorder %s17, 1
      %p182 = scmp.ne.s32.totalorder %s177, %s179
      %p183 = scmp.eq.s32.totalorder %s17, 0
      %p184 = por %p182, %p183
      %p185 = scmp.ne.s32.totalorder %s177, %s179
      %p186 = scmp.eq.s32.totalorder %s22, 1
      %p187 = por %p185, %p186
      %p188 = scmp.ne.s32.totalorder %s179, %s180
      %p189 = scmp.eq.s32.totalorder %s22, 0
      %p190 = por %p188, %p189
      %p191 = scmp.ne.s32.totalorder %s179, %s180
      %p192 = scmp.eq.s32.totalorder %s23, 1
      %p193 = por %p191, %p192
      %p195 = scmp.ne.s32.totalorder %s180, %s194
      %p196 = scmp.eq.s32.totalorder %s23, 0
      %p197 = por %p195, %p196
      %s199 = sadd.s32 %s198, 1
      %p202 = scmp.eq.s32.totalorder %s17, 1
      %p203 = scmp.ne.s32.totalorder %s198, %s200
      %p204 = scmp.eq.s32.totalorder %s17, 0
      %p205 = por %p203, %p204
      %p206 = scmp.ne.s32.totalorder %s198, %s200
      %p207 = scmp.eq.s32.totalorder %s22, 1
      %p208 = por %p206, %p207
      %p209 = scmp.ne.s32.totalorder %s200, %s201
      %p210 = scmp.eq.s32.totalorder %s22, 0
      %p211 = por %p209, %p210
      %p212 = scmp.ne.s32.totalorder %s200, %s201
      %p213 = scmp.eq.s32.totalorder %s23, 1
      %p214 = por %p212, %p213
      %p216 = scmp.ne.s32.totalorder %s201, %s215
      %p217 = scmp.eq.s32.totalorder %s23, 0
      %p218 = por %p216, %p217
      %s220 = sadd.s32 %s219, 1
      %p223 = scmp.eq.s32.totalorder %s17, 1
      %p224 = scmp.ne.s32.totalorder %s219, %s221
      %p225 = scmp.eq.s32.totalorder %s17, 0
      %p226 = por %p224, %p225
      %p227 = scmp.ne.s32.totalorder %s219, %s221
      %p228 = scmp.eq.s32.totalorder %s22, 1
      %p229 = por %p227, %p228
      %p230 = scmp.ne.s32.totalorder %s221, %s222
      %p231 = scmp.eq.s32.totalorder %s22, 0
      %p232 = por %p230, %p231
      %p233 = scmp.ne.s32.totalorder %s221, %s222
      %p234 = scmp.eq.s32.totalorder %s23, 1
      %p235 = por %p233, %p234
      %p237 = scmp.ne.s32.totalorder %s222, %s236
      %p238 = scmp.eq.s32.totalorder %s23, 0
      %p239 = por %p237, %p238
      %s241 = sadd.s32 %s240, 1
      %p244 = scmp.eq.s32.totalorder %s17, 1
      %p245 = scmp.ne.s32.totalorder %s240, %s242
      %p246 = scmp.eq.s32.totalorder %s17, 0
      %p247 = por %p245, %p246
      %p248 = scmp.ne.s32.totalorder %s240, %s242
      %p249 = scmp.eq.s32.totalorder %s22, 1
      %p250 = por %p248, %p249
      %p251 = scmp.ne.s32.totalorder %s242, %s243
      %p252 = scmp.eq.s32.totalorder %s22, 0
      %p253 = por %p251, %p252
      %p254 = scmp.ne.s32.totalorder %s242, %s243
      %p255 = scmp.eq.s32.totalorder %s23, 1
      %p256 = por %p254, %p255
      %p258 = scmp.ne.s32.totalorder %s243, %s257
      %p259 = scmp.eq.s32.totalorder %s23, 0
      %p260 = por %p258, %p259
      %s261 = ssub.s32 %s17, %s24
      %p262 = scmp.eq.s32.totalorder %s261, 0
      %s264 = sadd.s32 %s263, 1
      %s265 = scalar_select %p262, %s263, %s264
      %p268 = pneg %p262
      %p269 = scmp.eq.s32.totalorder %s17, 1
      %p270 = por %p268, %p269
      %p271 = scmp.ne.s32.totalorder %s263, %s266
      %p272 = scmp.eq.s32.totalorder %s17, 0
      %p273 = por %p271, %p272
      %p274 = scmp.ne.s32.totalorder %s263, %s266
      %p275 = scmp.eq.s32.totalorder %s22, 1
      %p276 = por %p274, %p275
      %p277 = scmp.ne.s32.totalorder %s266, %s267
      %p278 = scmp.eq.s32.totalorder %s22, 0
      %p279 = por %p277, %p278
      %p280 = scmp.ne.s32.totalorder %s266, %s267
      %p281 = scmp.eq.s32.totalorder %s23, 1
      %p282 = por %p280, %p281
      %p284 = scmp.ne.s32.totalorder %s267, %s283
      %p285 = scmp.eq.s32.totalorder %s23, 0
      %p286 = por %p284, %p285
      %p287 = scmp.le.s32.totalorder 1, %s17
      %p288 = scmp.lt.s32.totalorder %s17, 3
      %p289 = pnand %p287, %p288
      %p290 = pneg %p289
      // Predicated region
      $region9: #{lenet_forward.1} parent=5 // pred_check
        _
      $region10: #{lenet_forward.1} parent=5 // pred_check_branch
        %292 = sbr.rel (%p289) target = $region12
      $region11: #{lenet_forward.1} parent=5 // pred_region
        %s293 = ssub.s32 %s17, 1
        // Predicated region
        $region13: #{lenet_forward.1} parent=11 // pred_check
          %p294 = pneg %p64
        $region14: #{lenet_forward.1} parent=11 // pred_check_branch
          %296 = sbr.rel (%p294) target = $region16
        $region15: #{lenet_forward.1} parent=11 // pred_region
          _
        $region16: #{lenet_forward.1} parent=11 // pred_fallthru
          _
        // Predicated region
        $region17: #{lenet_forward.1} parent=11 // pred_check
          %p297 = pneg %p85
        $region18: #{lenet_forward.1} parent=11 // pred_check_branch
          %299 = sbr.rel (%p297) target = $region20
        $region19: #{lenet_forward.1} parent=11 // pred_region
          _
        $region20: #{lenet_forward.1} parent=11 // pred_fallthru
          _
        // Predicated region
        $region21: #{lenet_forward.1} parent=11 // pred_check
          %p300 = pneg %p106
        $region22: #{lenet_forward.1} parent=11 // pred_check_branch
          %302 = sbr.rel (%p300) target = $region24
        $region23: #{lenet_forward.1} parent=11 // pred_region
          _
        $region24: #{lenet_forward.1} parent=11 // pred_fallthru
          _
        // Predicated region
        $region25: #{lenet_forward.1} parent=11 // pred_check
          %p303 = pneg %p127
        $region26: #{lenet_forward.1} parent=11 // pred_check_branch
          %305 = sbr.rel (%p303) target = $region28
        $region27: #{lenet_forward.1} parent=11 // pred_region
          _
        $region28: #{lenet_forward.1} parent=11 // pred_fallthru
          _
        // Predicated region
        $region29: #{lenet_forward.1} parent=11 // pred_check
          %p306 = pneg %p148
        $region30: #{lenet_forward.1} parent=11 // pred_check_branch
          %308 = sbr.rel (%p306) target = $region32
        $region31: #{lenet_forward.1} parent=11 // pred_region
          _
        $region32: #{lenet_forward.1} parent=11 // pred_fallthru
          _
        // Predicated region
        $region33: #{lenet_forward.1} parent=11 // pred_check
          %p309 = pneg %p169
        $region34: #{lenet_forward.1} parent=11 // pred_check_branch
          %311 = sbr.rel (%p309) target = $region36
        $region35: #{lenet_forward.1} parent=11 // pred_region
          _
        $region36: #{lenet_forward.1} parent=11 // pred_fallthru
          _
        // Predicated region
        $region37: #{lenet_forward.1} parent=11 // pred_check
          %p312 = pneg %p190
        $region38: #{lenet_forward.1} parent=11 // pred_check_branch
          %314 = sbr.rel (%p312) target = $region40
        $region39: #{lenet_forward.1} parent=11 // pred_region
          _
        $region40: #{lenet_forward.1} parent=11 // pred_fallthru
          _
        // Predicated region
        $region41: #{lenet_forward.1} parent=11 // pred_check
          %p315 = pneg %p211
        $region42: #{lenet_forward.1} parent=11 // pred_check_branch
          %317 = sbr.rel (%p315) target = $region44
        $region43: #{lenet_forward.1} parent=11 // pred_region
          _
        $region44: #{lenet_forward.1} parent=11 // pred_fallthru
          _
        // Predicated region
        $region45: #{lenet_forward.1} parent=11 // pred_check
          %p318 = pneg %p232
        $region46: #{lenet_forward.1} parent=11 // pred_check_branch
          %320 = sbr.rel (%p318) target = $region48
        $region47: #{lenet_forward.1} parent=11 // pred_region
          _
        $region48: #{lenet_forward.1} parent=11 // pred_fallthru
          _
        // Predicated region
        $region49: #{lenet_forward.1} parent=11 // pred_check
          %p321 = pneg %p253
        $region50: #{lenet_forward.1} parent=11 // pred_check_branch
          %323 = sbr.rel (%p321) target = $region52
        $region51: #{lenet_forward.1} parent=11 // pred_region
          _
        $region52: #{lenet_forward.1} parent=11 // pred_fallthru
          _
      $region12: #{lenet_forward.1} parent=5 // pred_fallthru
        _
      %p324 = scmp.lt.s32.totalorder %s17, 2
      // Predicated region
      $region53: #{lenet_forward.1} parent=5 // pred_check
        %p325 = pneg %p324
      $region54: #{lenet_forward.1} parent=5 // pred_check_branch
        %327 = sbr.rel (%p325) target = $region56
      $region55: #{lenet_forward.1} parent=5 // pred_region
        // Predicated region
        $region57: #{lenet_forward.1} parent=55 // pred_check
          %p328 = pneg %p37
        $region58: #{lenet_forward.1} parent=55 // pred_check_branch
          %330 = sbr.rel (%p328) target = $region60
        $region59: #{lenet_forward.1} parent=55 // pred_region
          %s331 = sand.u32 %s27, 1
          %s332 = sand.u32 %s27, 1
          %s333 = smul.addr %s332, 1536
          %s334 = scalar_lea.vmem [#allocation2], %s333
          %s335 = smul.u32 4, %s17
          %s336 = smul.addr %s335, 2
          %s337 = smul.addr %s336, 8
          %s338 = scalar_lea.vmem %s0, %s337
          // Predicated region
          $region61: #{lenet_forward.1} parent=59 // pred_check
            _
          $region62: #{lenet_forward.1} parent=59 // pred_check_branch
            %340 = sbr.rel (0) target = $region64
          $region63: #{lenet_forward.1} parent=59 // pred_region
            // Predicated region
            $region65: #{lenet_forward.1} parent=63 // pred_check
              _
            $region66: #{lenet_forward.1} parent=63 // pred_check_branch
              %342 = sbr.rel (0) target = $region68
            $region67: #{lenet_forward.1} parent=63 // pred_region
              loop: start=0, step=1, limit=1
              $region69: #{lenet_forward.1} parent=67 // loop_pre_header
                _
              $region70: #{lenet_forward.1} parent=67 // loop_header
                %s344 = sphi 0, %s348
                %p345 = scmp.ge.s32.totalorder %s344, 1
                %s349 = sphi %s338, %s338
                %s350 = sphi %s334, %s334
              $region71: #{lenet_forward.1} parent=67 // loop_header_branch
                %347 = sbr.rel (%p345) target = $region75
              $region72: #{lenet_forward.1} parent=67 // loop_body
                %v351 = vld [vmem:[%s349] sm:$0xff]
                %352 = vst [vmem:[%s350] sm:$0xff] %v351
                %v353 = vld [vmem:[%s349 + $0x8] sm:$0xff]
                %354 = vst [vmem:[%s350 + $0x8] sm:$0xff] %v353
                %v355 = vld [vmem:[%s349 + $0x10] sm:$0xff]
                %356 = vst [vmem:[%s350 + $0x10] sm:$0xff] %v355
                %v357 = vld [vmem:[%s349 + $0x18] sm:$0xff]
                %358 = vst [vmem:[%s350 + $0x18] sm:$0xff] %v357
                %v359 = vld [vmem:[%s349 + $0x20] sm:$0xff]
                %360 = vst [vmem:[%s350 + $0x20] sm:$0xff] %v359
                %v361 = vld [vmem:[%s349 + $0x28] sm:$0xff]
                %362 = vst [vmem:[%s350 + $0x28] sm:$0xff] %v361
                %v363 = vld [vmem:[%s349 + $0x30] sm:$0xff]
                %364 = vst [vmem:[%s350 + $0x30] sm:$0xff] %v363
                %v365 = vld [vmem:[%s349 + $0x38] sm:$0xff]
                %366 = vst [vmem:[%s350 + $0x38] sm:$0xff] %v365
                %v367 = vld [vmem:[%s349 + $0x80] sm:$0xff]
                %368 = vst [vmem:[%s350 + $0x40] sm:$0xff] %v367
                %v369 = vld [vmem:[%s349 + $0x88] sm:$0xff]
                %370 = vst [vmem:[%s350 + $0x48] sm:$0xff] %v369
                %v371 = vld [vmem:[%s349 + $0x90] sm:$0xff]
                %372 = vst [vmem:[%s350 + $0x50] sm:$0xff] %v371
                %v373 = vld [vmem:[%s349 + $0x98] sm:$0xff]
                %374 = vst [vmem:[%s350 + $0x58] sm:$0xff] %v373
                %v375 = vld [vmem:[%s349 + $0xa0] sm:$0xff]
                %376 = vst [vmem:[%s350 + $0x60] sm:$0xff] %v375
                %v377 = vld [vmem:[%s349 + $0xa8] sm:$0xff]
                %378 = vst [vmem:[%s350 + $0x68] sm:$0xff] %v377
                %v379 = vld [vmem:[%s349 + $0xb0] sm:$0xff]
                %380 = vst [vmem:[%s350 + $0x70] sm:$0xff] %v379
                %v381 = vld [vmem:[%s349 + $0xb8] sm:$0xff]
                %382 = vst [vmem:[%s350 + $0x78] sm:$0xff] %v381
                %v383 = vld [vmem:[%s349 + $0x100] sm:$0xff]
                %384 = vst [vmem:[%s350 + $0x80] sm:$0xff] %v383
                %v385 = vld [vmem:[%s349 + $0x108] sm:$0xff]
                %386 = vst [vmem:[%s350 + $0x88] sm:$0xff] %v385
                %v387 = vld [vmem:[%s349 + $0x110] sm:$0xff]
                %388 = vst [vmem:[%s350 + $0x90] sm:$0xff] %v387
                %v389 = vld [vmem:[%s349 + $0x118] sm:$0xff]
                %390 = vst [vmem:[%s350 + $0x98] sm:$0xff] %v389
                %v391 = vld [vmem:[%s349 + $0x120] sm:$0xff]
                %392 = vst [vmem:[%s350 + $0xa0] sm:$0xff] %v391
                %v393 = vld [vmem:[%s349 + $0x128] sm:$0xff]
                %394 = vst [vmem:[%s350 + $0xa8] sm:$0xff] %v393
                %v395 = vld [vmem:[%s349 + $0x130] sm:$0xff]
                %396 = vst [vmem:[%s350 + $0xb0] sm:$0xff] %v395
                %v397 = vld [vmem:[%s349 + $0x138] sm:$0xff]
                %398 = vst [vmem:[%s350 + $0xb8] sm:$0xff] %v397
                %v399 = vld [vmem:[%s349 + $0x180] sm:$0xff]
                %400 = vst [vmem:[%s350 + $0xc0] sm:$0xff] %v399
                %v401 = vld [vmem:[%s349 + $0x188] sm:$0xff]
                %402 = vst [vmem:[%s350 + $0xc8] sm:$0xff] %v401
                %v403 = vld [vmem:[%s349 + $0x190] sm:$0xff]
                %404 = vst [vmem:[%s350 + $0xd0] sm:$0xff] %v403
                %v405 = vld [vmem:[%s349 + $0x198] sm:$0xff]
                %406 = vst [vmem:[%s350 + $0xd8] sm:$0xff] %v405
                %v407 = vld [vmem:[%s349 + $0x1a0] sm:$0xff]
                %408 = vst [vmem:[%s350 + $0xe0] sm:$0xff] %v407
                %v409 = vld [vmem:[%s349 + $0x1a8] sm:$0xff]
                %410 = vst [vmem:[%s350 + $0xe8] sm:$0xff] %v409
                %v411 = vld [vmem:[%s349 + $0x1b0] sm:$0xff]
                %412 = vst [vmem:[%s350 + $0xf0] sm:$0xff] %v411
                %v413 = vld [vmem:[%s349 + $0x1b8] sm:$0xff]
                %414 = vst [vmem:[%s350 + $0xf8] sm:$0xff] %v413
                %v415 = vld [vmem:[%s349 + $0x200] sm:$0xff]
                %416 = vst [vmem:[%s350 + $0x100] sm:$0xff] %v415
                %v417 = vld [vmem:[%s349 + $0x208] sm:$0xff]
                %418 = vst [vmem:[%s350 + $0x108] sm:$0xff] %v417
                %v419 = vld [vmem:[%s349 + $0x210] sm:$0xff]
                %420 = vst [vmem:[%s350 + $0x110] sm:$0xff] %v419
                %v421 = vld [vmem:[%s349 + $0x218] sm:$0xff]
                %422 = vst [vmem:[%s350 + $0x118] sm:$0xff] %v421
                %v423 = vld [vmem:[%s349 + $0x220] sm:$0xff]
                %424 = vst [vmem:[%s350 + $0x120] sm:$0xff] %v423
                %v425 = vld [vmem:[%s349 + $0x228] sm:$0xff]
                %426 = vst [vmem:[%s350 + $0x128] sm:$0xff] %v425
                %v427 = vld [vmem:[%s349 + $0x230] sm:$0xff]
                %428 = vst [vmem:[%s350 + $0x130] sm:$0xff] %v427
                %v429 = vld [vmem:[%s349 + $0x238] sm:$0xff]
                %430 = vst [vmem:[%s350 + $0x138] sm:$0xff] %v429
                %v431 = vld [vmem:[%s349 + $0x280] sm:$0xff]
                %432 = vst [vmem:[%s350 + $0x140] sm:$0xff] %v431
                %v433 = vld [vmem:[%s349 + $0x288] sm:$0xff]
                %434 = vst [vmem:[%s350 + $0x148] sm:$0xff] %v433
                %v435 = vld [vmem:[%s349 + $0x290] sm:$0xff]
                %436 = vst [vmem:[%s350 + $0x150] sm:$0xff] %v435
                %v437 = vld [vmem:[%s349 + $0x298] sm:$0xff]
                %438 = vst [vmem:[%s350 + $0x158] sm:$0xff] %v437
                %v439 = vld [vmem:[%s349 + $0x2a0] sm:$0xff]
                %440 = vst [vmem:[%s350 + $0x160] sm:$0xff] %v439
                %v441 = vld [vmem:[%s349 + $0x2a8] sm:$0xff]
                %442 = vst [vmem:[%s350 + $0x168] sm:$0xff] %v441
                %v443 = vld [vmem:[%s349 + $0x2b0] sm:$0xff]
                %444 = vst [vmem:[%s350 + $0x170] sm:$0xff] %v443
                %v445 = vld [vmem:[%s349 + $0x2b8] sm:$0xff]
                %446 = vst [vmem:[%s350 + $0x178] sm:$0xff] %v445
                %v447 = vld [vmem:[%s349 + $0x300] sm:$0xff]
                %448 = vst [vmem:[%s350 + $0x180] sm:$0xff] %v447
                %v449 = vld [vmem:[%s349 + $0x308] sm:$0xff]
                %450 = vst [vmem:[%s350 + $0x188] sm:$0xff] %v449
                %v451 = vld [vmem:[%s349 + $0x310] sm:$0xff]
                %452 = vst [vmem:[%s350 + $0x190] sm:$0xff] %v451
                %v453 = vld [vmem:[%s349 + $0x318] sm:$0xff]
                %454 = vst [vmem:[%s350 + $0x198] sm:$0xff] %v453
                %v455 = vld [vmem:[%s349 + $0x320] sm:$0xff]
                %456 = vst [vmem:[%s350 + $0x1a0] sm:$0xff] %v455
                %v457 = vld [vmem:[%s349 + $0x328] sm:$0xff]
                %458 = vst [vmem:[%s350 + $0x1a8] sm:$0xff] %v457
                %v459 = vld [vmem:[%s349 + $0x330] sm:$0xff]
                %460 = vst [vmem:[%s350 + $0x1b0] sm:$0xff] %v459
                %v461 = vld [vmem:[%s349 + $0x338] sm:$0xff]
                %462 = vst [vmem:[%s350 + $0x1b8] sm:$0xff] %v461
                %v463 = vld [vmem:[%s349 + $0x380] sm:$0xff]
                %464 = vst [vmem:[%s350 + $0x1c0] sm:$0xff] %v463
                %v465 = vld [vmem:[%s349 + $0x388] sm:$0xff]
                %466 = vst [vmem:[%s350 + $0x1c8] sm:$0xff] %v465
                %v467 = vld [vmem:[%s349 + $0x390] sm:$0xff]
                %468 = vst [vmem:[%s350 + $0x1d0] sm:$0xff] %v467
                %v469 = vld [vmem:[%s349 + $0x398] sm:$0xff]
                %470 = vst [vmem:[%s350 + $0x1d8] sm:$0xff] %v469
                %v471 = vld [vmem:[%s349 + $0x3a0] sm:$0xff]
                %472 = vst [vmem:[%s350 + $0x1e0] sm:$0xff] %v471
                %v473 = vld [vmem:[%s349 + $0x3a8] sm:$0xff]
                %474 = vst [vmem:[%s350 + $0x1e8] sm:$0xff] %v473
                %v475 = vld [vmem:[%s349 + $0x3b0] sm:$0xff]
                %476 = vst [vmem:[%s350 + $0x1f0] sm:$0xff] %v475
                %v477 = vld [vmem:[%s349 + $0x3b8] sm:$0xff]
                %478 = vst [vmem:[%s350 + $0x1f8] sm:$0xff] %v477
                %v479 = vld [vmem:[%s349 + $0x400] sm:$0xff]
                %480 = vst [vmem:[%s350 + $0x200] sm:$0xff] %v479
                %v481 = vld [vmem:[%s349 + $0x408] sm:$0xff]
                %482 = vst [vmem:[%s350 + $0x208] sm:$0xff] %v481
                %v483 = vld [vmem:[%s349 + $0x410] sm:$0xff]
                %484 = vst [vmem:[%s350 + $0x210] sm:$0xff] %v483
                %v485 = vld [vmem:[%s349 + $0x418] sm:$0xff]
                %486 = vst [vmem:[%s350 + $0x218] sm:$0xff] %v485
                %v487 = vld [vmem:[%s349 + $0x420] sm:$0xff]
                %488 = vst [vmem:[%s350 + $0x220] sm:$0xff] %v487
                %v489 = vld [vmem:[%s349 + $0x428] sm:$0xff]
                %490 = vst [vmem:[%s350 + $0x228] sm:$0xff] %v489
                %v491 = vld [vmem:[%s349 + $0x430] sm:$0xff]
                %492 = vst [vmem:[%s350 + $0x230] sm:$0xff] %v491
                %v493 = vld [vmem:[%s349 + $0x438] sm:$0xff]
                %494 = vst [vmem:[%s350 + $0x238] sm:$0xff] %v493
                %v495 = vld [vmem:[%s349 + $0x480] sm:$0xff]
                %496 = vst [vmem:[%s350 + $0x240] sm:$0xff] %v495
                %v497 = vld [vmem:[%s349 + $0x488] sm:$0xff]
                %498 = vst [vmem:[%s350 + $0x248] sm:$0xff] %v497
                %v499 = vld [vmem:[%s349 + $0x490] sm:$0xff]
                %500 = vst [vmem:[%s350 + $0x250] sm:$0xff] %v499
                %v501 = vld [vmem:[%s349 + $0x498] sm:$0xff]
                %502 = vst [vmem:[%s350 + $0x258] sm:$0xff] %v501
                %v503 = vld [vmem:[%s349 + $0x4a0] sm:$0xff]
                %504 = vst [vmem:[%s350 + $0x260] sm:$0xff] %v503
                %v505 = vld [vmem:[%s349 + $0x4a8] sm:$0xff]
                %506 = vst [vmem:[%s350 + $0x268] sm:$0xff] %v505
                %v507 = vld [vmem:[%s349 + $0x4b0] sm:$0xff]
                %508 = vst [vmem:[%s350 + $0x270] sm:$0xff] %v507
                %v509 = vld [vmem:[%s349 + $0x4b8] sm:$0xff]
                %510 = vst [vmem:[%s350 + $0x278] sm:$0xff] %v509
                %v511 = vld [vmem:[%s349 + $0x500] sm:$0xff]
                %512 = vst [vmem:[%s350 + $0x280] sm:$0xff] %v511
                %v513 = vld [vmem:[%s349 + $0x508] sm:$0xff]
                %514 = vst [vmem:[%s350 + $0x288] sm:$0xff] %v513
                %v515 = vld [vmem:[%s349 + $0x510] sm:$0xff]
                %516 = vst [vmem:[%s350 + $0x290] sm:$0xff] %v515
                %v517 = vld [vmem:[%s349 + $0x518] sm:$0xff]
                %518 = vst [vmem:[%s350 + $0x298] sm:$0xff] %v517
                %v519 = vld [vmem:[%s349 + $0x520] sm:$0xff]
                %520 = vst [vmem:[%s350 + $0x2a0] sm:$0xff] %v519
                %v521 = vld [vmem:[%s349 + $0x528] sm:$0xff]
                %522 = vst [vmem:[%s350 + $0x2a8] sm:$0xff] %v521
                %v523 = vld [vmem:[%s349 + $0x530] sm:$0xff]
                %524 = vst [vmem:[%s350 + $0x2b0] sm:$0xff] %v523
                %v525 = vld [vmem:[%s349 + $0x538] sm:$0xff]
                %526 = vst [vmem:[%s350 + $0x2b8] sm:$0xff] %v525
                %v527 = vld [vmem:[%s349 + $0x580] sm:$0xff]
                %528 = vst [vmem:[%s350 + $0x2c0] sm:$0xff] %v527
                %v529 = vld [vmem:[%s349 + $0x588] sm:$0xff]
                %530 = vst [vmem:[%s350 + $0x2c8] sm:$0xff] %v529
                %v531 = vld [vmem:[%s349 + $0x590] sm:$0xff]
                %532 = vst [vmem:[%s350 + $0x2d0] sm:$0xff] %v531
                %v533 = vld [vmem:[%s349 + $0x598] sm:$0xff]
                %534 = vst [vmem:[%s350 + $0x2d8] sm:$0xff] %v533
                %v535 = vld [vmem:[%s349 + $0x5a0] sm:$0xff]
                %536 = vst [vmem:[%s350 + $0x2e0] sm:$0xff] %v535
                %v537 = vld [vmem:[%s349 + $0x5a8] sm:$0xff]
                %538 = vst [vmem:[%s350 + $0x2e8] sm:$0xff] %v537
                %v539 = vld [vmem:[%s349 + $0x5b0] sm:$0xff]
                %540 = vst [vmem:[%s350 + $0x2f0] sm:$0xff] %v539
                %v541 = vld [vmem:[%s349 + $0x5b8] sm:$0xff]
                %542 = vst [vmem:[%s350 + $0x2f8] sm:$0xff] %v541
                %v543 = vld [vmem:[%s349 + $0x600] sm:$0xff]
                %544 = vst [vmem:[%s350 + $0x300] sm:$0xff] %v543
                %v545 = vld [vmem:[%s349 + $0x608] sm:$0xff]
                %546 = vst [vmem:[%s350 + $0x308] sm:$0xff] %v545
                %v547 = vld [vmem:[%s349 + $0x610] sm:$0xff]
                %548 = vst [vmem:[%s350 + $0x310] sm:$0xff] %v547
                %v549 = vld [vmem:[%s349 + $0x618] sm:$0xff]
                %550 = vst [vmem:[%s350 + $0x318] sm:$0xff] %v549
                %v551 = vld [vmem:[%s349 + $0x620] sm:$0xff]
                %552 = vst [vmem:[%s350 + $0x320] sm:$0xff] %v551
                %v553 = vld [vmem:[%s349 + $0x628] sm:$0xff]
                %554 = vst [vmem:[%s350 + $0x328] sm:$0xff] %v553
                %v555 = vld [vmem:[%s349 + $0x630] sm:$0xff]
                %556 = vst [vmem:[%s350 + $0x330] sm:$0xff] %v555
                %v557 = vld [vmem:[%s349 + $0x638] sm:$0xff]
                %558 = vst [vmem:[%s350 + $0x338] sm:$0xff] %v557
                %v559 = vld [vmem:[%s349 + $0x680] sm:$0xff]
                %560 = vst [vmem:[%s350 + $0x340] sm:$0xff] %v559
                %v561 = vld [vmem:[%s349 + $0x688] sm:$0xff]
                %562 = vst [vmem:[%s350 + $0x348] sm:$0xff] %v561
                %v563 = vld [vmem:[%s349 + $0x690] sm:$0xff]
                %564 = vst [vmem:[%s350 + $0x350] sm:$0xff] %v563
                %v565 = vld [vmem:[%s349 + $0x698] sm:$0xff]
                %566 = vst [vmem:[%s350 + $0x358] sm:$0xff] %v565
                %v567 = vld [vmem:[%s349 + $0x6a0] sm:$0xff]
                %568 = vst [vmem:[%s350 + $0x360] sm:$0xff] %v567
                %v569 = vld [vmem:[%s349 + $0x6a8] sm:$0xff]
                %570 = vst [vmem:[%s350 + $0x368] sm:$0xff] %v569
                %v571 = vld [vmem:[%s349 + $0x6b0] sm:$0xff]
                %572 = vst [vmem:[%s350 + $0x370] sm:$0xff] %v571
                %v573 = vld [vmem:[%s349 + $0x6b8] sm:$0xff]
                %574 = vst [vmem:[%s350 + $0x378] sm:$0xff] %v573
                %v575 = vld [vmem:[%s349 + $0x700] sm:$0xff]
                %576 = vst [vmem:[%s350 + $0x380] sm:$0xff] %v575
                %v577 = vld [vmem:[%s349 + $0x708] sm:$0xff]
                %578 = vst [vmem:[%s350 + $0x388] sm:$0xff] %v577
                %v579 = vld [vmem:[%s349 + $0x710] sm:$0xff]
                %580 = vst [vmem:[%s350 + $0x390] sm:$0xff] %v579
                %v581 = vld [vmem:[%s349 + $0x718] sm:$0xff]
                %582 = vst [vmem:[%s350 + $0x398] sm:$0xff] %v581
                %v583 = vld [vmem:[%s349 + $0x720] sm:$0xff]
                %584 = vst [vmem:[%s350 + $0x3a0] sm:$0xff] %v583
                %v585 = vld [vmem:[%s349 + $0x728] sm:$0xff]
                %586 = vst [vmem:[%s350 + $0x3a8] sm:$0xff] %v585
                %v587 = vld [vmem:[%s349 + $0x730] sm:$0xff]
                %588 = vst [vmem:[%s350 + $0x3b0] sm:$0xff] %v587
                %v589 = vld [vmem:[%s349 + $0x738] sm:$0xff]
                %590 = vst [vmem:[%s350 + $0x3b8] sm:$0xff] %v589
                %v591 = vld [vmem:[%s349 + $0x780] sm:$0xff]
                %592 = vst [vmem:[%s350 + $0x3c0] sm:$0xff] %v591
                %v593 = vld [vmem:[%s349 + $0x788] sm:$0xff]
                %594 = vst [vmem:[%s350 + $0x3c8] sm:$0xff] %v593
                %v595 = vld [vmem:[%s349 + $0x790] sm:$0xff]
                %596 = vst [vmem:[%s350 + $0x3d0] sm:$0xff] %v595
                %v597 = vld [vmem:[%s349 + $0x798] sm:$0xff]
                %598 = vst [vmem:[%s350 + $0x3d8] sm:$0xff] %v597
                %v599 = vld [vmem:[%s349 + $0x7a0] sm:$0xff]
                %600 = vst [vmem:[%s350 + $0x3e0] sm:$0xff] %v599
                %v601 = vld [vmem:[%s349 + $0x7a8] sm:$0xff]
                %602 = vst [vmem:[%s350 + $0x3e8] sm:$0xff] %v601
                %v603 = vld [vmem:[%s349 + $0x7b0] sm:$0xff]
                %604 = vst [vmem:[%s350 + $0x3f0] sm:$0xff] %v603
                %v605 = vld [vmem:[%s349 + $0x7b8] sm:$0xff]
                %606 = vst [vmem:[%s350 + $0x3f8] sm:$0xff] %v605
                %v607 = vld [vmem:[%s349 + $0x800] sm:$0xff]
                %608 = vst [vmem:[%s350 + $0x400] sm:$0xff] %v607
                %v609 = vld [vmem:[%s349 + $0x808] sm:$0xff]
                %610 = vst [vmem:[%s350 + $0x408] sm:$0xff] %v609
                %v611 = vld [vmem:[%s349 + $0x810] sm:$0xff]
                %612 = vst [vmem:[%s350 + $0x410] sm:$0xff] %v611
                %v613 = vld [vmem:[%s349 + $0x818] sm:$0xff]
                %614 = vst [vmem:[%s350 + $0x418] sm:$0xff] %v613
                %v615 = vld [vmem:[%s349 + $0x820] sm:$0xff]
                %616 = vst [vmem:[%s350 + $0x420] sm:$0xff] %v615
                %v617 = vld [vmem:[%s349 + $0x828] sm:$0xff]
                %618 = vst [vmem:[%s350 + $0x428] sm:$0xff] %v617
                %v619 = vld [vmem:[%s349 + $0x830] sm:$0xff]
                %620 = vst [vmem:[%s350 + $0x430] sm:$0xff] %v619
                %v621 = vld [vmem:[%s349 + $0x838] sm:$0xff]
                %622 = vst [vmem:[%s350 + $0x438] sm:$0xff] %v621
                %v623 = vld [vmem:[%s349 + $0x880] sm:$0xff]
                %624 = vst [vmem:[%s350 + $0x440] sm:$0xff] %v623
                %v625 = vld [vmem:[%s349 + $0x888] sm:$0xff]
                %626 = vst [vmem:[%s350 + $0x448] sm:$0xff] %v625
                %v627 = vld [vmem:[%s349 + $0x890] sm:$0xff]
                %628 = vst [vmem:[%s350 + $0x450] sm:$0xff] %v627
                %v629 = vld [vmem:[%s349 + $0x898] sm:$0xff]
                %630 = vst [vmem:[%s350 + $0x458] sm:$0xff] %v629
                %v631 = vld [vmem:[%s349 + $0x8a0] sm:$0xff]
                %632 = vst [vmem:[%s350 + $0x460] sm:$0xff] %v631
                %v633 = vld [vmem:[%s349 + $0x8a8] sm:$0xff]
                %634 = vst [vmem:[%s350 + $0x468] sm:$0xff] %v633
                %v635 = vld [vmem:[%s349 + $0x8b0] sm:$0xff]
                %636 = vst [vmem:[%s350 + $0x470] sm:$0xff] %v635
                %v637 = vld [vmem:[%s349 + $0x8b8] sm:$0xff]
                %638 = vst [vmem:[%s350 + $0x478] sm:$0xff] %v637
                %v639 = vld [vmem:[%s349 + $0x900] sm:$0xff]
                %640 = vst [vmem:[%s350 + $0x480] sm:$0xff] %v639
                %v641 = vld [vmem:[%s349 + $0x908] sm:$0xff]
                %642 = vst [vmem:[%s350 + $0x488] sm:$0xff] %v641
                %v643 = vld [vmem:[%s349 + $0x910] sm:$0xff]
                %644 = vst [vmem:[%s350 + $0x490] sm:$0xff] %v643
                %v645 = vld [vmem:[%s349 + $0x918] sm:$0xff]
                %646 = vst [vmem:[%s350 + $0x498] sm:$0xff] %v645
                %v647 = vld [vmem:[%s349 + $0x920] sm:$0xff]
                %648 = vst [vmem:[%s350 + $0x4a0] sm:$0xff] %v647
                %v649 = vld [vmem:[%s349 + $0x928] sm:$0xff]
                %650 = vst [vmem:[%s350 + $0x4a8] sm:$0xff] %v649
                %v651 = vld [vmem:[%s349 + $0x930] sm:$0xff]
                %652 = vst [vmem:[%s350 + $0x4b0] sm:$0xff] %v651
                %v653 = vld [vmem:[%s349 + $0x938] sm:$0xff]
                %654 = vst [vmem:[%s350 + $0x4b8] sm:$0xff] %v653
                %v655 = vld [vmem:[%s349 + $0x980] sm:$0xff]
                %656 = vst [vmem:[%s350 + $0x4c0] sm:$0xff] %v655
                %v657 = vld [vmem:[%s349 + $0x988] sm:$0xff]
                %658 = vst [vmem:[%s350 + $0x4c8] sm:$0xff] %v657
                %v659 = vld [vmem:[%s349 + $0x990] sm:$0xff]
                %660 = vst [vmem:[%s350 + $0x4d0] sm:$0xff] %v659
                %v661 = vld [vmem:[%s349 + $0x998] sm:$0xff]
                %662 = vst [vmem:[%s350 + $0x4d8] sm:$0xff] %v661
                %v663 = vld [vmem:[%s349 + $0x9a0] sm:$0xff]
                %664 = vst [vmem:[%s350 + $0x4e0] sm:$0xff] %v663
                %v665 = vld [vmem:[%s349 + $0x9a8] sm:$0xff]
                %666 = vst [vmem:[%s350 + $0x4e8] sm:$0xff] %v665
                %v667 = vld [vmem:[%s349 + $0x9b0] sm:$0xff]
                %668 = vst [vmem:[%s350 + $0x4f0] sm:$0xff] %v667
                %v669 = vld [vmem:[%s349 + $0x9b8] sm:$0xff]
                %670 = vst [vmem:[%s350 + $0x4f8] sm:$0xff] %v669
                %v671 = vld [vmem:[%s349 + $0xa00] sm:$0xff]
                %672 = vst [vmem:[%s350 + $0x500] sm:$0xff] %v671
                %v673 = vld [vmem:[%s349 + $0xa08] sm:$0xff]
                %674 = vst [vmem:[%s350 + $0x508] sm:$0xff] %v673
                %v675 = vld [vmem:[%s349 + $0xa10] sm:$0xff]
                %676 = vst [vmem:[%s350 + $0x510] sm:$0xff] %v675
                %v677 = vld [vmem:[%s349 + $0xa18] sm:$0xff]
                %678 = vst [vmem:[%s350 + $0x518] sm:$0xff] %v677
                %v679 = vld [vmem:[%s349 + $0xa20] sm:$0xff]
                %680 = vst [vmem:[%s350 + $0x520] sm:$0xff] %v679
                %v681 = vld [vmem:[%s349 + $0xa28] sm:$0xff]
                %682 = vst [vmem:[%s350 + $0x528] sm:$0xff] %v681
                %v683 = vld [vmem:[%s349 + $0xa30] sm:$0xff]
                %684 = vst [vmem:[%s350 + $0x530] sm:$0xff] %v683
                %v685 = vld [vmem:[%s349 + $0xa38] sm:$0xff]
                %686 = vst [vmem:[%s350 + $0x538] sm:$0xff] %v685
                %v687 = vld [vmem:[%s349 + $0xa80] sm:$0xff]
                %688 = vst [vmem:[%s350 + $0x540] sm:$0xff] %v687
                %v689 = vld [vmem:[%s349 + $0xa88] sm:$0xff]
                %690 = vst [vmem:[%s350 + $0x548] sm:$0xff] %v689
                %v691 = vld [vmem:[%s349 + $0xa90] sm:$0xff]
                %692 = vst [vmem:[%s350 + $0x550] sm:$0xff] %v691
                %v693 = vld [vmem:[%s349 + $0xa98] sm:$0xff]
                %694 = vst [vmem:[%s350 + $0x558] sm:$0xff] %v693
                %v695 = vld [vmem:[%s349 + $0xaa0] sm:$0xff]
                %696 = vst [vmem:[%s350 + $0x560] sm:$0xff] %v695
                %v697 = vld [vmem:[%s349 + $0xaa8] sm:$0xff]
                %698 = vst [vmem:[%s350 + $0x568] sm:$0xff] %v697
                %v699 = vld [vmem:[%s349 + $0xab0] sm:$0xff]
                %700 = vst [vmem:[%s350 + $0x570] sm:$0xff] %v699
                %v701 = vld [vmem:[%s349 + $0xab8] sm:$0xff]
                %702 = vst [vmem:[%s350 + $0x578] sm:$0xff] %v701
                %v703 = vld [vmem:[%s349 + $0xb00] sm:$0xff]
                %704 = vst [vmem:[%s350 + $0x580] sm:$0xff] %v703
                %v705 = vld [vmem:[%s349 + $0xb08] sm:$0xff]
                %706 = vst [vmem:[%s350 + $0x588] sm:$0xff] %v705
                %v707 = vld [vmem:[%s349 + $0xb10] sm:$0xff]
                %708 = vst [vmem:[%s350 + $0x590] sm:$0xff] %v707
                %v709 = vld [vmem:[%s349 + $0xb18] sm:$0xff]
                %710 = vst [vmem:[%s350 + $0x598] sm:$0xff] %v709
                %v711 = vld [vmem:[%s349 + $0xb20] sm:$0xff]
                %712 = vst [vmem:[%s350 + $0x5a0] sm:$0xff] %v711
                %v713 = vld [vmem:[%s349 + $0xb28] sm:$0xff]
                %714 = vst [vmem:[%s350 + $0x5a8] sm:$0xff] %v713
                %v715 = vld [vmem:[%s349 + $0xb30] sm:$0xff]
                %716 = vst [vmem:[%s350 + $0x5b0] sm:$0xff] %v715
                %v717 = vld [vmem:[%s349 + $0xb38] sm:$0xff]
                %718 = vst [vmem:[%s350 + $0x5b8] sm:$0xff] %v717
                %v719 = vld [vmem:[%s349 + $0xb80] sm:$0xff]
                %720 = vst [vmem:[%s350 + $0x5c0] sm:$0xff] %v719
                %v721 = vld [vmem:[%s349 + $0xb88] sm:$0xff]
                %722 = vst [vmem:[%s350 + $0x5c8] sm:$0xff] %v721
                %v723 = vld [vmem:[%s349 + $0xb90] sm:$0xff]
                %724 = vst [vmem:[%s350 + $0x5d0] sm:$0xff] %v723
                %v725 = vld [vmem:[%s349 + $0xb98] sm:$0xff]
                %726 = vst [vmem:[%s350 + $0x5d8] sm:$0xff] %v725
                %v727 = vld [vmem:[%s349 + $0xba0] sm:$0xff]
                %728 = vst [vmem:[%s350 + $0x5e0] sm:$0xff] %v727
                %v729 = vld [vmem:[%s349 + $0xba8] sm:$0xff]
                %730 = vst [vmem:[%s350 + $0x5e8] sm:$0xff] %v729
                %v731 = vld [vmem:[%s349 + $0xbb0] sm:$0xff]
                %732 = vst [vmem:[%s350 + $0x5f0] sm:$0xff] %v731
                %v733 = vld [vmem:[%s349 + $0xbb8] sm:$0xff]
                %734 = vst [vmem:[%s350 + $0x5f8] sm:$0xff] %v733
              $region73: #{lenet_forward.1} parent=67 // loop_footer
                %s348 = sadd.s32 1, %s344
              $region74: #{lenet_forward.1} parent=67 // loop_footer_branch
                %343 = sbr.rel target = $region70
              $region75: #{lenet_forward.1} parent=67 // loop_exit
                _
            $region68: #{lenet_forward.1} parent=63 // pred_fallthru
              _
            // Predicated region
            $region76: #{lenet_forward.1} parent=63 // pred_check
              _
            $region77: #{lenet_forward.1} parent=63 // pred_check_branch
              %736 = sbr.rel target = $region79
            $region78: #{lenet_forward.1} parent=63 // pred_region
              _
            $region79: #{lenet_forward.1} parent=63 // pred_fallthru
              _
          $region64: #{lenet_forward.1} parent=59 // pred_fallthru
            _
          %737 = vnop
        $region60: #{lenet_forward.1} parent=55 // pred_fallthru
          _
      $region56: #{lenet_forward.1} parent=5 // pred_fallthru
        _
      %p738 = scmp.le.s32.totalorder 1, %s17
      %p739 = scmp.lt.s32.totalorder %s17, 3
      %p740 = pnand %p738, %p739
      %p741 = pneg %p740
      // Predicated region
      $region80: #{lenet_forward.1} parent=5 // pred_check
        _
      $region81: #{lenet_forward.1} parent=5 // pred_check_branch
        %743 = sbr.rel (%p740) target = $region83
      $region82: #{lenet_forward.1} parent=5 // pred_region
        %s744 = ssub.s32 %s17, 1
        %s745 = sand.u32 %s30, 1
        %s746 = sand.u32 %s30, 1
        %s747 = smul.addr %s746, 1536
        %s748 = scalar_lea.vmem [#allocation2], %s747
        // Predicated region
        $region84: #{lenet_forward.1} parent=82 // pred_check
          %p749 = pneg %p43
        $region85: #{lenet_forward.1} parent=82 // pred_check_branch
          %751 = sbr.rel (%p749) target = $region87
        $region86: #{lenet_forward.1} parent=82 // pred_region
          _
        $region87: #{lenet_forward.1} parent=82 // pred_fallthru
          _
        %s752 = sand.u32 %s30, 1
        %s753 = sand.u32 %s30, 1
        %s754 = smul.addr %s753, 1536
        %s755 = scalar_lea.vmem [#allocation2], %s754
        %p756 = pneg %p43
        %p757 = pneg %p40
        %p758 = pneg %p64
        %p759 = pneg %p61
        %p760 = pneg %p85
        %p761 = pneg %p82
        %p762 = pneg %p106
        %p763 = pneg %p103
        %p764 = pneg %p127
        %p765 = pneg %p124
        %p766 = pneg %p148
        %p767 = pneg %p145
        %p768 = pneg %p169
        %p769 = pneg %p166
        %p770 = pneg %p190
        %p771 = pneg %p187
        %p772 = pneg %p211
        %p773 = pneg %p208
        %p774 = pneg %p232
        %p775 = pneg %p229
        %p776 = pneg %p253
        %p777 = pneg %p250
        %p778 = pneg %p279
        %p779 = pneg %p276
        %s780 = smul.u32 4, %s22
        %p781 = scmp.lt.s32.totalorder %s780, 7
        %s782 = scalar_select %p781, %s780, 7
        %s783 = smul.addr %s782, 8
        %s784 = scalar_lea.vmem %s11, %s783
        %s785 = smul.u32 4, %s22
        %s786 = smul.u32 4, %s22
        %p787 = scmp.lt.s32.totalorder %s786, 7
        %s788 = scalar_select %p787, %s786, 7
        %s789 = smul.addr %s788, 8
        %s790 = scalar_lea.vmem %s11, %s789
        %s791 = smul.u32 4, %s22
        %v792 = vld [vmem:[%s748] sm:$0xff]
        %v793 = vld [vmem:[%s748 + $0x8] sm:$0xff]
        %v794 = vld [vmem:[%s748 + $0x10] sm:$0xff]
        %v795 = vld [vmem:[%s748 + $0x18] sm:$0xff]
        %v796 = vld [vmem:[%s748 + $0x20] sm:$0xff]
        %v797 = vld [vmem:[%s748 + $0x28] sm:$0xff]
        %v798 = vld [vmem:[%s748 + $0x30] sm:$0xff]
        %v799 = vld [vmem:[%s748 + $0x38] sm:$0xff]
        %v800 = vld [vmem:[%s748 + $0x40] sm:$0xff]
        %v801 = vld [vmem:[%s748 + $0x48] sm:$0xff]
        %v802 = vld [vmem:[%s748 + $0x50] sm:$0xff]
        %v803 = vld [vmem:[%s748 + $0x58] sm:$0xff]
        %v804 = vld [vmem:[%s748 + $0x60] sm:$0xff]
        %v805 = vld [vmem:[%s748 + $0x68] sm:$0xff]
        %v806 = vld [vmem:[%s748 + $0x70] sm:$0xff]
        %v807 = vld [vmem:[%s748 + $0x78] sm:$0xff]
        %v808 = vld [vmem:[%s748 + $0x80] sm:$0xff]
        %v809 = vld [vmem:[%s748 + $0x88] sm:$0xff]
        %v810 = vld [vmem:[%s748 + $0x90] sm:$0xff]
        %v811 = vld [vmem:[%s748 + $0x98] sm:$0xff]
        %v812 = vld [vmem:[%s748 + $0xa0] sm:$0xff]
        %v813 = vld [vmem:[%s748 + $0xa8] sm:$0xff]
        %v814 = vld [vmem:[%s748 + $0xb0] sm:$0xff]
        %v815 = vld [vmem:[%s748 + $0xb8] sm:$0xff]
        %v816 = vld [vmem:[%s748 + $0xc0] sm:$0xff]
        %v817 = vld [vmem:[%s748 + $0xc8] sm:$0xff]
        %v818 = vld [vmem:[%s748 + $0xd0] sm:$0xff]
        %v819 = vld [vmem:[%s748 + $0xd8] sm:$0xff]
        %v820 = vld [vmem:[%s748 + $0xe0] sm:$0xff]
        %v821 = vld [vmem:[%s748 + $0xe8] sm:$0xff]
        %v822 = vld [vmem:[%s748 + $0xf0] sm:$0xff]
        %v823 = vld [vmem:[%s748 + $0xf8] sm:$0xff]
        %v824 = vld [vmem:[%s748 + $0x100] sm:$0xff]
        %v825 = vld [vmem:[%s748 + $0x108] sm:$0xff]
        %v826 = vld [vmem:[%s748 + $0x110] sm:$0xff]
        %v827 = vld [vmem:[%s748 + $0x118] sm:$0xff]
        %v828 = vld [vmem:[%s748 + $0x120] sm:$0xff]
        %v829 = vld [vmem:[%s748 + $0x128] sm:$0xff]
        %v830 = vld [vmem:[%s748 + $0x130] sm:$0xff]
        %v831 = vld [vmem:[%s748 + $0x138] sm:$0xff]
        %v832 = vld [vmem:[%s748 + $0x140] sm:$0xff]
        %v833 = vld [vmem:[%s748 + $0x148] sm:$0xff]
        %v834 = vld [vmem:[%s748 + $0x150] sm:$0xff]
        %v835 = vld [vmem:[%s748 + $0x158] sm:$0xff]
        %v836 = vld [vmem:[%s748 + $0x160] sm:$0xff]
        %v837 = vld [vmem:[%s748 + $0x168] sm:$0xff]
        %v838 = vld [vmem:[%s748 + $0x170] sm:$0xff]
        %v839 = vld [vmem:[%s748 + $0x178] sm:$0xff]
        %v840 = vld [vmem:[%s748 + $0x180] sm:$0xff]
        %v841 = vld [vmem:[%s748 + $0x188] sm:$0xff]
        %v842 = vld [vmem:[%s748 + $0x190] sm:$0xff]
        %v843 = vld [vmem:[%s748 + $0x198] sm:$0xff]
        %v844 = vld [vmem:[%s748 + $0x1a0] sm:$0xff]
        %v845 = vld [vmem:[%s748 + $0x1a8] sm:$0xff]
        %v846 = vld [vmem:[%s748 + $0x1b0] sm:$0xff]
        %v847 = vld [vmem:[%s748 + $0x1b8] sm:$0xff]
        %v848 = vld [vmem:[%s748 + $0x1c0] sm:$0xff]
        %v849 = vld [vmem:[%s748 + $0x1c8] sm:$0xff]
        %v850 = vld [vmem:[%s748 + $0x1d0] sm:$0xff]
        %v851 = vld [vmem:[%s748 + $0x1d8] sm:$0xff]
        %v852 = vld [vmem:[%s748 + $0x1e0] sm:$0xff]
        %v853 = vld [vmem:[%s748 + $0x1e8] sm:$0xff]
        %v854 = vld [vmem:[%s748 + $0x1f0] sm:$0xff]
        %v855 = vld [vmem:[%s748 + $0x1f8] sm:$0xff]
        %v856 = vld [vmem:[%s748 + $0x200] sm:$0xff]
        %v857 = vld [vmem:[%s748 + $0x208] sm:$0xff]
        %v858 = vld [vmem:[%s748 + $0x210] sm:$0xff]
        %v859 = vld [vmem:[%s748 + $0x218] sm:$0xff]
        %v860 = vld [vmem:[%s748 + $0x220] sm:$0xff]
        %v861 = vld [vmem:[%s748 + $0x228] sm:$0xff]
        %v862 = vld [vmem:[%s748 + $0x230] sm:$0xff]
        %v863 = vld [vmem:[%s748 + $0x238] sm:$0xff]
        %v864 = vld [vmem:[%s748 + $0x240] sm:$0xff]
        %v865 = vld [vmem:[%s748 + $0x248] sm:$0xff]
        %v866 = vld [vmem:[%s748 + $0x250] sm:$0xff]
        %v867 = vld [vmem:[%s748 + $0x258] sm:$0xff]
        %v868 = vld [vmem:[%s748 + $0x260] sm:$0xff]
        %v869 = vld [vmem:[%s748 + $0x268] sm:$0xff]
        %v870 = vld [vmem:[%s748 + $0x270] sm:$0xff]
        %v871 = vld [vmem:[%s748 + $0x278] sm:$0xff]
        %v872 = vld [vmem:[%s748 + $0x280] sm:$0xff]
        %v873 = vld [vmem:[%s748 + $0x288] sm:$0xff]
        %v874 = vld [vmem:[%s748 + $0x290] sm:$0xff]
        %v875 = vld [vmem:[%s748 + $0x298] sm:$0xff]
        %v876 = vld [vmem:[%s748 + $0x2a0] sm:$0xff]
        %v877 = vld [vmem:[%s748 + $0x2a8] sm:$0xff]
        %v878 = vld [vmem:[%s748 + $0x2b0] sm:$0xff]
        %v879 = vld [vmem:[%s748 + $0x2b8] sm:$0xff]
        %v880 = vld [vmem:[%s748 + $0x2c0] sm:$0xff]
        %v881 = vld [vmem:[%s748 + $0x2c8] sm:$0xff]
        %v882 = vld [vmem:[%s748 + $0x2d0] sm:$0xff]
        %v883 = vld [vmem:[%s748 + $0x2d8] sm:$0xff]
        %v884 = vld [vmem:[%s748 + $0x2e0] sm:$0xff]
        %v885 = vld [vmem:[%s748 + $0x2e8] sm:$0xff]
        %v886 = vld [vmem:[%s748 + $0x2f0] sm:$0xff]
        %v887 = vld [vmem:[%s748 + $0x2f8] sm:$0xff]
        %v888 = vld [vmem:[%s748 + $0x300] sm:$0xff]
        %v889 = vld [vmem:[%s748 + $0x308] sm:$0xff]
        %v890 = vld [vmem:[%s748 + $0x310] sm:$0xff]
        %v891 = vld [vmem:[%s748 + $0x318] sm:$0xff]
        %v892 = vld [vmem:[%s748 + $0x320] sm:$0xff]
        %v893 = vld [vmem:[%s748 + $0x328] sm:$0xff]
        %v894 = vld [vmem:[%s748 + $0x330] sm:$0xff]
        %v895 = vld [vmem:[%s748 + $0x338] sm:$0xff]
        %v896 = vld [vmem:[%s748 + $0x340] sm:$0xff]
        %v897 = vld [vmem:[%s748 + $0x348] sm:$0xff]
        %v898 = vld [vmem:[%s748 + $0x350] sm:$0xff]
        %v899 = vld [vmem:[%s748 + $0x358] sm:$0xff]
        %v900 = vld [vmem:[%s748 + $0x360] sm:$0xff]
        %v901 = vld [vmem:[%s748 + $0x368] sm:$0xff]
        %v902 = vld [vmem:[%s748 + $0x370] sm:$0xff]
        %v903 = vld [vmem:[%s748 + $0x378] sm:$0xff]
        %v904 = vld [vmem:[%s748 + $0x380] sm:$0xff]
        %v905 = vld [vmem:[%s748 + $0x388] sm:$0xff]
        %v906 = vld [vmem:[%s748 + $0x390] sm:$0xff]
        %v907 = vld [vmem:[%s748 + $0x398] sm:$0xff]
        %v908 = vld [vmem:[%s748 + $0x3a0] sm:$0xff]
        %v909 = vld [vmem:[%s748 + $0x3a8] sm:$0xff]
        %v910 = vld [vmem:[%s748 + $0x3b0] sm:$0xff]
        %v911 = vld [vmem:[%s748 + $0x3b8] sm:$0xff]
        %v912 = vld [vmem:[%s748 + $0x3c0] sm:$0xff]
        %v913 = vld [vmem:[%s748 + $0x3c8] sm:$0xff]
        %v914 = vld [vmem:[%s748 + $0x3d0] sm:$0xff]
        %v915 = vld [vmem:[%s748 + $0x3d8] sm:$0xff]
        %v916 = vld [vmem:[%s748 + $0x3e0] sm:$0xff]
        %v917 = vld [vmem:[%s748 + $0x3e8] sm:$0xff]
        %v918 = vld [vmem:[%s748 + $0x3f0] sm:$0xff]
        %v919 = vld [vmem:[%s748 + $0x3f8] sm:$0xff]
        %v920 = vld [vmem:[%s748 + $0x400] sm:$0xff]
        %v921 = vld [vmem:[%s748 + $0x408] sm:$0xff]
        %v922 = vld [vmem:[%s748 + $0x410] sm:$0xff]
        %v923 = vld [vmem:[%s748 + $0x418] sm:$0xff]
        %v924 = vld [vmem:[%s748 + $0x420] sm:$0xff]
        %v925 = vld [vmem:[%s748 + $0x428] sm:$0xff]
        %v926 = vld [vmem:[%s748 + $0x430] sm:$0xff]
        %v927 = vld [vmem:[%s748 + $0x438] sm:$0xff]
        %v928 = vld [vmem:[%s748 + $0x440] sm:$0xff]
        %v929 = vld [vmem:[%s748 + $0x448] sm:$0xff]
        %v930 = vld [vmem:[%s748 + $0x450] sm:$0xff]
        %v931 = vld [vmem:[%s748 + $0x458] sm:$0xff]
        %v932 = vld [vmem:[%s748 + $0x460] sm:$0xff]
        %v933 = vld [vmem:[%s748 + $0x468] sm:$0xff]
        %v934 = vld [vmem:[%s748 + $0x470] sm:$0xff]
        %v935 = vld [vmem:[%s748 + $0x478] sm:$0xff]
        %v936 = vld [vmem:[%s748 + $0x480] sm:$0xff]
        %v937 = vld [vmem:[%s748 + $0x488] sm:$0xff]
        %v938 = vld [vmem:[%s748 + $0x490] sm:$0xff]
        %v939 = vld [vmem:[%s748 + $0x498] sm:$0xff]
        %v940 = vld [vmem:[%s748 + $0x4a0] sm:$0xff]
        %v941 = vld [vmem:[%s748 + $0x4a8] sm:$0xff]
        %v942 = vld [vmem:[%s748 + $0x4b0] sm:$0xff]
        %v943 = vld [vmem:[%s748 + $0x4b8] sm:$0xff]
        %v944 = vld [vmem:[%s748 + $0x4c0] sm:$0xff]
        %v945 = vld [vmem:[%s748 + $0x4c8] sm:$0xff]
        %v946 = vld [vmem:[%s748 + $0x4d0] sm:$0xff]
        %v947 = vld [vmem:[%s748 + $0x4d8] sm:$0xff]
        %v948 = vld [vmem:[%s748 + $0x4e0] sm:$0xff]
        %v949 = vld [vmem:[%s748 + $0x4e8] sm:$0xff]
        %v950 = vld [vmem:[%s748 + $0x4f0] sm:$0xff]
        %v951 = vld [vmem:[%s748 + $0x4f8] sm:$0xff]
        %v952 = vld [vmem:[%s748 + $0x500] sm:$0xff]
        %v953 = vld [vmem:[%s748 + $0x508] sm:$0xff]
        %v954 = vld [vmem:[%s748 + $0x510] sm:$0xff]
        %v955 = vld [vmem:[%s748 + $0x518] sm:$0xff]
        %v956 = vld [vmem:[%s748 + $0x520] sm:$0xff]
        %v957 = vld [vmem:[%s748 + $0x528] sm:$0xff]
        %v958 = vld [vmem:[%s748 + $0x530] sm:$0xff]
        %v959 = vld [vmem:[%s748 + $0x538] sm:$0xff]
        %v960 = vld [vmem:[%s748 + $0x540] sm:$0xff]
        %v961 = vld [vmem:[%s748 + $0x548] sm:$0xff]
        %v962 = vld [vmem:[%s748 + $0x550] sm:$0xff]
        %v963 = vld [vmem:[%s748 + $0x558] sm:$0xff]
        %v964 = vld [vmem:[%s748 + $0x560] sm:$0xff]
        %v965 = vld [vmem:[%s748 + $0x568] sm:$0xff]
        %v966 = vld [vmem:[%s748 + $0x570] sm:$0xff]
        %v967 = vld [vmem:[%s748 + $0x578] sm:$0xff]
        %v968 = vld [vmem:[%s748 + $0x580] sm:$0xff]
        %v969 = vld [vmem:[%s748 + $0x588] sm:$0xff]
        %v970 = vld [vmem:[%s748 + $0x590] sm:$0xff]
        %v971 = vld [vmem:[%s748 + $0x598] sm:$0xff]
        %v972 = vld [vmem:[%s748 + $0x5a0] sm:$0xff]
        %v973 = vld [vmem:[%s748 + $0x5a8] sm:$0xff]
        %v974 = vld [vmem:[%s748 + $0x5b0] sm:$0xff]
        %v975 = vld [vmem:[%s748 + $0x5b8] sm:$0xff]
        %v976 = vld [vmem:[%s748 + $0x5c0] sm:$0xff]
        %v977 = vld [vmem:[%s748 + $0x5c8] sm:$0xff]
        %v978 = vld [vmem:[%s748 + $0x5d0] sm:$0xff]
        %v979 = vld [vmem:[%s748 + $0x5d8] sm:$0xff]
        %v980 = vld [vmem:[%s748 + $0x5e0] sm:$0xff]
        %v981 = vld [vmem:[%s748 + $0x5e8] sm:$0xff]
        %v982 = vld [vmem:[%s748 + $0x5f0] sm:$0xff]
        %v983 = vld [vmem:[%s748 + $0x5f8] sm:$0xff]
        %v984 = vld [vmem:[%s1] sm:$0xff]
        %v985 = vld [vmem:[%s1 + $0x8] sm:$0xff]
        %v986 = vld [vmem:[%s1 + $0x10] sm:$0xff]
        %v987 = vld [vmem:[%s1 + $0x18] sm:$0xff]
        %v988 = vld [vmem:[%s1 + $0x20] sm:$0xff]
        %v989 = vld [vmem:[%s1 + $0x28] sm:$0xff]
        %v990 = vld [vmem:[%s1 + $0x30] sm:$0xff]
        %v991 = vld [vmem:[%s1 + $0x38] sm:$0xff]
        %v992 = vld [vmem:[%s1 + $0x40] sm:$0xff]
        %v993 = vld [vmem:[%s1 + $0x48] sm:$0xff]
        %v994 = vld [vmem:[%s1 + $0x50] sm:$0xff]
        %v995 = vld [vmem:[%s1 + $0x58] sm:$0xff]
        %v996 = vld [vmem:[%s1 + $0x60] sm:$0xff]
        %v997 = vld [vmem:[%s1 + $0x68] sm:$0xff]
        %v998 = vld [vmem:[%s1 + $0x70] sm:$0xff]
        %v999 = vld [vmem:[%s1 + $0x78] sm:$0xff]
        %v1000 = vld [vmem:[%s1 + $0x80] sm:$0xff]
        %v1001 = vld [vmem:[%s1 + $0x88] sm:$0xff]
        %v1002 = vld [vmem:[%s1 + $0x90] sm:$0xff]
        %v1003 = vld [vmem:[%s1 + $0x98] sm:$0xff]
        %v1004 = vld [vmem:[%s1 + $0xa0] sm:$0xff]
        %v1005 = vld [vmem:[%s1 + $0xa8] sm:$0xff]
        %v1006 = vld [vmem:[%s1 + $0xb0] sm:$0xff]
        %v1007 = vld [vmem:[%s1 + $0xb8] sm:$0xff]
        %v1008 = vld [vmem:[%s1 + $0xc0] sm:$0xff]
        %v1009 = vld [vmem:[%s1 + $0xc8] sm:$0xff]
        %v1010 = vld [vmem:[%s1 + $0xd0] sm:$0xff]
        %v1011 = vld [vmem:[%s1 + $0xd8] sm:$0xff]
        %v1012 = vld [vmem:[%s1 + $0xe0] sm:$0xff]
        %v1013 = vld [vmem:[%s1 + $0xe8] sm:$0xff]
        %v1014 = vld [vmem:[%s1 + $0xf0] sm:$0xff]
        %v1015 = vld [vmem:[%s1 + $0xf8] sm:$0xff]
        %v1016 = vld [vmem:[%s1 + $0x100] sm:$0xff]
        %v1017 = vld [vmem:[%s1 + $0x108] sm:$0xff]
        %v1018 = vld [vmem:[%s1 + $0x110] sm:$0xf]
        %v1019 = vld [vmem:[%s1 + $0x118] sm:$0xf]
        %v1020 = vld [vmem:[%s2] sm:$0x3]
        %v1022 = vlaneseq
        %v1023 = vshrl.u32 %v1022, 7
        %v1024 = vsub.s32 0, %v1023
        %v1025 = vrot.slane %v1020, %v1024
        %v1026 = vlaneseq
        %v1027 = vshrl.u32 %v1026, 7
        %v1028 = vsub.s32 1, %v1027
        %v1029 = vrot.slane %v1020, %v1028
        %vm1032 = vcmask 97280
        %v1034 = vsel %vm1032, %v793, 0
        %v1037 = vsel %vm1032, %v795, 0
        %v1040 = vsel %vm1032, %v797, 0
        %v1043 = vsel %vm1032, %v799, 0
        %v1046 = vsel %vm1032, %v801, 0
        %v1049 = vsel %vm1032, %v803, 0
        %v1052 = vsel %vm1032, %v805, 0
        %v1055 = vsel %vm1032, %v807, 0
        %v1058 = vsel %vm1032, %v809, 0
        %v1061 = vsel %vm1032, %v811, 0
        %v1064 = vsel %vm1032, %v813, 0
        %v1067 = vsel %vm1032, %v815, 0
        %v1070 = vsel %vm1032, %v817, 0
        %v1073 = vsel %vm1032, %v819, 0
        %v1076 = vsel %vm1032, %v821, 0
        %v1079 = vsel %vm1032, %v823, 0
        %v1082 = vsel %vm1032, %v825, 0
        %v1085 = vsel %vm1032, %v827, 0
        %v1088 = vsel %vm1032, %v829, 0
        %v1091 = vsel %vm1032, %v831, 0
        %v1094 = vsel %vm1032, %v833, 0
        %v1097 = vsel %vm1032, %v835, 0
        %v1100 = vsel %vm1032, %v837, 0
        %v1103 = vsel %vm1032, %v839, 0
        %v1106 = vsel %vm1032, %v841, 0
        %v1109 = vsel %vm1032, %v843, 0
        %v1112 = vsel %vm1032, %v845, 0
        %v1115 = vsel %vm1032, %v847, 0
        %v1118 = vsel %vm1032, %v849, 0
        %v1121 = vsel %vm1032, %v851, 0
        %v1124 = vsel %vm1032, %v853, 0
        %v1127 = vsel %vm1032, %v855, 0
        %v1130 = vsel %vm1032, %v857, 0
        %v1133 = vsel %vm1032, %v859, 0
        %v1136 = vsel %vm1032, %v861, 0
        %v1139 = vsel %vm1032, %v863, 0
        %v1142 = vsel %vm1032, %v865, 0
        %v1145 = vsel %vm1032, %v867, 0
        %v1148 = vsel %vm1032, %v869, 0
        %v1151 = vsel %vm1032, %v871, 0
        %v1154 = vsel %vm1032, %v873, 0
        %v1157 = vsel %vm1032, %v875, 0
        %v1160 = vsel %vm1032, %v877, 0
        %v1163 = vsel %vm1032, %v879, 0
        %v1166 = vsel %vm1032, %v881, 0
        %v1169 = vsel %vm1032, %v883, 0
        %v1172 = vsel %vm1032, %v885, 0
        %v1175 = vsel %vm1032, %v887, 0
        %v1178 = vsel %vm1032, %v889, 0
        %v1181 = vsel %vm1032, %v891, 0
        %v1184 = vsel %vm1032, %v893, 0
        %v1187 = vsel %vm1032, %v895, 0
        %v1190 = vsel %vm1032, %v897, 0
        %v1193 = vsel %vm1032, %v899, 0
        %v1196 = vsel %vm1032, %v901, 0
        %v1199 = vsel %vm1032, %v903, 0
        %v1202 = vsel %vm1032, %v905, 0
        %v1205 = vsel %vm1032, %v907, 0
        %v1208 = vsel %vm1032, %v909, 0
        %v1211 = vsel %vm1032, %v911, 0
        %v1214 = vsel %vm1032, %v913, 0
        %v1217 = vsel %vm1032, %v915, 0
        %v1220 = vsel %vm1032, %v917, 0
        %v1223 = vsel %vm1032, %v919, 0
        %v1226 = vsel %vm1032, %v921, 0
        %v1229 = vsel %vm1032, %v923, 0
        %v1232 = vsel %vm1032, %v925, 0
        %v1235 = vsel %vm1032, %v927, 0
        %v1238 = vsel %vm1032, %v929, 0
        %v1241 = vsel %vm1032, %v931, 0
        %v1244 = vsel %vm1032, %v933, 0
        %v1247 = vsel %vm1032, %v935, 0
        %v1250 = vsel %vm1032, %v937, 0
        %v1253 = vsel %vm1032, %v939, 0
        %v1256 = vsel %vm1032, %v941, 0
        %v1259 = vsel %vm1032, %v943, 0
        %v1262 = vsel %vm1032, %v945, 0
        %v1265 = vsel %vm1032, %v947, 0
        %v1268 = vsel %vm1032, %v949, 0
        %v1271 = vsel %vm1032, %v951, 0
        %v1274 = vsel %vm1032, %v953, 0
        %v1277 = vsel %vm1032, %v955, 0
        %v1280 = vsel %vm1032, %v957, 0
        %v1283 = vsel %vm1032, %v959, 0
        %v1286 = vsel %vm1032, %v961, 0
        %v1289 = vsel %vm1032, %v963, 0
        %v1292 = vsel %vm1032, %v965, 0
        %v1295 = vsel %vm1032, %v967, 0
        %v1298 = vsel %vm1032, %v969, 0
        %v1301 = vsel %vm1032, %v971, 0
        %v1304 = vsel %vm1032, %v973, 0
        %v1307 = vsel %vm1032, %v975, 0
        %v1310 = vsel %vm1032, %v977, 0
        %v1313 = vsel %vm1032, %v979, 0
        %v1316 = vsel %vm1032, %v981, 0
        %v1319 = vsel %vm1032, %v983, 0
        %vm1321 = vcmask 1043456
        %v1323 = vsel %vm1321, %v1018, 0
        %v1326 = vsel %vm1321, %v1019, 0
        %1328 = vmatprep.subr.mxu0 %v985
        %1329 = vmatpush1.msra.mxu0 %v984
        %1330 = vmatprep.subr.mxu0 %v987
        %1331 = vmatpush1.msra.mxu0 %v986
        %1332 = vmatprep.subr.mxu0 %v989
        %1333 = vmatpush1.msra.mxu0 %v988
        %1334 = vmatprep.subr.mxu0 %v991
        %1335 = vmatpush1.msra.mxu0 %v990
        %1336 = vmatprep.subr.mxu0 %v993
        %1337 = vmatpush1.msra.mxu0 %v992
        %1338 = vmatprep.subr.mxu0 %v995
        %1339 = vmatpush1.msra.mxu0 %v994
        %1340 = vmatprep.subr.mxu0 %v997
        %1341 = vmatpush1.msra.mxu0 %v996
        %1342 = vmatprep.subr.mxu0 %v999
        %1343 = vmatpush1.msra.mxu0 %v998
        %1344 = vmatprep.subr.mxu0 %v1001
        %1345 = vmatpush1.msra.mxu0 %v1000
        %1346 = vmatprep.subr.mxu0 %v1003
        %1347 = vmatpush1.msra.mxu0 %v1002
        %1348 = vmatprep.subr.mxu0 %v1005
        %1349 = vmatpush1.msra.mxu0 %v1004
        %1350 = vmatprep.subr.mxu0 %v1007
        %1351 = vmatpush1.msra.mxu0 %v1006
        %1352 = vmatprep.subr.mxu0 %v1009
        %1353 = vmatpush1.msra.mxu0 %v1008
        %1354 = vmatprep.subr.mxu0 %v1011
        %1355 = vmatpush1.msra.mxu0 %v1010
        %1356 = vmatprep.subr.mxu0 %v1013
        %1357 = vmatpush1.msra.mxu0 %v1012
        %1358 = vmatprep.subr.mxu0 %v1015
        %1359 = vmatpush1.msra.mxu0 %v1014
        %1360 = vmatprep.subr.mxu0 %v1017
        %1361 = vmatpush1.msra.mxu0 %v1016
        %1362 = vmatprep.subr.mxu0 %v1326
        %1363 = vmatpush1.msra.mxu0 %v1323
        %1364 = vmatprep.subr.mxu0 0.0
        %1365 = vmatpush1.msra.mxu0 0.0
        %1366 = vmatprep.subr.mxu0 0.0
        %1367 = vmatpush1.msra.mxu0 0.0
        %1368 = vmatprep.subr.mxu0 0.0
        %1369 = vmatpush1.msra.mxu0 0.0
        %1370 = vmatprep.subr.mxu0 0.0
        %1371 = vmatpush1.msra.mxu0 0.0
        %1372 = vmatprep.subr.mxu0 0.0
        %1373 = vmatpush1.msra.mxu0 0.0
        %1374 = vmatprep.subr.mxu0 0.0
        %1375 = vmatpush1.msra.mxu0 0.0
        %1376 = vmatprep.subr.mxu0 0.0
        %1377 = vmatpush1.msra.mxu0 0.0
        %1378 = vmatprep.subr.mxu0 0.0
        %1379 = vmatpush1.msra.mxu0 0.0
        %1380 = vmatprep.subr.mxu0 0.0
        %1381 = vmatpush1.msra.mxu0 0.0
        %1382 = vmatprep.subr.mxu0 0.0
        %1383 = vmatpush1.msra.mxu0 0.0
        %1384 = vmatprep.subr.mxu0 0.0
        %1385 = vmatpush1.msra.mxu0 0.0
        %1386 = vmatprep.subr.mxu0 0.0
        %1387 = vmatpush1.msra.mxu0 0.0
        %1388 = vmatprep.subr.mxu0 0.0
        %1389 = vmatpush1.msra.mxu0 0.0
        %1390 = vmatprep.subr.mxu0 0.0
        %1391 = vmatpush1.msra.mxu0 0.0
        %1392 = vmatprep.mubr.f32.mxu0 %v1034
        %1393 = vmatmul.mubr.f32.gmra.mrb[0].mxu0 %v792
        %v1394 = vpop.f32.mrb[0].mxu0
        %v1395 = vadd.f32 %v1025, %v1394
        %v1396 = vpop.f32.mrb[0].mxu0
        %v1397 = vadd.f32 %v1029, %v1396
        %1398 = vmatprep.mubr.f32.mxu0 %v1037
        %1399 = vmatmul.mubr.f32.gmra.mrb[0].mxu0 %v794
        %v1400 = vpop.f32.mrb[0].mxu0
        %v1401 = vadd.f32 %v1025, %v1400
        %v1402 = vpop.f32.mrb[0].mxu0
        %v1403 = vadd.f32 %v1029, %v1402
        %1404 = vmatprep.mubr.f32.mxu0 %v1040
        %1405 = vmatmul.mubr.f32.gmra.mrb[0].mxu0 %v796
        %v1406 = vpop.f32.mrb[0].mxu0
        %v1407 = vadd.f32 %v1025, %v1406
        %v1408 = vpop.f32.mrb[0].mxu0
        %v1409 = vadd.f32 %v1029, %v1408
        %1410 = vmatprep.mubr.f32.mxu0 %v1043
        %1411 = vmatmul.mubr.f32.gmra.mrb[0].mxu0 %v798
        %v1412 = vpop.f32.mrb[0].mxu0
        %v1413 = vadd.f32 %v1025, %v1412
        %v1414 = vpop.f32.mrb[0].mxu0
        %v1415 = vadd.f32 %v1029, %v1414
        %1416 = vmatprep.mubr.f32.mxu0 %v1046
        %1417 = vmatmul.mubr.f32.gmra.mrb[0].mxu0 %v800
        %v1418 = vpop.f32.mrb[0].mxu0
        %v1419 = vadd.f32 %v1025, %v1418
        %v1420 = vpop.f32.mrb[0].mxu0
        %v1421 = vadd.f32 %v1029, %v1420
        %1422 = vmatprep.mubr.f32.mxu0 %v1049
        %1423 = vmatmul.mubr.f32.gmra.mrb[0].mxu0 %v802
        %v1424 = vpop.f32.mrb[0].mxu0
        %v1425 = vadd.f32 %v1025, %v1424
        %v1426 = vpop.f32.mrb[0].mxu0
        %v1427 = vadd.f32 %v1029, %v1426
        %1428 = vmatprep.mubr.f32.mxu0 %v1052
        %1429 = vmatmul.mubr.f32.gmra.mrb[0].mxu0 %v804
        %v1430 = vpop.f32.mrb[0].mxu0
        %v1431 = vadd.f32 %v1025, %v1430
        %v1432 = vpop.f32.mrb[0].mxu0
        %v1433 = vadd.f32 %v1029, %v1432
        %1434 = vmatprep.mubr.f32.mxu0 %v1055
        %1435 = vmatmul.mubr.f32.gmra.mrb[0].mxu0 %v806
        %v1436 = vpop.f32.mrb[0].mxu0
        %v1437 = vadd.f32 %v1025, %v1436
        %v1438 = vpop.f32.mrb[0].mxu0
        %v1439 = vadd.f32 %v1029, %v1438
        %1440 = vmatprep.mubr.f32.mxu0 %v1058
        %1441 = vmatmul.mubr.f32.gmra.mrb[0].mxu0 %v808
        %v1442 = vpop.f32.mrb[0].mxu0
        %v1443 = vadd.f32 %v1025, %v1442
        %v1444 = vpop.f32.mrb[0].mxu0
        %v1445 = vadd.f32 %v1029, %v1444
        %1446 = vmatprep.mubr.f32.mxu0 %v1061
        %1447 = vmatmul.mubr.f32.gmra.mrb[0].mxu0 %v810
        %v1448 = vpop.f32.mrb[0].mxu0
        %v1449 = vadd.f32 %v1025, %v1448
        %v1450 = vpop.f32.mrb[0].mxu0
        %v1451 = vadd.f32 %v1029, %v1450
        %1452 = vmatprep.mubr.f32.mxu0 %v1064
        %1453 = vmatmul.mubr.f32.gmra.mrb[0].mxu0 %v812
        %v1454 = vpop.f32.mrb[0].mxu0
        %v1455 = vadd.f32 %v1025, %v1454
        %v1456 = vpop.f32.mrb[0].mxu0
        %v1457 = vadd.f32 %v1029, %v1456
        %1458 = vmatprep.mubr.f32.mxu0 %v1067
        %1459 = vmatmul.mubr.f32.gmra.mrb[0].mxu0 %v814
        %v1460 = vpop.f32.mrb[0].mxu0
        %v1461 = vadd.f32 %v1025, %v1460
        %v1462 = vpop.f32.mrb[0].mxu0
        %v1463 = vadd.f32 %v1029, %v1462
        %1464 = vmatprep.mubr.f32.mxu0 %v1070
        %1465 = vmatmul.mubr.f32.gmra.mrb[0].mxu0 %v816
        %v1466 = vpop.f32.mrb[0].mxu0
        %v1467 = vadd.f32 %v1025, %v1466
        %v1468 = vpop.f32.mrb[0].mxu0
        %v1469 = vadd.f32 %v1029, %v1468
        %1470 = vmatprep.mubr.f32.mxu0 %v1073
        %1471 = vmatmul.mubr.f32.gmra.mrb[0].mxu0 %v818
        %v1472 = vpop.f32.mrb[0].mxu0
        %v1473 = vadd.f32 %v1025, %v1472
        %v1474 = vpop.f32.mrb[0].mxu0
        %v1475 = vadd.f32 %v1029, %v1474
        %1476 = vmatprep.mubr.f32.mxu0 %v1076
        %1477 = vmatmul.mubr.f32.gmra.mrb[0].mxu0 %v820
        %v1478 = vpop.f32.mrb[0].mxu0
        %v1479 = vadd.f32 %v1025, %v1478
        %v1480 = vpop.f32.mrb[0].mxu0
        %v1481 = vadd.f32 %v1029, %v1480
        %1482 = vmatprep.mubr.f32.mxu0 %v1079
        %1483 = vmatmul.mubr.f32.gmra.mrb[0].mxu0 %v822
        %v1484 = vpop.f32.mrb[0].mxu0
        %v1485 = vadd.f32 %v1025, %v1484
        %v1486 = vpop.f32.mrb[0].mxu0
        %v1487 = vadd.f32 %v1029, %v1486
        %1488 = vmatprep.mubr.f32.mxu0 %v1082
        %1489 = vmatmul.mubr.f32.gmra.mrb[0].mxu0 %v824
        %v1490 = vpop.f32.mrb[0].mxu0
        %v1491 = vadd.f32 %v1025, %v1490
        %v1492 = vpop.f32.mrb[0].mxu0
        %v1493 = vadd.f32 %v1029, %v1492
        %1494 = vmatprep.mubr.f32.mxu0 %v1085
        %1495 = vmatmul.mubr.f32.gmra.mrb[0].mxu0 %v826
        %v1496 = vpop.f32.mrb[0].mxu0
        %v1497 = vadd.f32 %v1025, %v1496
        %v1498 = vpop.f32.mrb[0].mxu0
        %v1499 = vadd.f32 %v1029, %v1498
        %1500 = vmatprep.mubr.f32.mxu0 %v1088
        %1501 = vmatmul.mubr.f32.gmra.mrb[0].mxu0 %v828
        %v1502 = vpop.f32.mrb[0].mxu0
        %v1503 = vadd.f32 %v1025, %v1502
        %v1504 = vpop.f32.mrb[0].mxu0
        %v1505 = vadd.f32 %v1029, %v1504
        %1506 = vmatprep.mubr.f32.mxu0 %v1091
        %1507 = vmatmul.mubr.f32.gmra.mrb[0].mxu0 %v830
        %v1508 = vpop.f32.mrb[0].mxu0
        %v1509 = vadd.f32 %v1025, %v1508
        %v1510 = vpop.f32.mrb[0].mxu0
        %v1511 = vadd.f32 %v1029, %v1510
        %1512 = vmatprep.mubr.f32.mxu0 %v1094
        %1513 = vmatmul.mubr.f32.gmra.mrb[0].mxu0 %v832
        %v1514 = vpop.f32.mrb[0].mxu0
        %v1515 = vadd.f32 %v1025, %v1514
        %v1516 = vpop.f32.mrb[0].mxu0
        %v1517 = vadd.f32 %v1029, %v1516
        %1518 = vmatprep.mubr.f32.mxu0 %v1097
        %1519 = vmatmul.mubr.f32.gmra.mrb[0].mxu0 %v834
        %v1520 = vpop.f32.mrb[0].mxu0
        %v1521 = vadd.f32 %v1025, %v1520
        %v1522 = vpop.f32.mrb[0].mxu0
        %v1523 = vadd.f32 %v1029, %v1522
        %1524 = vmatprep.mubr.f32.mxu0 %v1100
        %1525 = vmatmul.mubr.f32.gmra.mrb[0].mxu0 %v836
        %v1526 = vpop.f32.mrb[0].mxu0
        %v1527 = vadd.f32 %v1025, %v1526
        %v1528 = vpop.f32.mrb[0].mxu0
        %v1529 = vadd.f32 %v1029, %v1528
        %1530 = vmatprep.mubr.f32.mxu0 %v1103
        %1531 = vmatmul.mubr.f32.gmra.mrb[0].mxu0 %v838
        %v1532 = vpop.f32.mrb[0].mxu0
        %v1533 = vadd.f32 %v1025, %v1532
        %v1534 = vpop.f32.mrb[0].mxu0
        %v1535 = vadd.f32 %v1029, %v1534
        %1536 = vmatprep.mubr.f32.mxu0 %v1106
        %1537 = vmatmul.mubr.f32.gmra.mrb[0].mxu0 %v840
        %v1538 = vpop.f32.mrb[0].mxu0
        %v1539 = vadd.f32 %v1025, %v1538
        %v1540 = vpop.f32.mrb[0].mxu0
        %v1541 = vadd.f32 %v1029, %v1540
        %1542 = vmatprep.mubr.f32.mxu0 %v1109
        %1543 = vmatmul.mubr.f32.gmra.mrb[0].mxu0 %v842
        %v1544 = vpop.f32.mrb[0].mxu0
        %v1545 = vadd.f32 %v1025, %v1544
        %v1546 = vpop.f32.mrb[0].mxu0
        %v1547 = vadd.f32 %v1029, %v1546
        %1548 = vmatprep.mubr.f32.mxu0 %v1112
        %1549 = vmatmul.mubr.f32.gmra.mrb[0].mxu0 %v844
        %v1550 = vpop.f32.mrb[0].mxu0
        %v1551 = vadd.f32 %v1025, %v1550
        %v1552 = vpop.f32.mrb[0].mxu0
        %v1553 = vadd.f32 %v1029, %v1552
        %1554 = vmatprep.mubr.f32.mxu0 %v1115
        %1555 = vmatmul.mubr.f32.gmra.mrb[0].mxu0 %v846
        %v1556 = vpop.f32.mrb[0].mxu0
        %v1557 = vadd.f32 %v1025, %v1556
        %v1558 = vpop.f32.mrb[0].mxu0
        %v1559 = vadd.f32 %v1029, %v1558
        %1560 = vmatprep.mubr.f32.mxu0 %v1118
        %1561 = vmatmul.mubr.f32.gmra.mrb[0].mxu0 %v848
        %v1562 = vpop.f32.mrb[0].mxu0
        %v1563 = vadd.f32 %v1025, %v1562
        %v1564 = vpop.f32.mrb[0].mxu0
        %v1565 = vadd.f32 %v1029, %v1564
        %1566 = vmatprep.mubr.f32.mxu0 %v1121
        %1567 = vmatmul.mubr.f32.gmra.mrb[0].mxu0 %v850
        %v1568 = vpop.f32.mrb[0].mxu0
        %v1569 = vadd.f32 %v1025, %v1568
        %v1570 = vpop.f32.mrb[0].mxu0
        %v1571 = vadd.f32 %v1029, %v1570
        %1572 = vmatprep.mubr.f32.mxu0 %v1124
        %1573 = vmatmul.mubr.f32.gmra.mrb[0].mxu0 %v852
        %v1574 = vpop.f32.mrb[0].mxu0
        %v1575 = vadd.f32 %v1025, %v1574
        %v1576 = vpop.f32.mrb[0].mxu0
        %v1577 = vadd.f32 %v1029, %v1576
        %1578 = vmatprep.mubr.f32.mxu0 %v1127
        %1579 = vmatmul.mubr.f32.gmra.mrb[0].mxu0 %v854
        %v1580 = vpop.f32.mrb[0].mxu0
        %v1581 = vadd.f32 %v1025, %v1580
        %v1582 = vpop.f32.mrb[0].mxu0
        %v1583 = vadd.f32 %v1029, %v1582
        %1584 = vmatprep.mubr.f32.mxu0 %v1130
        %1585 = vmatmul.mubr.f32.gmra.mrb[0].mxu0 %v856
        %v1586 = vpop.f32.mrb[0].mxu0
        %v1587 = vadd.f32 %v1025, %v1586
        %v1588 = vpop.f32.mrb[0].mxu0
        %v1589 = vadd.f32 %v1029, %v1588
        %1590 = vmatprep.mubr.f32.mxu0 %v1133
        %1591 = vmatmul.mubr.f32.gmra.mrb[0].mxu0 %v858
        %v1592 = vpop.f32.mrb[0].mxu0
        %v1593 = vadd.f32 %v1025, %v1592
        %v1594 = vpop.f32.mrb[0].mxu0
        %v1595 = vadd.f32 %v1029, %v1594
        %1596 = vmatprep.mubr.f32.mxu0 %v1136
        %1597 = vmatmul.mubr.f32.gmra.mrb[0].mxu0 %v860
        %v1598 = vpop.f32.mrb[0].mxu0
        %v1599 = vadd.f32 %v1025, %v1598
        %v1600 = vpop.f32.mrb[0].mxu0
        %v1601 = vadd.f32 %v1029, %v1600
        %1602 = vmatprep.mubr.f32.mxu0 %v1139
        %1603 = vmatmul.mubr.f32.gmra.mrb[0].mxu0 %v862
        %v1604 = vpop.f32.mrb[0].mxu0
        %v1605 = vadd.f32 %v1025, %v1604
        %v1606 = vpop.f32.mrb[0].mxu0
        %v1607 = vadd.f32 %v1029, %v1606
        %1608 = vmatprep.mubr.f32.mxu0 %v1142
        %1609 = vmatmul.mubr.f32.gmra.mrb[0].mxu0 %v864
        %v1610 = vpop.f32.mrb[0].mxu0
        %v1611 = vadd.f32 %v1025, %v1610
        %v1612 = vpop.f32.mrb[0].mxu0
        %v1613 = vadd.f32 %v1029, %v1612
        %1614 = vmatprep.mubr.f32.mxu0 %v1145
        %1615 = vmatmul.mubr.f32.gmra.mrb[0].mxu0 %v866
        %v1616 = vpop.f32.mrb[0].mxu0
        %v1617 = vadd.f32 %v1025, %v1616
        %v1618 = vpop.f32.mrb[0].mxu0
        %v1619 = vadd.f32 %v1029, %v1618
        %1620 = vmatprep.mubr.f32.mxu0 %v1148
        %1621 = vmatmul.mubr.f32.gmra.mrb[0].mxu0 %v868
        %v1622 = vpop.f32.mrb[0].mxu0
        %v1623 = vadd.f32 %v1025, %v1622
        %v1624 = vpop.f32.mrb[0].mxu0
        %v1625 = vadd.f32 %v1029, %v1624
        %1626 = vmatprep.mubr.f32.mxu0 %v1151
        %1627 = vmatmul.mubr.f32.gmra.mrb[0].mxu0 %v870
        %v1628 = vpop.f32.mrb[0].mxu0
        %v1629 = vadd.f32 %v1025, %v1628
        %v1630 = vpop.f32.mrb[0].mxu0
        %v1631 = vadd.f32 %v1029, %v1630
        %1632 = vmatprep.mubr.f32.mxu0 %v1154
        %1633 = vmatmul.mubr.f32.gmra.mrb[0].mxu0 %v872
        %v1634 = vpop.f32.mrb[0].mxu0
        %v1635 = vadd.f32 %v1025, %v1634
        %v1636 = vpop.f32.mrb[0].mxu0
        %v1637 = vadd.f32 %v1029, %v1636
        %1638 = vmatprep.mubr.f32.mxu0 %v1157
        %1639 = vmatmul.mubr.f32.gmra.mrb[0].mxu0 %v874
        %v1640 = vpop.f32.mrb[0].mxu0
        %v1641 = vadd.f32 %v1025, %v1640
        %v1642 = vpop.f32.mrb[0].mxu0
        %v1643 = vadd.f32 %v1029, %v1642
        %1644 = vmatprep.mubr.f32.mxu0 %v1160
        %1645 = vmatmul.mubr.f32.gmra.mrb[0].mxu0 %v876
        %v1646 = vpop.f32.mrb[0].mxu0
        %v1647 = vadd.f32 %v1025, %v1646
        %v1648 = vpop.f32.mrb[0].mxu0
        %v1649 = vadd.f32 %v1029, %v1648
        %1650 = vmatprep.mubr.f32.mxu0 %v1163
        %1651 = vmatmul.mubr.f32.gmra.mrb[0].mxu0 %v878
        %v1652 = vpop.f32.mrb[0].mxu0
        %v1653 = vadd.f32 %v1025, %v1652
        %v1654 = vpop.f32.mrb[0].mxu0
        %v1655 = vadd.f32 %v1029, %v1654
        %1656 = vmatprep.mubr.f32.mxu0 %v1166
        %1657 = vmatmul.mubr.f32.gmra.mrb[0].mxu0 %v880
        %v1658 = vpop.f32.mrb[0].mxu0
        %v1659 = vadd.f32 %v1025, %v1658
        %v1660 = vpop.f32.mrb[0].mxu0
        %v1661 = vadd.f32 %v1029, %v1660
        %1662 = vmatprep.mubr.f32.mxu0 %v1169
        %1663 = vmatmul.mubr.f32.gmra.mrb[0].mxu0 %v882
        %v1664 = vpop.f32.mrb[0].mxu0
        %v1665 = vadd.f32 %v1025, %v1664
        %v1666 = vpop.f32.mrb[0].mxu0
        %v1667 = vadd.f32 %v1029, %v1666
        %1668 = vmatprep.mubr.f32.mxu0 %v1172
        %1669 = vmatmul.mubr.f32.gmra.mrb[0].mxu0 %v884
        %v1670 = vpop.f32.mrb[0].mxu0
        %v1671 = vadd.f32 %v1025, %v1670
        %v1672 = vpop.f32.mrb[0].mxu0
        %v1673 = vadd.f32 %v1029, %v1672
        %1674 = vmatprep.mubr.f32.mxu0 %v1175
        %1675 = vmatmul.mubr.f32.gmra.mrb[0].mxu0 %v886
        %v1676 = vpop.f32.mrb[0].mxu0
        %v1677 = vadd.f32 %v1025, %v1676
        %v1678 = vpop.f32.mrb[0].mxu0
        %v1679 = vadd.f32 %v1029, %v1678
        %1680 = vmatprep.mubr.f32.mxu0 %v1178
        %1681 = vmatmul.mubr.f32.gmra.mrb[0].mxu0 %v888
        %v1682 = vpop.f32.mrb[0].mxu0
        %v1683 = vadd.f32 %v1025, %v1682
        %v1684 = vpop.f32.mrb[0].mxu0
        %v1685 = vadd.f32 %v1029, %v1684
        %1686 = vmatprep.mubr.f32.mxu0 %v1181
        %1687 = vmatmul.mubr.f32.gmra.mrb[0].mxu0 %v890
        %v1688 = vpop.f32.mrb[0].mxu0
        %v1689 = vadd.f32 %v1025, %v1688
        %v1690 = vpop.f32.mrb[0].mxu0
        %v1691 = vadd.f32 %v1029, %v1690
        %1692 = vmatprep.mubr.f32.mxu0 %v1184
        %1693 = vmatmul.mubr.f32.gmra.mrb[0].mxu0 %v892
        %v1694 = vpop.f32.mrb[0].mxu0
        %v1695 = vadd.f32 %v1025, %v1694
        %v1696 = vpop.f32.mrb[0].mxu0
        %v1697 = vadd.f32 %v1029, %v1696
        %1698 = vmatprep.mubr.f32.mxu0 %v1187
        %1699 = vmatmul.mubr.f32.gmra.mrb[0].mxu0 %v894
        %v1700 = vpop.f32.mrb[0].mxu0
        %v1701 = vadd.f32 %v1025, %v1700
        %v1702 = vpop.f32.mrb[0].mxu0
        %v1703 = vadd.f32 %v1029, %v1702
        %1704 = vmatprep.mubr.f32.mxu0 %v1190
        %1705 = vmatmul.mubr.f32.gmra.mrb[0].mxu0 %v896
        %v1706 = vpop.f32.mrb[0].mxu0
        %v1707 = vadd.f32 %v1025, %v1706
        %v1708 = vpop.f32.mrb[0].mxu0
        %v1709 = vadd.f32 %v1029, %v1708
        %1710 = vmatprep.mubr.f32.mxu0 %v1193
        %1711 = vmatmul.mubr.f32.gmra.mrb[0].mxu0 %v898
        %v1712 = vpop.f32.mrb[0].mxu0
        %v1713 = vadd.f32 %v1025, %v1712
        %v1714 = vpop.f32.mrb[0].mxu0
        %v1715 = vadd.f32 %v1029, %v1714
        %1716 = vmatprep.mubr.f32.mxu0 %v1196
        %1717 = vmatmul.mubr.f32.gmra.mrb[0].mxu0 %v900
        %v1718 = vpop.f32.mrb[0].mxu0
        %v1719 = vadd.f32 %v1025, %v1718
        %v1720 = vpop.f32.mrb[0].mxu0
        %v1721 = vadd.f32 %v1029, %v1720
        %1722 = vmatprep.mubr.f32.mxu0 %v1199
        %1723 = vmatmul.mubr.f32.gmra.mrb[0].mxu0 %v902
        %v1724 = vpop.f32.mrb[0].mxu0
        %v1725 = vadd.f32 %v1025, %v1724
        %v1726 = vpop.f32.mrb[0].mxu0
        %v1727 = vadd.f32 %v1029, %v1726
        %1728 = vmatprep.mubr.f32.mxu0 %v1202
        %1729 = vmatmul.mubr.f32.gmra.mrb[0].mxu0 %v904
        %v1730 = vpop.f32.mrb[0].mxu0
        %v1731 = vadd.f32 %v1025, %v1730
        %v1732 = vpop.f32.mrb[0].mxu0
        %v1733 = vadd.f32 %v1029, %v1732
        %1734 = vmatprep.mubr.f32.mxu0 %v1205
        %1735 = vmatmul.mubr.f32.gmra.mrb[0].mxu0 %v906
        %v1736 = vpop.f32.mrb[0].mxu0
        %v1737 = vadd.f32 %v1025, %v1736
        %v1738 = vpop.f32.mrb[0].mxu0
        %v1739 = vadd.f32 %v1029, %v1738
        %1740 = vmatprep.mubr.f32.mxu0 %v1208
        %1741 = vmatmul.mubr.f32.gmra.mrb[0].mxu0 %v908
        %v1742 = vpop.f32.mrb[0].mxu0
        %v1743 = vadd.f32 %v1025, %v1742
        %v1744 = vpop.f32.mrb[0].mxu0
        %v1745 = vadd.f32 %v1029, %v1744
        %1746 = vmatprep.mubr.f32.mxu0 %v1211
        %1747 = vmatmul.mubr.f32.gmra.mrb[0].mxu0 %v910
        %v1748 = vpop.f32.mrb[0].mxu0
        %v1749 = vadd.f32 %v1025, %v1748
        %v1750 = vpop.f32.mrb[0].mxu0
        %v1751 = vadd.f32 %v1029, %v1750
        %1752 = vmatprep.mubr.f32.mxu0 %v1214
        %1753 = vmatmul.mubr.f32.gmra.mrb[0].mxu0 %v912
        %v1754 = vpop.f32.mrb[0].mxu0
        %v1755 = vadd.f32 %v1025, %v1754
        %v1756 = vpop.f32.mrb[0].mxu0
        %v1757 = vadd.f32 %v1029, %v1756
        %1758 = vmatprep.mubr.f32.mxu0 %v1217
        %1759 = vmatmul.mubr.f32.gmra.mrb[0].mxu0 %v914
        %v1760 = vpop.f32.mrb[0].mxu0
        %v1761 = vadd.f32 %v1025, %v1760
        %v1762 = vpop.f32.mrb[0].mxu0
        %v1763 = vadd.f32 %v1029, %v1762
        %1764 = vmatprep.mubr.f32.mxu0 %v1220
        %1765 = vmatmul.mubr.f32.gmra.mrb[0].mxu0 %v916
        %v1766 = vpop.f32.mrb[0].mxu0
        %v1767 = vadd.f32 %v1025, %v1766
        %v1768 = vpop.f32.mrb[0].mxu0
        %v1769 = vadd.f32 %v1029, %v1768
        %1770 = vmatprep.mubr.f32.mxu0 %v1223
        %1771 = vmatmul.mubr.f32.gmra.mrb[0].mxu0 %v918
        %v1772 = vpop.f32.mrb[0].mxu0
        %v1773 = vadd.f32 %v1025, %v1772
        %v1774 = vpop.f32.mrb[0].mxu0
        %v1775 = vadd.f32 %v1029, %v1774
        %1776 = vmatprep.mubr.f32.mxu0 %v1226
        %1777 = vmatmul.mubr.f32.gmra.mrb[0].mxu0 %v920
        %v1778 = vpop.f32.mrb[0].mxu0
        %v1779 = vadd.f32 %v1025, %v1778
        %v1780 = vpop.f32.mrb[0].mxu0
        %v1781 = vadd.f32 %v1029, %v1780
        %1782 = vmatprep.mubr.f32.mxu0 %v1229
        %1783 = vmatmul.mubr.f32.gmra.mrb[0].mxu0 %v922
        %v1784 = vpop.f32.mrb[0].mxu0
        %v1785 = vadd.f32 %v1025, %v1784
        %v1786 = vpop.f32.mrb[0].mxu0
        %v1787 = vadd.f32 %v1029, %v1786
        %1788 = vmatprep.mubr.f32.mxu0 %v1232
        %1789 = vmatmul.mubr.f32.gmra.mrb[0].mxu0 %v924
        %v1790 = vpop.f32.mrb[0].mxu0
        %v1791 = vadd.f32 %v1025, %v1790
        %v1792 = vpop.f32.mrb[0].mxu0
        %v1793 = vadd.f32 %v1029, %v1792
        %1794 = vmatprep.mubr.f32.mxu0 %v1235
        %1795 = vmatmul.mubr.f32.gmra.mrb[0].mxu0 %v926
        %v1796 = vpop.f32.mrb[0].mxu0
        %v1797 = vadd.f32 %v1025, %v1796
        %v1798 = vpop.f32.mrb[0].mxu0
        %v1799 = vadd.f32 %v1029, %v1798
        %1800 = vmatprep.mubr.f32.mxu0 %v1238
        %1801 = vmatmul.mubr.f32.gmra.mrb[0].mxu0 %v928
        %v1802 = vpop.f32.mrb[0].mxu0
        %v1803 = vadd.f32 %v1025, %v1802
        %v1804 = vpop.f32.mrb[0].mxu0
        %v1805 = vadd.f32 %v1029, %v1804
        %1806 = vmatprep.mubr.f32.mxu0 %v1241
        %1807 = vmatmul.mubr.f32.gmra.mrb[0].mxu0 %v930
        %v1808 = vpop.f32.mrb[0].mxu0
        %v1809 = vadd.f32 %v1025, %v1808
        %v1810 = vpop.f32.mrb[0].mxu0
        %v1811 = vadd.f32 %v1029, %v1810
        %1812 = vmatprep.mubr.f32.mxu0 %v1244
        %1813 = vmatmul.mubr.f32.gmra.mrb[0].mxu0 %v932
        %v1814 = vpop.f32.mrb[0].mxu0
        %v1815 = vadd.f32 %v1025, %v1814
        %v1816 = vpop.f32.mrb[0].mxu0
        %v1817 = vadd.f32 %v1029, %v1816
        %1818 = vmatprep.mubr.f32.mxu0 %v1247
        %1819 = vmatmul.mubr.f32.gmra.mrb[0].mxu0 %v934
        %v1820 = vpop.f32.mrb[0].mxu0
        %v1821 = vadd.f32 %v1025, %v1820
        %v1822 = vpop.f32.mrb[0].mxu0
        %v1823 = vadd.f32 %v1029, %v1822
        %1824 = vmatprep.mubr.f32.mxu0 %v1250
        %1825 = vmatmul.mubr.f32.gmra.mrb[0].mxu0 %v936
        %v1826 = vpop.f32.mrb[0].mxu0
        %v1827 = vadd.f32 %v1025, %v1826
        %v1828 = vpop.f32.mrb[0].mxu0
        %v1829 = vadd.f32 %v1029, %v1828
        %1830 = vmatprep.mubr.f32.mxu0 %v1253
        %1831 = vmatmul.mubr.f32.gmra.mrb[0].mxu0 %v938
        %v1832 = vpop.f32.mrb[0].mxu0
        %v1833 = vadd.f32 %v1025, %v1832
        %v1834 = vpop.f32.mrb[0].mxu0
        %v1835 = vadd.f32 %v1029, %v1834
        %1836 = vmatprep.mubr.f32.mxu0 %v1256
        %1837 = vmatmul.mubr.f32.gmra.mrb[0].mxu0 %v940
        %v1838 = vpop.f32.mrb[0].mxu0
        %v1839 = vadd.f32 %v1025, %v1838
        %v1840 = vpop.f32.mrb[0].mxu0
        %v1841 = vadd.f32 %v1029, %v1840
        %1842 = vmatprep.mubr.f32.mxu0 %v1259
        %1843 = vmatmul.mubr.f32.gmra.mrb[0].mxu0 %v942
        %v1844 = vpop.f32.mrb[0].mxu0
        %v1845 = vadd.f32 %v1025, %v1844
        %v1846 = vpop.f32.mrb[0].mxu0
        %v1847 = vadd.f32 %v1029, %v1846
        %1848 = vmatprep.mubr.f32.mxu0 %v1262
        %1849 = vmatmul.mubr.f32.gmra.mrb[0].mxu0 %v944
        %v1850 = vpop.f32.mrb[0].mxu0
        %v1851 = vadd.f32 %v1025, %v1850
        %v1852 = vpop.f32.mrb[0].mxu0
        %v1853 = vadd.f32 %v1029, %v1852
        %1854 = vmatprep.mubr.f32.mxu0 %v1265
        %1855 = vmatmul.mubr.f32.gmra.mrb[0].mxu0 %v946
        %v1856 = vpop.f32.mrb[0].mxu0
        %v1857 = vadd.f32 %v1025, %v1856
        %v1858 = vpop.f32.mrb[0].mxu0
        %v1859 = vadd.f32 %v1029, %v1858
        %1860 = vmatprep.mubr.f32.mxu0 %v1268
        %1861 = vmatmul.mubr.f32.gmra.mrb[0].mxu0 %v948
        %v1862 = vpop.f32.mrb[0].mxu0
        %v1863 = vadd.f32 %v1025, %v1862
        %v1864 = vpop.f32.mrb[0].mxu0
        %v1865 = vadd.f32 %v1029, %v1864
        %1866 = vmatprep.mubr.f32.mxu0 %v1271
        %1867 = vmatmul.mubr.f32.gmra.mrb[0].mxu0 %v950
        %v1868 = vpop.f32.mrb[0].mxu0
        %v1869 = vadd.f32 %v1025, %v1868
        %v1870 = vpop.f32.mrb[0].mxu0
        %v1871 = vadd.f32 %v1029, %v1870
        %1872 = vmatprep.mubr.f32.mxu0 %v1274
        %1873 = vmatmul.mubr.f32.gmra.mrb[0].mxu0 %v952
        %v1874 = vpop.f32.mrb[0].mxu0
        %v1875 = vadd.f32 %v1025, %v1874
        %v1876 = vpop.f32.mrb[0].mxu0
        %v1877 = vadd.f32 %v1029, %v1876
        %1878 = vmatprep.mubr.f32.mxu0 %v1277
        %1879 = vmatmul.mubr.f32.gmra.mrb[0].mxu0 %v954
        %v1880 = vpop.f32.mrb[0].mxu0
        %v1881 = vadd.f32 %v1025, %v1880
        %v1882 = vpop.f32.mrb[0].mxu0
        %v1883 = vadd.f32 %v1029, %v1882
        %1884 = vmatprep.mubr.f32.mxu0 %v1280
        %1885 = vmatmul.mubr.f32.gmra.mrb[0].mxu0 %v956
        %v1886 = vpop.f32.mrb[0].mxu0
        %v1887 = vadd.f32 %v1025, %v1886
        %v1888 = vpop.f32.mrb[0].mxu0
        %v1889 = vadd.f32 %v1029, %v1888
        %1890 = vmatprep.mubr.f32.mxu0 %v1283
        %1891 = vmatmul.mubr.f32.gmra.mrb[0].mxu0 %v958
        %v1892 = vpop.f32.mrb[0].mxu0
        %v1893 = vadd.f32 %v1025, %v1892
        %v1894 = vpop.f32.mrb[0].mxu0
        %v1895 = vadd.f32 %v1029, %v1894
        %1896 = vmatprep.mubr.f32.mxu0 %v1286
        %1897 = vmatmul.mubr.f32.gmra.mrb[0].mxu0 %v960
        %v1898 = vpop.f32.mrb[0].mxu0
        %v1899 = vadd.f32 %v1025, %v1898
        %v1900 = vpop.f32.mrb[0].mxu0
        %v1901 = vadd.f32 %v1029, %v1900
        %1902 = vmatprep.mubr.f32.mxu0 %v1289
        %1903 = vmatmul.mubr.f32.gmra.mrb[0].mxu0 %v962
        %v1904 = vpop.f32.mrb[0].mxu0
        %v1905 = vadd.f32 %v1025, %v1904
        %v1906 = vpop.f32.mrb[0].mxu0
        %v1907 = vadd.f32 %v1029, %v1906
        %1908 = vmatprep.mubr.f32.mxu0 %v1292
        %1909 = vmatmul.mubr.f32.gmra.mrb[0].mxu0 %v964
        %v1910 = vpop.f32.mrb[0].mxu0
        %v1911 = vadd.f32 %v1025, %v1910
        %v1912 = vpop.f32.mrb[0].mxu0
        %v1913 = vadd.f32 %v1029, %v1912
        %1914 = vmatprep.mubr.f32.mxu0 %v1295
        %1915 = vmatmul.mubr.f32.gmra.mrb[0].mxu0 %v966
        %v1916 = vpop.f32.mrb[0].mxu0
        %v1917 = vadd.f32 %v1025, %v1916
        %v1918 = vpop.f32.mrb[0].mxu0
        %v1919 = vadd.f32 %v1029, %v1918
        %1920 = vmatprep.mubr.f32.mxu0 %v1298
        %1921 = vmatmul.mubr.f32.gmra.mrb[0].mxu0 %v968
        %v1922 = vpop.f32.mrb[0].mxu0
        %v1923 = vadd.f32 %v1025, %v1922
        %v1924 = vpop.f32.mrb[0].mxu0
        %v1925 = vadd.f32 %v1029, %v1924
        %1926 = vmatprep.mubr.f32.mxu0 %v1301
        %1927 = vmatmul.mubr.f32.gmra.mrb[0].mxu0 %v970
        %v1928 = vpop.f32.mrb[0].mxu0
        %v1929 = vadd.f32 %v1025, %v1928
        %v1930 = vpop.f32.mrb[0].mxu0
        %v1931 = vadd.f32 %v1029, %v1930
        %1932 = vmatprep.mubr.f32.mxu0 %v1304
        %1933 = vmatmul.mubr.f32.gmra.mrb[0].mxu0 %v972
        %v1934 = vpop.f32.mrb[0].mxu0
        %v1935 = vadd.f32 %v1025, %v1934
        %v1936 = vpop.f32.mrb[0].mxu0
        %v1937 = vadd.f32 %v1029, %v1936
        %1938 = vmatprep.mubr.f32.mxu0 %v1307
        %1939 = vmatmul.mubr.f32.gmra.mrb[0].mxu0 %v974
        %v1940 = vpop.f32.mrb[0].mxu0
        %v1941 = vadd.f32 %v1025, %v1940
        %v1942 = vpop.f32.mrb[0].mxu0
        %v1943 = vadd.f32 %v1029, %v1942
        %1944 = vmatprep.mubr.f32.mxu0 %v1310
        %1945 = vmatmul.mubr.f32.gmra.mrb[0].mxu0 %v976
        %v1946 = vpop.f32.mrb[0].mxu0
        %v1947 = vadd.f32 %v1025, %v1946
        %v1948 = vpop.f32.mrb[0].mxu0
        %v1949 = vadd.f32 %v1029, %v1948
        %1950 = vmatprep.mubr.f32.mxu0 %v1313
        %1951 = vmatmul.mubr.f32.gmra.mrb[0].mxu0 %v978
        %v1952 = vpop.f32.mrb[0].mxu0
        %v1953 = vadd.f32 %v1025, %v1952
        %v1954 = vpop.f32.mrb[0].mxu0
        %v1955 = vadd.f32 %v1029, %v1954
        %1956 = vmatprep.mubr.f32.mxu0 %v1316
        %1957 = vmatmul.mubr.f32.gmra.mrb[0].mxu0 %v980
        %v1958 = vpop.f32.mrb[0].mxu0
        %v1959 = vadd.f32 %v1025, %v1958
        %v1960 = vpop.f32.mrb[0].mxu0
        %v1961 = vadd.f32 %v1029, %v1960
        %1962 = vmatprep.mubr.f32.mxu0 %v1319
        %1963 = vmatmul.mubr.f32.gmra.mrb[0].mxu0 %v982
        %v1964 = vpop.f32.mrb[0].mxu0
        %v1965 = vadd.f32 %v1025, %v1964
        %v1966 = vpop.f32.mrb[0].mxu0
        %v1967 = vadd.f32 %v1029, %v1966
        %1968 = vdwg.mxu0
        %v1969 = vmax.f32 %v1395, %v1419
        %v1970 = vmax.f32 %v1397, %v1421
        %v1971 = vmax.f32 %v1401, %v1425
        %v1972 = vmax.f32 %v1403, %v1427
        %v1973 = vmax.f32 %v1407, %v1431
        %v1974 = vmax.f32 %v1409, %v1433
        %v1975 = vmax.f32 %v1413, %v1437
        %v1976 = vmax.f32 %v1415, %v1439
        %v1977 = vmax.f32 %v1443, %v1467
        %v1978 = vmax.f32 %v1445, %v1469
        %v1979 = vmax.f32 %v1449, %v1473
        %v1980 = vmax.f32 %v1451, %v1475
        %v1981 = vmax.f32 %v1455, %v1479
        %v1982 = vmax.f32 %v1457, %v1481
        %v1983 = vmax.f32 %v1461, %v1485
        %v1984 = vmax.f32 %v1463, %v1487
        %v1985 = vmax.f32 %v1491, %v1515
        %v1986 = vmax.f32 %v1493, %v1517
        %v1987 = vmax.f32 %v1497, %v1521
        %v1988 = vmax.f32 %v1499, %v1523
        %v1989 = vmax.f32 %v1503, %v1527
        %v1990 = vmax.f32 %v1505, %v1529
        %v1991 = vmax.f32 %v1509, %v1533
        %v1992 = vmax.f32 %v1511, %v1535
        %v1993 = vmax.f32 %v1539, %v1563
        %v1994 = vmax.f32 %v1541, %v1565
        %v1995 = vmax.f32 %v1545, %v1569
        %v1996 = vmax.f32 %v1547, %v1571
        %v1997 = vmax.f32 %v1551, %v1575
        %v1998 = vmax.f32 %v1553, %v1577
        %v1999 = vmax.f32 %v1557, %v1581
        %v2000 = vmax.f32 %v1559, %v1583
        %v2001 = vmax.f32 %v1587, %v1611
        %v2002 = vmax.f32 %v1589, %v1613
        %v2003 = vmax.f32 %v1593, %v1617
        %v2004 = vmax.f32 %v1595, %v1619
        %v2005 = vmax.f32 %v1599, %v1623
        %v2006 = vmax.f32 %v1601, %v1625
        %v2007 = vmax.f32 %v1605, %v1629
        %v2008 = vmax.f32 %v1607, %v1631
        %v2009 = vmax.f32 %v1635, %v1659
        %v2010 = vmax.f32 %v1637, %v1661
        %v2011 = vmax.f32 %v1641, %v1665
        %v2012 = vmax.f32 %v1643, %v1667
        %v2013 = vmax.f32 %v1647, %v1671
        %v2014 = vmax.f32 %v1649, %v1673
        %v2015 = vmax.f32 %v1653, %v1677
        %v2016 = vmax.f32 %v1655, %v1679
        %v2017 = vmax.f32 %v1683, %v1707
        %v2018 = vmax.f32 %v1685, %v1709
        %v2019 = vmax.f32 %v1689, %v1713
        %v2020 = vmax.f32 %v1691, %v1715
        %v2021 = vmax.f32 %v1695, %v1719
        %v2022 = vmax.f32 %v1697, %v1721
        %v2023 = vmax.f32 %v1701, %v1725
        %v2024 = vmax.f32 %v1703, %v1727
        %v2025 = vmax.f32 %v1731, %v1755
        %v2026 = vmax.f32 %v1733, %v1757
        %v2027 = vmax.f32 %v1737, %v1761
        %v2028 = vmax.f32 %v1739, %v1763
        %v2029 = vmax.f32 %v1743, %v1767
        %v2030 = vmax.f32 %v1745, %v1769
        %v2031 = vmax.f32 %v1749, %v1773
        %v2032 = vmax.f32 %v1751, %v1775
        %v2033 = vmax.f32 %v1779, %v1803
        %v2034 = vmax.f32 %v1781, %v1805
        %v2035 = vmax.f32 %v1785, %v1809
        %v2036 = vmax.f32 %v1787, %v1811
        %v2037 = vmax.f32 %v1791, %v1815
        %v2038 = vmax.f32 %v1793, %v1817
        %v2039 = vmax.f32 %v1797, %v1821
        %v2040 = vmax.f32 %v1799, %v1823
        %v2041 = vmax.f32 %v1827, %v1851
        %v2042 = vmax.f32 %v1829, %v1853
        %v2043 = vmax.f32 %v1833, %v1857
        %v2044 = vmax.f32 %v1835, %v1859
        %v2045 = vmax.f32 %v1839, %v1863
        %v2046 = vmax.f32 %v1841, %v1865
        %v2047 = vmax.f32 %v1845, %v1869
        %v2048 = vmax.f32 %v1847, %v1871
        %v2049 = vmax.f32 %v1875, %v1899
        %v2050 = vmax.f32 %v1877, %v1901
        %v2051 = vmax.f32 %v1881, %v1905
        %v2052 = vmax.f32 %v1883, %v1907
        %v2053 = vmax.f32 %v1887, %v1911
        %v2054 = vmax.f32 %v1889, %v1913
        %v2055 = vmax.f32 %v1893, %v1917
        %v2056 = vmax.f32 %v1895, %v1919
        %v2057 = vmax.f32 %v1923, %v1947
        %v2058 = vmax.f32 %v1925, %v1949
        %v2059 = vmax.f32 %v1929, %v1953
        %v2060 = vmax.f32 %v1931, %v1955
        %v2061 = vmax.f32 %v1935, %v1959
        %v2062 = vmax.f32 %v1937, %v1961
        %v2063 = vmax.f32 %v1941, %v1965
        %v2064 = vmax.f32 %v1943, %v1967
        %v2065 = vld [vmem:[%s3] sm:$0xff]
        %v2066 = vld [vmem:[%s3 + $0x8] sm:$0xff]
        %v2067 = vld [vmem:[%s3 + $0x10] sm:$0xff]
        %v2068 = vld [vmem:[%s3 + $0x18] sm:$0xff]
        %v2069 = vld [vmem:[%s3 + $0x20] sm:$0xff]
        %v2070 = vld [vmem:[%s3 + $0x28] sm:$0xff]
        %v2071 = vld [vmem:[%s3 + $0x30] sm:$0xff]
        %v2072 = vld [vmem:[%s3 + $0x38] sm:$0xff]
        %v2073 = vld [vmem:[%s3 + $0x40] sm:$0xff]
        %v2074 = vld [vmem:[%s3 + $0x48] sm:$0xff]
        %v2075 = vld [vmem:[%s3 + $0x50] sm:$0xff]
        %v2076 = vld [vmem:[%s3 + $0x58] sm:$0xff]
        %v2077 = vld [vmem:[%s3 + $0x60] sm:$0xff]
        %v2078 = vld [vmem:[%s3 + $0x68] sm:$0xff]
        %v2079 = vld [vmem:[%s3 + $0x70] sm:$0xff]
        %v2080 = vld [vmem:[%s3 + $0x78] sm:$0xff]
        %v2081 = vld [vmem:[%s3 + $0x80] sm:$0xff]
        %v2082 = vld [vmem:[%s3 + $0x88] sm:$0xff]
        %v2083 = vld [vmem:[%s3 + $0x90] sm:$0xff]
        %v2084 = vld [vmem:[%s3 + $0x98] sm:$0xff]
        %v2085 = vld [vmem:[%s3 + $0xa0] sm:$0xff]
        %v2086 = vld [vmem:[%s3 + $0xa8] sm:$0xff]
        %v2087 = vld [vmem:[%s3 + $0xb0] sm:$0xff]
        %v2088 = vld [vmem:[%s3 + $0xb8] sm:$0xff]
        %v2089 = vld [vmem:[%s3 + $0xc0] sm:$0xff]
        %v2090 = vld [vmem:[%s3 + $0xc8] sm:$0xff]
        %v2091 = vld [vmem:[%s3 + $0xd0] sm:$0xff]
        %v2092 = vld [vmem:[%s3 + $0xd8] sm:$0xff]
        %v2093 = vld [vmem:[%s3 + $0xe0] sm:$0xff]
        %v2094 = vld [vmem:[%s3 + $0xe8] sm:$0xff]
        %vm2095 = vcmask 916480
        %v2097 = vsel %vm2095, %v1970, 0
        %v2100 = vsel %vm2095, %v1972, 0
        %v2103 = vsel %vm2095, %v1974, 0
        %v2106 = vsel %vm2095, %v1976, 0
        %v2109 = vsel %vm2095, %v1978, 0
        %v2112 = vsel %vm2095, %v1980, 0
        %v2115 = vsel %vm2095, %v1982, 0
        %v2118 = vsel %vm2095, %v1984, 0
        %v2121 = vsel %vm2095, %v1986, 0
        %v2124 = vsel %vm2095, %v1988, 0
        %v2127 = vsel %vm2095, %v1990, 0
        %v2130 = vsel %vm2095, %v1992, 0
        %v2133 = vsel %vm2095, %v1994, 0
        %v2136 = vsel %vm2095, %v1996, 0
        %v2139 = vsel %vm2095, %v1998, 0
        %v2142 = vsel %vm2095, %v2000, 0
        %v2145 = vsel %vm2095, %v2002, 0
        %v2148 = vsel %vm2095, %v2004, 0
        %v2151 = vsel %vm2095, %v2006, 0
        %v2154 = vsel %vm2095, %v2008, 0
        %v2157 = vsel %vm2095, %v2010, 0
        %v2160 = vsel %vm2095, %v2012, 0
        %v2163 = vsel %vm2095, %v2014, 0
        %v2166 = vsel %vm2095, %v2016, 0
        %v2169 = vsel %vm2095, %v2018, 0
        %v2172 = vsel %vm2095, %v2020, 0
        %v2175 = vsel %vm2095, %v2022, 0
        %v2178 = vsel %vm2095, %v2024, 0
        %v2181 = vsel %vm2095, %v2026, 0
        %v2184 = vsel %vm2095, %v2028, 0
        %v2187 = vsel %vm2095, %v2030, 0
        %v2190 = vsel %vm2095, %v2032, 0
        %v2193 = vsel %vm2095, %v2034, 0
        %v2196 = vsel %vm2095, %v2036, 0
        %v2199 = vsel %vm2095, %v2038, 0
        %v2202 = vsel %vm2095, %v2040, 0
        %v2205 = vsel %vm2095, %v2042, 0
        %v2208 = vsel %vm2095, %v2044, 0
        %v2211 = vsel %vm2095, %v2046, 0
        %v2214 = vsel %vm2095, %v2048, 0
        %v2217 = vsel %vm2095, %v2050, 0
        %v2220 = vsel %vm2095, %v2052, 0
        %v2223 = vsel %vm2095, %v2054, 0
        %v2226 = vsel %vm2095, %v2056, 0
        %v2229 = vsel %vm2095, %v2058, 0
        %v2232 = vsel %vm2095, %v2060, 0
        %v2235 = vsel %vm2095, %v2062, 0
        %v2238 = vsel %vm2095, %v2064, 0
        %2240 = vmatprep.subr.mxu0 0.0
        %2241 = vmatpush1.msra.mxu0 %v2065
        %2242 = vmatprep.subr.mxu0 0.0
        %2243 = vmatpush1.msra.mxu0 %v2066
        %2244 = vmatprep.subr.mxu0 0.0
        %2245 = vmatpush1.msra.mxu0 %v2067
        %2246 = vmatprep.subr.mxu0 0.0
        %2247 = vmatpush1.msra.mxu0 %v2068
        %2248 = vmatprep.subr.mxu0 0.0
        %2249 = vmatpush1.msra.mxu0 %v2069
        %2250 = vmatprep.subr.mxu0 0.0
        %2251 = vmatpush1.msra.mxu0 %v2070
        %2252 = vmatprep.subr.mxu0 0.0
        %2253 = vmatpush1.msra.mxu0 %v2071
        %2254 = vmatprep.subr.mxu0 0.0
        %2255 = vmatpush1.msra.mxu0 %v2072
        %2256 = vmatprep.subr.mxu0 0.0
        %2257 = vmatpush1.msra.mxu0 %v2073
        %2258 = vmatprep.subr.mxu0 0.0
        %2259 = vmatpush1.msra.mxu0 %v2074
        %2260 = vmatprep.subr.mxu0 0.0
        %2261 = vmatpush1.msra.mxu0 %v2075
        %2262 = vmatprep.subr.mxu0 0.0
        %2263 = vmatpush1.msra.mxu0 %v2076
        %2264 = vmatprep.subr.mxu0 0.0
        %2265 = vmatpush1.msra.mxu0 %v2077
        %2266 = vmatprep.subr.mxu0 0.0
        %2267 = vmatpush1.msra.mxu0 %v2078
        %2268 = vmatprep.subr.mxu0 0.0
        %2269 = vmatpush1.msra.mxu0 %v2079
        %2270 = vmatprep.subr.mxu0 0.0
        %2271 = vmatpush1.msra.mxu0 %v2080
        %2272 = vmatprep.subr.mxu0 0.0
        %2273 = vmatpush1.msra.mxu0 %v2081
        %2274 = vmatprep.subr.mxu0 0.0
        %2275 = vmatpush1.msra.mxu0 %v2082
        %2276 = vmatprep.subr.mxu0 0.0
        %2277 = vmatpush1.msra.mxu0 %v2083
        %2278 = vmatprep.subr.mxu0 0.0
        %2279 = vmatpush1.msra.mxu0 %v2084
        %2280 = vmatprep.subr.mxu0 0.0
        %2281 = vmatpush1.msra.mxu0 %v2085
        %2282 = vmatprep.subr.mxu0 0.0
        %2283 = vmatpush1.msra.mxu0 %v2086
        %2284 = vmatprep.subr.mxu0 0.0
        %2285 = vmatpush1.msra.mxu0 %v2087
        %2286 = vmatprep.subr.mxu0 0.0
        %2287 = vmatpush1.msra.mxu0 %v2088
        %2288 = vmatprep.subr.mxu0 0.0
        %2289 = vmatpush1.msra.mxu0 %v2089
        %2290 = vmatprep.subr.mxu0 0.0
        %2291 = vmatpush1.msra.mxu0 %v2090
        %2292 = vmatprep.subr.mxu0 0.0
        %2293 = vmatpush1.msra.mxu0 %v2091
        %2294 = vmatprep.subr.mxu0 0.0
        %2295 = vmatpush1.msra.mxu0 %v2092
        %2296 = vmatprep.subr.mxu0 0.0
        %2297 = vmatpush1.msra.mxu0 %v2093
        %2298 = vmatprep.subr.mxu0 0.0
        %2299 = vmatpush1.msra.mxu0 %v2094
        %2300 = vmatprep.subr.mxu0 0.0
        %2301 = vmatpush1.msra.mxu0 0.0
        %2302 = vmatprep.subr.mxu0 0.0
        %2303 = vmatpush1.msra.mxu0 0.0
        %2304 = vmatprep.mubr.f32.mxu0 %v2097
        %2305 = vmatmul.mubr.f32.gmra.mrb[0].mxu0 %v1969
        %v2306 = vpop.f32.mrb[0].mxu0
        %v2307 = vadd.f32 0.0, %v2306
        %v2308 = vpop.f32.mrb[0].mxu0
        %2309 = vmatprep.mubr.f32.mxu0 %v2100
        %2310 = vmatmul.mubr.f32.gmra.mrb[0].mxu0 %v1971
        %v2311 = vpop.f32.mrb[0].mxu0
        %v2312 = vadd.f32 0.0, %v2311
        %v2313 = vpop.f32.mrb[0].mxu0
        %2314 = vmatprep.mubr.f32.mxu0 %v2103
        %2315 = vmatmul.mubr.f32.gmra.mrb[0].mxu0 %v1973
        %v2316 = vpop.f32.mrb[0].mxu0
        %v2317 = vadd.f32 0.0, %v2316
        %v2318 = vpop.f32.mrb[0].mxu0
        %2319 = vmatprep.mubr.f32.mxu0 %v2106
        %2320 = vmatmul.mubr.f32.gmra.mrb[0].mxu0 %v1975
        %v2321 = vpop.f32.mrb[0].mxu0
        %v2322 = vadd.f32 0.0, %v2321
        %v2323 = vpop.f32.mrb[0].mxu0
        %2324 = vmatprep.mubr.f32.mxu0 %v2109
        %2325 = vmatmul.mubr.f32.gmra.mrb[0].mxu0 %v1977
        %v2326 = vpop.f32.mrb[0].mxu0
        %v2327 = vadd.f32 0.0, %v2326
        %v2328 = vpop.f32.mrb[0].mxu0
        %2329 = vmatprep.mubr.f32.mxu0 %v2112
        %2330 = vmatmul.mubr.f32.gmra.mrb[0].mxu0 %v1979
        %v2331 = vpop.f32.mrb[0].mxu0
        %v2332 = vadd.f32 0.0, %v2331
        %v2333 = vpop.f32.mrb[0].mxu0
        %2334 = vmatprep.mubr.f32.mxu0 %v2115
        %2335 = vmatmul.mubr.f32.gmra.mrb[0].mxu0 %v1981
        %v2336 = vpop.f32.mrb[0].mxu0
        %v2337 = vadd.f32 0.0, %v2336
        %v2338 = vpop.f32.mrb[0].mxu0
        %2339 = vmatprep.mubr.f32.mxu0 %v2118
        %2340 = vmatmul.mubr.f32.gmra.mrb[0].mxu0 %v1983
        %v2341 = vpop.f32.mrb[0].mxu0
        %v2342 = vadd.f32 0.0, %v2341
        %v2343 = vpop.f32.mrb[0].mxu0
        %2344 = vmatprep.mubr.f32.mxu0 %v2121
        %2345 = vmatmul.mubr.f32.gmra.mrb[0].mxu0 %v1985
        %v2346 = vpop.f32.mrb[0].mxu0
        %v2347 = vadd.f32 0.0, %v2346
        %v2348 = vpop.f32.mrb[0].mxu0
        %2349 = vmatprep.mubr.f32.mxu0 %v2124
        %2350 = vmatmul.mubr.f32.gmra.mrb[0].mxu0 %v1987
        %v2351 = vpop.f32.mrb[0].mxu0
        %v2352 = vadd.f32 0.0, %v2351
        %v2353 = vpop.f32.mrb[0].mxu0
        %2354 = vmatprep.mubr.f32.mxu0 %v2127
        %2355 = vmatmul.mubr.f32.gmra.mrb[0].mxu0 %v1989
        %v2356 = vpop.f32.mrb[0].mxu0
        %v2357 = vadd.f32 0.0, %v2356
        %v2358 = vpop.f32.mrb[0].mxu0
        %2359 = vmatprep.mubr.f32.mxu0 %v2130
        %2360 = vmatmul.mubr.f32.gmra.mrb[0].mxu0 %v1991
        %v2361 = vpop.f32.mrb[0].mxu0
        %v2362 = vadd.f32 0.0, %v2361
        %v2363 = vpop.f32.mrb[0].mxu0
        %2364 = vmatprep.mubr.f32.mxu0 %v2133
        %2365 = vmatmul.mubr.f32.gmra.mrb[0].mxu0 %v1993
        %v2366 = vpop.f32.mrb[0].mxu0
        %v2367 = vadd.f32 0.0, %v2366
        %v2368 = vpop.f32.mrb[0].mxu0
        %2369 = vmatprep.mubr.f32.mxu0 %v2136
        %2370 = vmatmul.mubr.f32.gmra.mrb[0].mxu0 %v1995
        %v2371 = vpop.f32.mrb[0].mxu0
        %v2372 = vadd.f32 0.0, %v2371
        %v2373 = vpop.f32.mrb[0].mxu0
        %2374 = vmatprep.mubr.f32.mxu0 %v2139
        %2375 = vmatmul.mubr.f32.gmra.mrb[0].mxu0 %v1997
        %v2376 = vpop.f32.mrb[0].mxu0
        %v2377 = vadd.f32 0.0, %v2376
        %v2378 = vpop.f32.mrb[0].mxu0
        %2379 = vmatprep.mubr.f32.mxu0 %v2142
        %2380 = vmatmul.mubr.f32.gmra.mrb[0].mxu0 %v1999
        %v2381 = vpop.f32.mrb[0].mxu0
        %v2382 = vadd.f32 0.0, %v2381
        %v2383 = vpop.f32.mrb[0].mxu0
        %2384 = vmatprep.mubr.f32.mxu0 %v2145
        %2385 = vmatmul.mubr.f32.gmra.mrb[0].mxu0 %v2001
        %v2386 = vpop.f32.mrb[0].mxu0
        %v2387 = vadd.f32 0.0, %v2386
        %v2388 = vpop.f32.mrb[0].mxu0
        %2389 = vmatprep.mubr.f32.mxu0 %v2148
        %2390 = vmatmul.mubr.f32.gmra.mrb[0].mxu0 %v2003
        %v2391 = vpop.f32.mrb[0].mxu0
        %v2392 = vadd.f32 0.0, %v2391
        %v2393 = vpop.f32.mrb[0].mxu0
        %2394 = vmatprep.mubr.f32.mxu0 %v2151
        %2395 = vmatmul.mubr.f32.gmra.mrb[0].mxu0 %v2005
        %v2396 = vpop.f32.mrb[0].mxu0
        %v2397 = vadd.f32 0.0, %v2396
        %v2398 = vpop.f32.mrb[0].mxu0
        %2399 = vmatprep.mubr.f32.mxu0 %v2154
        %2400 = vmatmul.mubr.f32.gmra.mrb[0].mxu0 %v2007
        %v2401 = vpop.f32.mrb[0].mxu0
        %v2402 = vadd.f32 0.0, %v2401
        %v2403 = vpop.f32.mrb[0].mxu0
        %2404 = vmatprep.mubr.f32.mxu0 %v2157
        %2405 = vmatmul.mubr.f32.gmra.mrb[0].mxu0 %v2009
        %v2406 = vpop.f32.mrb[0].mxu0
        %v2407 = vadd.f32 0.0, %v2406
        %v2408 = vpop.f32.mrb[0].mxu0
        %2409 = vmatprep.mubr.f32.mxu0 %v2160
        %2410 = vmatmul.mubr.f32.gmra.mrb[0].mxu0 %v2011
        %v2411 = vpop.f32.mrb[0].mxu0
        %v2412 = vadd.f32 0.0, %v2411
        %v2413 = vpop.f32.mrb[0].mxu0
        %2414 = vmatprep.mubr.f32.mxu0 %v2163
        %2415 = vmatmul.mubr.f32.gmra.mrb[0].mxu0 %v2013
        %v2416 = vpop.f32.mrb[0].mxu0
        %v2417 = vadd.f32 0.0, %v2416
        %v2418 = vpop.f32.mrb[0].mxu0
        %2419 = vmatprep.mubr.f32.mxu0 %v2166
        %2420 = vmatmul.mubr.f32.gmra.mrb[0].mxu0 %v2015
        %v2421 = vpop.f32.mrb[0].mxu0
        %v2422 = vadd.f32 0.0, %v2421
        %v2423 = vpop.f32.mrb[0].mxu0
        %2424 = vmatprep.mubr.f32.mxu0 %v2169
        %2425 = vmatmul.mubr.f32.gmra.mrb[0].mxu0 %v2017
        %v2426 = vpop.f32.mrb[0].mxu0
        %v2427 = vadd.f32 0.0, %v2426
        %v2428 = vpop.f32.mrb[0].mxu0
        %2429 = vmatprep.mubr.f32.mxu0 %v2172
        %2430 = vmatmul.mubr.f32.gmra.mrb[0].mxu0 %v2019
        %v2431 = vpop.f32.mrb[0].mxu0
        %v2432 = vadd.f32 0.0, %v2431
        %v2433 = vpop.f32.mrb[0].mxu0
        %2434 = vmatprep.mubr.f32.mxu0 %v2175
        %2435 = vmatmul.mubr.f32.gmra.mrb[0].mxu0 %v2021
        %v2436 = vpop.f32.mrb[0].mxu0
        %v2437 = vadd.f32 0.0, %v2436
        %v2438 = vpop.f32.mrb[0].mxu0
        %2439 = vmatprep.mubr.f32.mxu0 %v2178
        %2440 = vmatmul.mubr.f32.gmra.mrb[0].mxu0 %v2023
        %v2441 = vpop.f32.mrb[0].mxu0
        %v2442 = vadd.f32 0.0, %v2441
        %v2443 = vpop.f32.mrb[0].mxu0
        %2444 = vmatprep.mubr.f32.mxu0 %v2181
        %2445 = vmatmul.mubr.f32.gmra.mrb[0].mxu0 %v2025
        %v2446 = vpop.f32.mrb[0].mxu0
        %v2447 = vadd.f32 0.0, %v2446
        %v2448 = vpop.f32.mrb[0].mxu0
        %2449 = vmatprep.mubr.f32.mxu0 %v2184
        %2450 = vmatmul.mubr.f32.gmra.mrb[0].mxu0 %v2027
        %v2451 = vpop.f32.mrb[0].mxu0
        %v2452 = vadd.f32 0.0, %v2451
        %v2453 = vpop.f32.mrb[0].mxu0
        %2454 = vmatprep.mubr.f32.mxu0 %v2187
        %2455 = vmatmul.mubr.f32.gmra.mrb[0].mxu0 %v2029
        %v2456 = vpop.f32.mrb[0].mxu0
        %v2457 = vadd.f32 0.0, %v2456
        %v2458 = vpop.f32.mrb[0].mxu0
        %2459 = vmatprep.mubr.f32.mxu0 %v2190
        %2460 = vmatmul.mubr.f32.gmra.mrb[0].mxu0 %v2031
        %v2461 = vpop.f32.mrb[0].mxu0
        %v2462 = vadd.f32 0.0, %v2461
        %v2463 = vpop.f32.mrb[0].mxu0
        %2464 = vmatprep.mubr.f32.mxu0 %v2193
        %2465 = vmatmul.mubr.f32.gmra.mrb[0].mxu0 %v2033
        %v2466 = vpop.f32.mrb[0].mxu0
        %v2467 = vadd.f32 0.0, %v2466
        %v2468 = vpop.f32.mrb[0].mxu0
        %2469 = vmatprep.mubr.f32.mxu0 %v2196
        %2470 = vmatmul.mubr.f32.gmra.mrb[0].mxu0 %v2035
        %v2471 = vpop.f32.mrb[0].mxu0
        %v2472 = vadd.f32 0.0, %v2471
        %v2473 = vpop.f32.mrb[0].mxu0
        %2474 = vmatprep.mubr.f32.mxu0 %v2199
        %2475 = vmatmul.mubr.f32.gmra.mrb[0].mxu0 %v2037
        %v2476 = vpop.f32.mrb[0].mxu0
        %v2477 = vadd.f32 0.0, %v2476
        %v2478 = vpop.f32.mrb[0].mxu0
        %2479 = vmatprep.mubr.f32.mxu0 %v2202
        %2480 = vmatmul.mubr.f32.gmra.mrb[0].mxu0 %v2039
        %v2481 = vpop.f32.mrb[0].mxu0
        %v2482 = vadd.f32 0.0, %v2481
        %v2483 = vpop.f32.mrb[0].mxu0
        %2484 = vmatprep.mubr.f32.mxu0 %v2205
        %2485 = vmatmul.mubr.f32.gmra.mrb[0].mxu0 %v2041
        %v2486 = vpop.f32.mrb[0].mxu0
        %v2487 = vadd.f32 0.0, %v2486
        %v2488 = vpop.f32.mrb[0].mxu0
        %2489 = vmatprep.mubr.f32.mxu0 %v2208
        %2490 = vmatmul.mubr.f32.gmra.mrb[0].mxu0 %v2043
        %v2491 = vpop.f32.mrb[0].mxu0
        %v2492 = vadd.f32 0.0, %v2491
        %v2493 = vpop.f32.mrb[0].mxu0
        %2494 = vmatprep.mubr.f32.mxu0 %v2211
        %2495 = vmatmul.mubr.f32.gmra.mrb[0].mxu0 %v2045
        %v2496 = vpop.f32.mrb[0].mxu0
        %v2497 = vadd.f32 0.0, %v2496
        %v2498 = vpop.f32.mrb[0].mxu0
        %2499 = vmatprep.mubr.f32.mxu0 %v2214
        %2500 = vmatmul.mubr.f32.gmra.mrb[0].mxu0 %v2047
        %v2501 = vpop.f32.mrb[0].mxu0
        %v2502 = vadd.f32 0.0, %v2501
        %v2503 = vpop.f32.mrb[0].mxu0
        %2504 = vmatprep.mubr.f32.mxu0 %v2217
        %2505 = vmatmul.mubr.f32.gmra.mrb[0].mxu0 %v2049
        %v2506 = vpop.f32.mrb[0].mxu0
        %v2507 = vadd.f32 0.0, %v2506
        %v2508 = vpop.f32.mrb[0].mxu0
        %2509 = vmatprep.mubr.f32.mxu0 %v2220
        %2510 = vmatmul.mubr.f32.gmra.mrb[0].mxu0 %v2051
        %v2511 = vpop.f32.mrb[0].mxu0
        %v2512 = vadd.f32 0.0, %v2511
        %v2513 = vpop.f32.mrb[0].mxu0
        %2514 = vmatprep.mubr.f32.mxu0 %v2223
        %2515 = vmatmul.mubr.f32.gmra.mrb[0].mxu0 %v2053
        %v2516 = vpop.f32.mrb[0].mxu0
        %v2517 = vadd.f32 0.0, %v2516
        %v2518 = vpop.f32.mrb[0].mxu0
        %2519 = vmatprep.mubr.f32.mxu0 %v2226
        %2520 = vmatmul.mubr.f32.gmra.mrb[0].mxu0 %v2055
        %v2521 = vpop.f32.mrb[0].mxu0
        %v2522 = vadd.f32 0.0, %v2521
        %v2523 = vpop.f32.mrb[0].mxu0
        %2524 = vmatprep.mubr.f32.mxu0 %v2229
        %2525 = vmatmul.mubr.f32.gmra.mrb[0].mxu0 %v2057
        %v2526 = vpop.f32.mrb[0].mxu0
        %v2527 = vadd.f32 0.0, %v2526
        %v2528 = vpop.f32.mrb[0].mxu0
        %2529 = vmatprep.mubr.f32.mxu0 %v2232
        %2530 = vmatmul.mubr.f32.gmra.mrb[0].mxu0 %v2059
        %v2531 = vpop.f32.mrb[0].mxu0
        %v2532 = vadd.f32 0.0, %v2531
        %v2533 = vpop.f32.mrb[0].mxu0
        %2534 = vmatprep.mubr.f32.mxu0 %v2235
        %2535 = vmatmul.mubr.f32.gmra.mrb[0].mxu0 %v2061
        %v2536 = vpop.f32.mrb[0].mxu0
        %v2537 = vadd.f32 0.0, %v2536
        %v2538 = vpop.f32.mrb[0].mxu0
        %2539 = vmatprep.mubr.f32.mxu0 %v2238
        %2540 = vmatmul.mubr.f32.gmra.mrb[0].mxu0 %v2063
        %v2541 = vpop.f32.mrb[0].mxu0
        %v2542 = vadd.f32 0.0, %v2541
        %v2543 = vpop.f32.mrb[0].mxu0
        %2544 = vdwg.mxu0
        %s2545 = scalar_lea.vmem %s3, 240
        %v2546 = vld [vmem:[%s2545] sm:$0xff]
        %v2547 = vld [vmem:[%s2545 + $0x8] sm:$0xff]
        %v2548 = vld [vmem:[%s2545 + $0x10] sm:$0xff]
        %v2549 = vld [vmem:[%s2545 + $0x18] sm:$0xff]
        %v2550 = vld [vmem:[%s2545 + $0x20] sm:$0xff]
        %v2551 = vld [vmem:[%s2545 + $0x28] sm:$0xff]
        %v2552 = vld [vmem:[%s2545 + $0x30] sm:$0xff]
        %v2553 = vld [vmem:[%s2545 + $0x38] sm:$0xff]
        %v2554 = vld [vmem:[%s2545 + $0x40] sm:$0xff]
        %v2555 = vld [vmem:[%s2545 + $0x48] sm:$0xff]
        %v2556 = vld [vmem:[%s2545 + $0x50] sm:$0xff]
        %v2557 = vld [vmem:[%s2545 + $0x58] sm:$0xff]
        %v2558 = vld [vmem:[%s2545 + $0x60] sm:$0xff]
        %v2559 = vld [vmem:[%s2545 + $0x68] sm:$0xff]
        %v2560 = vld [vmem:[%s2545 + $0x70] sm:$0xff]
        %v2561 = vld [vmem:[%s2545 + $0x78] sm:$0xff]
        %v2562 = vld [vmem:[%s2545 + $0x80] sm:$0xff]
        %v2563 = vld [vmem:[%s2545 + $0x88] sm:$0xff]
        %v2564 = vld [vmem:[%s2545 + $0x90] sm:$0xff]
        %v2565 = vld [vmem:[%s2545 + $0x98] sm:$0xff]
        %v2566 = vld [vmem:[%s2545 + $0xa0] sm:$0xff]
        %v2567 = vld [vmem:[%s2545 + $0xa8] sm:$0xff]
        %v2568 = vld [vmem:[%s2545 + $0xb0] sm:$0xff]
        %v2569 = vld [vmem:[%s2545 + $0xb8] sm:$0xff]
        %v2570 = vld [vmem:[%s2545 + $0xc0] sm:$0xff]
        %v2571 = vld [vmem:[%s2545 + $0xc8] sm:$0xff]
        %v2572 = vld [vmem:[%s2545 + $0xd0] sm:$0xff]
        %v2573 = vld [vmem:[%s2545 + $0xd8] sm:$0xff]
        %v2574 = vld [vmem:[%s2545 + $0xe0] sm:$0xff]
        %v2575 = vld [vmem:[%s2545 + $0xe8] sm:$0xff]
        %2576 = vmatprep.subr.mxu0 0.0
        %2577 = vmatpush1.msra.mxu0 %v2546
        %2578 = vmatprep.subr.mxu0 0.0
        %2579 = vmatpush1.msra.mxu0 %v2547
        %2580 = vmatprep.subr.mxu0 0.0
        %2581 = vmatpush1.msra.mxu0 %v2548
        %2582 = vmatprep.subr.mxu0 0.0
        %2583 = vmatpush1.msra.mxu0 %v2549
        %2584 = vmatprep.subr.mxu0 0.0
        %2585 = vmatpush1.msra.mxu0 %v2550
        %2586 = vmatprep.subr.mxu0 0.0
        %2587 = vmatpush1.msra.mxu0 %v2551
        %2588 = vmatprep.subr.mxu0 0.0
        %2589 = vmatpush1.msra.mxu0 %v2552
        %2590 = vmatprep.subr.mxu0 0.0
        %2591 = vmatpush1.msra.mxu0 %v2553
        %2592 = vmatprep.subr.mxu0 0.0
        %2593 = vmatpush1.msra.mxu0 %v2554
        %2594 = vmatprep.subr.mxu0 0.0
        %2595 = vmatpush1.msra.mxu0 %v2555
        %2596 = vmatprep.subr.mxu0 0.0
        %2597 = vmatpush1.msra.mxu0 %v2556
        %2598 = vmatprep.subr.mxu0 0.0
        %2599 = vmatpush1.msra.mxu0 %v2557
        %2600 = vmatprep.subr.mxu0 0.0
        %2601 = vmatpush1.msra.mxu0 %v2558
        %2602 = vmatprep.subr.mxu0 0.0
        %2603 = vmatpush1.msra.mxu0 %v2559
        %2604 = vmatprep.subr.mxu0 0.0
        %2605 = vmatpush1.msra.mxu0 %v2560
        %2606 = vmatprep.subr.mxu0 0.0
        %2607 = vmatpush1.msra.mxu0 %v2561
        %2608 = vmatprep.subr.mxu0 0.0
        %2609 = vmatpush1.msra.mxu0 %v2562
        %2610 = vmatprep.subr.mxu0 0.0
        %2611 = vmatpush1.msra.mxu0 %v2563
        %2612 = vmatprep.subr.mxu0 0.0
        %2613 = vmatpush1.msra.mxu0 %v2564
        %2614 = vmatprep.subr.mxu0 0.0
        %2615 = vmatpush1.msra.mxu0 %v2565
        %2616 = vmatprep.subr.mxu0 0.0
        %2617 = vmatpush1.msra.mxu0 %v2566
        %2618 = vmatprep.subr.mxu0 0.0
        %2619 = vmatpush1.msra.mxu0 %v2567
        %2620 = vmatprep.subr.mxu0 0.0
        %2621 = vmatpush1.msra.mxu0 %v2568
        %2622 = vmatprep.subr.mxu0 0.0
        %2623 = vmatpush1.msra.mxu0 %v2569
        %2624 = vmatprep.subr.mxu0 0.0
        %2625 = vmatpush1.msra.mxu0 %v2570
        %2626 = vmatprep.subr.mxu0 0.0
        %2627 = vmatpush1.msra.mxu0 %v2571
        %2628 = vmatprep.subr.mxu0 0.0
        %2629 = vmatpush1.msra.mxu0 %v2572
        %2630 = vmatprep.subr.mxu0 0.0
        %2631 = vmatpush1.msra.mxu0 %v2573
        %2632 = vmatprep.subr.mxu0 0.0
        %2633 = vmatpush1.msra.mxu0 %v2574
        %2634 = vmatprep.subr.mxu0 0.0
        %2635 = vmatpush1.msra.mxu0 %v2575
        %2636 = vmatprep.subr.mxu0 0.0
        %2637 = vmatpush1.msra.mxu0 0.0
        %2638 = vmatprep.subr.mxu0 0.0
        %2639 = vmatpush1.msra.mxu0 0.0
        %2640 = vmatprep.mubr.f32.mxu0 %v2097
        %2641 = vmatmul.mubr.f32.gmra.mrb[0].mxu0 %v1969
        %v2642 = vpop.f32.mrb[0].mxu0
        %v2643 = vadd.f32 0.0, %v2642
        %v2644 = vpop.f32.mrb[0].mxu0
        %2645 = vmatprep.mubr.f32.mxu0 %v2100
        %2646 = vmatmul.mubr.f32.gmra.mrb[0].mxu0 %v1971
        %v2647 = vpop.f32.mrb[0].mxu0
        %v2648 = vadd.f32 0.0, %v2647
        %v2649 = vpop.f32.mrb[0].mxu0
        %2650 = vmatprep.mubr.f32.mxu0 %v2103
        %2651 = vmatmul.mubr.f32.gmra.mrb[0].mxu0 %v1973
        %v2652 = vpop.f32.mrb[0].mxu0
        %v2653 = vadd.f32 0.0, %v2652
        %v2654 = vpop.f32.mrb[0].mxu0
        %2655 = vmatprep.mubr.f32.mxu0 %v2106
        %2656 = vmatmul.mubr.f32.gmra.mrb[0].mxu0 %v1975
        %v2657 = vpop.f32.mrb[0].mxu0
        %v2658 = vadd.f32 0.0, %v2657
        %v2659 = vpop.f32.mrb[0].mxu0
        %2660 = vmatprep.mubr.f32.mxu0 %v2109
        %2661 = vmatmul.mubr.f32.gmra.mrb[0].mxu0 %v1977
        %v2662 = vpop.f32.mrb[0].mxu0
        %v2663 = vadd.f32 0.0, %v2662
        %v2664 = vpop.f32.mrb[0].mxu0
        %2665 = vmatprep.mubr.f32.mxu0 %v2112
        %2666 = vmatmul.mubr.f32.gmra.mrb[0].mxu0 %v1979
        %v2667 = vpop.f32.mrb[0].mxu0
        %v2668 = vadd.f32 0.0, %v2667
        %v2669 = vpop.f32.mrb[0].mxu0
        %2670 = vmatprep.mubr.f32.mxu0 %v2115
        %2671 = vmatmul.mubr.f32.gmra.mrb[0].mxu0 %v1981
        %v2672 = vpop.f32.mrb[0].mxu0
        %v2673 = vadd.f32 0.0, %v2672
        %v2674 = vpop.f32.mrb[0].mxu0
        %2675 = vmatprep.mubr.f32.mxu0 %v2118
        %2676 = vmatmul.mubr.f32.gmra.mrb[0].mxu0 %v1983
        %v2677 = vpop.f32.mrb[0].mxu0
        %v2678 = vadd.f32 0.0, %v2677
        %v2679 = vpop.f32.mrb[0].mxu0
        %2680 = vmatprep.mubr.f32.mxu0 %v2121
        %2681 = vmatmul.mubr.f32.gmra.mrb[0].mxu0 %v1985
        %v2682 = vpop.f32.mrb[0].mxu0
        %v2683 = vadd.f32 0.0, %v2682
        %v2684 = vpop.f32.mrb[0].mxu0
        %2685 = vmatprep.mubr.f32.mxu0 %v2124
        %2686 = vmatmul.mubr.f32.gmra.mrb[0].mxu0 %v1987
        %v2687 = vpop.f32.mrb[0].mxu0
        %v2688 = vadd.f32 0.0, %v2687
        %v2689 = vpop.f32.mrb[0].mxu0
        %2690 = vmatprep.mubr.f32.mxu0 %v2127
        %2691 = vmatmul.mubr.f32.gmra.mrb[0].mxu0 %v1989
        %v2692 = vpop.f32.mrb[0].mxu0
        %v2693 = vadd.f32 0.0, %v2692
        %v2694 = vpop.f32.mrb[0].mxu0
        %2695 = vmatprep.mubr.f32.mxu0 %v2130
        %2696 = vmatmul.mubr.f32.gmra.mrb[0].mxu0 %v1991
        %v2697 = vpop.f32.mrb[0].mxu0
        %v2698 = vadd.f32 0.0, %v2697
        %v2699 = vpop.f32.mrb[0].mxu0
        %2700 = vmatprep.mubr.f32.mxu0 %v2133
        %2701 = vmatmul.mubr.f32.gmra.mrb[0].mxu0 %v1993
        %v2702 = vpop.f32.mrb[0].mxu0
        %v2703 = vadd.f32 0.0, %v2702
        %v2704 = vpop.f32.mrb[0].mxu0
        %2705 = vmatprep.mubr.f32.mxu0 %v2136
        %2706 = vmatmul.mubr.f32.gmra.mrb[0].mxu0 %v1995
        %v2707 = vpop.f32.mrb[0].mxu0
        %v2708 = vadd.f32 0.0, %v2707
        %v2709 = vpop.f32.mrb[0].mxu0
        %2710 = vmatprep.mubr.f32.mxu0 %v2139
        %2711 = vmatmul.mubr.f32.gmra.mrb[0].mxu0 %v1997
        %v2712 = vpop.f32.mrb[0].mxu0
        %v2713 = vadd.f32 0.0, %v2712
        %v2714 = vpop.f32.mrb[0].mxu0
        %2715 = vmatprep.mubr.f32.mxu0 %v2142
        %2716 = vmatmul.mubr.f32.gmra.mrb[0].mxu0 %v1999
        %v2717 = vpop.f32.mrb[0].mxu0
        %v2718 = vadd.f32 0.0, %v2717
        %v2719 = vpop.f32.mrb[0].mxu0
        %2720 = vmatprep.mubr.f32.mxu0 %v2145
        %2721 = vmatmul.mubr.f32.gmra.mrb[0].mxu0 %v2001
        %v2722 = vpop.f32.mrb[0].mxu0
        %v2723 = vadd.f32 0.0, %v2722
        %v2724 = vpop.f32.mrb[0].mxu0
        %2725 = vmatprep.mubr.f32.mxu0 %v2148
        %2726 = vmatmul.mubr.f32.gmra.mrb[0].mxu0 %v2003
        %v2727 = vpop.f32.mrb[0].mxu0
        %v2728 = vadd.f32 0.0, %v2727
        %v2729 = vpop.f32.mrb[0].mxu0
        %2730 = vmatprep.mubr.f32.mxu0 %v2151
        %2731 = vmatmul.mubr.f32.gmra.mrb[0].mxu0 %v2005
        %v2732 = vpop.f32.mrb[0].mxu0
        %v2733 = vadd.f32 0.0, %v2732
        %v2734 = vpop.f32.mrb[0].mxu0
        %2735 = vmatprep.mubr.f32.mxu0 %v2154
        %2736 = vmatmul.mubr.f32.gmra.mrb[0].mxu0 %v2007
        %v2737 = vpop.f32.mrb[0].mxu0
        %v2738 = vadd.f32 0.0, %v2737
        %v2739 = vpop.f32.mrb[0].mxu0
        %2740 = vmatprep.mubr.f32.mxu0 %v2157
        %2741 = vmatmul.mubr.f32.gmra.mrb[0].mxu0 %v2009
        %v2742 = vpop.f32.mrb[0].mxu0
        %v2743 = vadd.f32 0.0, %v2742
        %v2744 = vpop.f32.mrb[0].mxu0
        %2745 = vmatprep.mubr.f32.mxu0 %v2160
        %2746 = vmatmul.mubr.f32.gmra.mrb[0].mxu0 %v2011
        %v2747 = vpop.f32.mrb[0].mxu0
        %v2748 = vadd.f32 0.0, %v2747
        %v2749 = vpop.f32.mrb[0].mxu0
        %2750 = vmatprep.mubr.f32.mxu0 %v2163
        %2751 = vmatmul.mubr.f32.gmra.mrb[0].mxu0 %v2013
        %v2752 = vpop.f32.mrb[0].mxu0
        %v2753 = vadd.f32 0.0, %v2752
        %v2754 = vpop.f32.mrb[0].mxu0
        %2755 = vmatprep.mubr.f32.mxu0 %v2166
        %2756 = vmatmul.mubr.f32.gmra.mrb[0].mxu0 %v2015
        %v2757 = vpop.f32.mrb[0].mxu0
        %v2758 = vadd.f32 0.0, %v2757
        %v2759 = vpop.f32.mrb[0].mxu0
        %2760 = vmatprep.mubr.f32.mxu0 %v2169
        %2761 = vmatmul.mubr.f32.gmra.mrb[0].mxu0 %v2017
        %v2762 = vpop.f32.mrb[0].mxu0
        %v2763 = vadd.f32 0.0, %v2762
        %v2764 = vpop.f32.mrb[0].mxu0
        %2765 = vmatprep.mubr.f32.mxu0 %v2172
        %2766 = vmatmul.mubr.f32.gmra.mrb[0].mxu0 %v2019
        %v2767 = vpop.f32.mrb[0].mxu0
        %v2768 = vadd.f32 0.0, %v2767
        %v2769 = vpop.f32.mrb[0].mxu0
        %2770 = vmatprep.mubr.f32.mxu0 %v2175
        %2771 = vmatmul.mubr.f32.gmra.mrb[0].mxu0 %v2021
        %v2772 = vpop.f32.mrb[0].mxu0
        %v2773 = vadd.f32 0.0, %v2772
        %v2774 = vpop.f32.mrb[0].mxu0
        %2775 = vmatprep.mubr.f32.mxu0 %v2178
        %2776 = vmatmul.mubr.f32.gmra.mrb[0].mxu0 %v2023
        %v2777 = vpop.f32.mrb[0].mxu0
        %v2778 = vadd.f32 0.0, %v2777
        %v2779 = vpop.f32.mrb[0].mxu0
        %2780 = vmatprep.mubr.f32.mxu0 %v2181
        %2781 = vmatmul.mubr.f32.gmra.mrb[0].mxu0 %v2025
        %v2782 = vpop.f32.mrb[0].mxu0
        %v2783 = vadd.f32 0.0, %v2782
        %v2784 = vpop.f32.mrb[0].mxu0
        %2785 = vmatprep.mubr.f32.mxu0 %v2184
        %2786 = vmatmul.mubr.f32.gmra.mrb[0].mxu0 %v2027
        %v2787 = vpop.f32.mrb[0].mxu0
        %v2788 = vadd.f32 0.0, %v2787
        %v2789 = vpop.f32.mrb[0].mxu0
        %2790 = vmatprep.mubr.f32.mxu0 %v2187
        %2791 = vmatmul.mubr.f32.gmra.mrb[0].mxu0 %v2029
        %v2792 = vpop.f32.mrb[0].mxu0
        %v2793 = vadd.f32 0.0, %v2792
        %v2794 = vpop.f32.mrb[0].mxu0
        %2795 = vmatprep.mubr.f32.mxu0 %v2190
        %2796 = vmatmul.mubr.f32.gmra.mrb[0].mxu0 %v2031
        %v2797 = vpop.f32.mrb[0].mxu0
        %v2798 = vadd.f32 0.0, %v2797
        %v2799 = vpop.f32.mrb[0].mxu0
        %2800 = vmatprep.mubr.f32.mxu0 %v2193
        %2801 = vmatmul.mubr.f32.gmra.mrb[0].mxu0 %v2033
        %v2802 = vpop.f32.mrb[0].mxu0
        %v2803 = vadd.f32 0.0, %v2802
        %v2804 = vpop.f32.mrb[0].mxu0
        %2805 = vmatprep.mubr.f32.mxu0 %v2196
        %2806 = vmatmul.mubr.f32.gmra.mrb[0].mxu0 %v2035
        %v2807 = vpop.f32.mrb[0].mxu0
        %v2808 = vadd.f32 0.0, %v2807
        %v2809 = vpop.f32.mrb[0].mxu0
        %2810 = vmatprep.mubr.f32.mxu0 %v2199
        %2811 = vmatmul.mubr.f32.gmra.mrb[0].mxu0 %v2037
        %v2812 = vpop.f32.mrb[0].mxu0
        %v2813 = vadd.f32 0.0, %v2812
        %v2814 = vpop.f32.mrb[0].mxu0
        %2815 = vmatprep.mubr.f32.mxu0 %v2202
        %2816 = vmatmul.mubr.f32.gmra.mrb[0].mxu0 %v2039
        %v2817 = vpop.f32.mrb[0].mxu0
        %v2818 = vadd.f32 0.0, %v2817
        %v2819 = vpop.f32.mrb[0].mxu0
        %2820 = vmatprep.mubr.f32.mxu0 %v2205
        %2821 = vmatmul.mubr.f32.gmra.mrb[0].mxu0 %v2041
        %v2822 = vpop.f32.mrb[0].mxu0
        %v2823 = vadd.f32 0.0, %v2822
        %v2824 = vpop.f32.mrb[0].mxu0
        %2825 = vmatprep.mubr.f32.mxu0 %v2208
        %2826 = vmatmul.mubr.f32.gmra.mrb[0].mxu0 %v2043
        %v2827 = vpop.f32.mrb[0].mxu0
        %v2828 = vadd.f32 0.0, %v2827
        %v2829 = vpop.f32.mrb[0].mxu0
        %2830 = vmatprep.mubr.f32.mxu0 %v2211
        %2831 = vmatmul.mubr.f32.gmra.mrb[0].mxu0 %v2045
        %v2832 = vpop.f32.mrb[0].mxu0
        %v2833 = vadd.f32 0.0, %v2832
        %v2834 = vpop.f32.mrb[0].mxu0
        %2835 = vmatprep.mubr.f32.mxu0 %v2214
        %2836 = vmatmul.mubr.f32.gmra.mrb[0].mxu0 %v2047
        %v2837 = vpop.f32.mrb[0].mxu0
        %v2838 = vadd.f32 0.0, %v2837
        %v2839 = vpop.f32.mrb[0].mxu0
        %2840 = vmatprep.mubr.f32.mxu0 %v2217
        %2841 = vmatmul.mubr.f32.gmra.mrb[0].mxu0 %v2049
        %v2842 = vpop.f32.mrb[0].mxu0
        %v2843 = vadd.f32 0.0, %v2842
        %v2844 = vpop.f32.mrb[0].mxu0
        %2845 = vmatprep.mubr.f32.mxu0 %v2220
        %2846 = vmatmul.mubr.f32.gmra.mrb[0].mxu0 %v2051
        %v2847 = vpop.f32.mrb[0].mxu0
        %v2848 = vadd.f32 0.0, %v2847
        %v2849 = vpop.f32.mrb[0].mxu0
        %2850 = vmatprep.mubr.f32.mxu0 %v2223
        %2851 = vmatmul.mubr.f32.gmra.mrb[0].mxu0 %v2053
        %v2852 = vpop.f32.mrb[0].mxu0
        %v2853 = vadd.f32 0.0, %v2852
        %v2854 = vpop.f32.mrb[0].mxu0
        %2855 = vmatprep.mubr.f32.mxu0 %v2226
        %2856 = vmatmul.mubr.f32.gmra.mrb[0].mxu0 %v2055
        %v2857 = vpop.f32.mrb[0].mxu0
        %v2858 = vadd.f32 0.0, %v2857
        %v2859 = vpop.f32.mrb[0].mxu0
        %2860 = vmatprep.mubr.f32.mxu0 %v2229
        %2861 = vmatmul.mubr.f32.gmra.mrb[0].mxu0 %v2057
        %v2862 = vpop.f32.mrb[0].mxu0
        %v2863 = vadd.f32 0.0, %v2862
        %v2864 = vpop.f32.mrb[0].mxu0
        %2865 = vmatprep.mubr.f32.mxu0 %v2232
        %2866 = vmatmul.mubr.f32.gmra.mrb[0].mxu0 %v2059
        %v2867 = vpop.f32.mrb[0].mxu0
        %v2868 = vadd.f32 0.0, %v2867
        %v2869 = vpop.f32.mrb[0].mxu0
        %2870 = vmatprep.mubr.f32.mxu0 %v2235
        %2871 = vmatmul.mubr.f32.gmra.mrb[0].mxu0 %v2061
        %v2872 = vpop.f32.mrb[0].mxu0
        %v2873 = vadd.f32 0.0, %v2872
        %v2874 = vpop.f32.mrb[0].mxu0
        %2875 = vmatprep.mubr.f32.mxu0 %v2238
        %2876 = vmatmul.mubr.f32.gmra.mrb[0].mxu0 %v2063
        %v2877 = vpop.f32.mrb[0].mxu0
        %v2878 = vadd.f32 0.0, %v2877
        %v2879 = vpop.f32.mrb[0].mxu0
        %2880 = vdwg.mxu0
        %v2881 = vmax.f32 %v2307, %v2643
        %v2882 = vmax.f32 %v2312, %v2648
        %v2883 = vmax.f32 %v2317, %v2653
        %v2884 = vmax.f32 %v2322, %v2658
        %v2885 = vmax.f32 %v2327, %v2663
        %v2886 = vmax.f32 %v2332, %v2668
        %v2887 = vmax.f32 %v2337, %v2673
        %v2888 = vmax.f32 %v2342, %v2678
        %v2889 = vmax.f32 %v2347, %v2683
        %v2890 = vmax.f32 %v2352, %v2688
        %v2891 = vmax.f32 %v2357, %v2693
        %v2892 = vmax.f32 %v2362, %v2698
        %v2893 = vmax.f32 %v2367, %v2703
        %v2894 = vmax.f32 %v2372, %v2708
        %v2895 = vmax.f32 %v2377, %v2713
        %v2896 = vmax.f32 %v2382, %v2718
        %v2897 = vmax.f32 %v2387, %v2723
        %v2898 = vmax.f32 %v2392, %v2728
        %v2899 = vmax.f32 %v2397, %v2733
        %v2900 = vmax.f32 %v2402, %v2738
        %v2901 = vmax.f32 %v2407, %v2743
        %v2902 = vmax.f32 %v2412, %v2748
        %v2903 = vmax.f32 %v2417, %v2753
        %v2904 = vmax.f32 %v2422, %v2758
        %v2905 = vmax.f32 %v2427, %v2763
        %v2906 = vmax.f32 %v2432, %v2768
        %v2907 = vmax.f32 %v2437, %v2773
        %v2908 = vmax.f32 %v2442, %v2778
        %v2909 = vmax.f32 %v2447, %v2783
        %v2910 = vmax.f32 %v2452, %v2788
        %v2911 = vmax.f32 %v2457, %v2793
        %v2912 = vmax.f32 %v2462, %v2798
        %v2913 = vmax.f32 %v2467, %v2803
        %v2914 = vmax.f32 %v2472, %v2808
        %v2915 = vmax.f32 %v2477, %v2813
        %v2916 = vmax.f32 %v2482, %v2818
        %v2917 = vmax.f32 %v2487, %v2823
        %v2918 = vmax.f32 %v2492, %v2828
        %v2919 = vmax.f32 %v2497, %v2833
        %v2920 = vmax.f32 %v2502, %v2838
        %v2921 = vmax.f32 %v2507, %v2843
        %v2922 = vmax.f32 %v2512, %v2848
        %v2923 = vmax.f32 %v2517, %v2853
        %v2924 = vmax.f32 %v2522, %v2858
        %v2925 = vmax.f32 %v2527, %v2863
        %v2926 = vmax.f32 %v2532, %v2868
        %v2927 = vmax.f32 %v2537, %v2873
        %v2928 = vmax.f32 %v2542, %v2878
        %v2929 = vmax.f32 %v2881, 0.0
        %v2930 = vmax.f32 %v2882, 0.0
        %v2931 = vmax.f32 %v2883, 0.0
        %v2932 = vmax.f32 %v2884, 0.0
        %v2933 = vmax.f32 %v2885, 0.0
        %v2934 = vmax.f32 %v2886, 0.0
        %v2935 = vmax.f32 %v2887, 0.0
        %v2936 = vmax.f32 %v2888, 0.0
        %v2937 = vmax.f32 %v2889, 0.0
        %v2938 = vmax.f32 %v2890, 0.0
        %v2939 = vmax.f32 %v2891, 0.0
        %v2940 = vmax.f32 %v2892, 0.0
        %v2941 = vmax.f32 %v2893, 0.0
        %v2942 = vmax.f32 %v2894, 0.0
        %v2943 = vmax.f32 %v2895, 0.0
        %v2944 = vmax.f32 %v2896, 0.0
        %v2945 = vmax.f32 %v2897, 0.0
        %v2946 = vmax.f32 %v2898, 0.0
        %v2947 = vmax.f32 %v2899, 0.0
        %v2948 = vmax.f32 %v2900, 0.0
        %v2949 = vmax.f32 %v2901, 0.0
        %v2950 = vmax.f32 %v2902, 0.0
        %v2951 = vmax.f32 %v2903, 0.0
        %v2952 = vmax.f32 %v2904, 0.0
        %v2953 = vmax.f32 %v2905, 0.0
        %v2954 = vmax.f32 %v2906, 0.0
        %v2955 = vmax.f32 %v2907, 0.0
        %v2956 = vmax.f32 %v2908, 0.0
        %v2957 = vmax.f32 %v2909, 0.0
        %v2958 = vmax.f32 %v2910, 0.0
        %v2959 = vmax.f32 %v2911, 0.0
        %v2960 = vmax.f32 %v2912, 0.0
        %v2961 = vmax.f32 %v2913, 0.0
        %v2962 = vmax.f32 %v2914, 0.0
        %v2963 = vmax.f32 %v2915, 0.0
        %v2964 = vmax.f32 %v2916, 0.0
        %v2965 = vmax.f32 %v2917, 0.0
        %v2966 = vmax.f32 %v2918, 0.0
        %v2967 = vmax.f32 %v2919, 0.0
        %v2968 = vmax.f32 %v2920, 0.0
        %v2969 = vmax.f32 %v2921, 0.0
        %v2970 = vmax.f32 %v2922, 0.0
        %v2971 = vmax.f32 %v2923, 0.0
        %v2972 = vmax.f32 %v2924, 0.0
        %v2973 = vmax.f32 %v2925, 0.0
        %v2974 = vmax.f32 %v2926, 0.0
        %v2975 = vmax.f32 %v2927, 0.0
        %v2976 = vmax.f32 %v2928, 0.0
        %v2977 = vld [vmem:[%s4] sm:$0xff]
        %v2978 = vld [vmem:[%s4 + $0x8] sm:$0xff]
        %v2979 = vld [vmem:[%s4 + $0x10] sm:$0xff]
        %v2980 = vld [vmem:[%s4 + $0x18] sm:$0xff]
        %v2981 = vld [vmem:[%s4 + $0x20] sm:$0xff]
        %v2982 = vld [vmem:[%s4 + $0x28] sm:$0xff]
        %v2983 = vld [vmem:[%s4 + $0x30] sm:$0xff]
        %v2984 = vld [vmem:[%s4 + $0x38] sm:$0xff]
        %v2985 = vld [vmem:[%s4 + $0x40] sm:$0xff]
        %v2986 = vld [vmem:[%s4 + $0x48] sm:$0xff]
        %v2987 = vld [vmem:[%s4 + $0x50] sm:$0xff]
        %v2988 = vld [vmem:[%s4 + $0x58] sm:$0xff]
        %v2989 = vld [vmem:[%s4 + $0x60] sm:$0xff]
        %v2990 = vld [vmem:[%s4 + $0x68] sm:$0xff]
        %v2991 = vld [vmem:[%s4 + $0x70] sm:$0xff]
        %v2992 = vld [vmem:[%s4 + $0x78] sm:$0xff]
        %v2993 = vld [vmem:[%s4 + $0x80] sm:$0xff]
        %v2994 = vld [vmem:[%s4 + $0x88] sm:$0xff]
        %v2995 = vld [vmem:[%s4 + $0x90] sm:$0xff]
        %v2996 = vld [vmem:[%s4 + $0x98] sm:$0xff]
        %v2997 = vld [vmem:[%s4 + $0xa0] sm:$0xff]
        %v2998 = vld [vmem:[%s4 + $0xa8] sm:$0xff]
        %v2999 = vld [vmem:[%s4 + $0xb0] sm:$0xff]
        %v3000 = vld [vmem:[%s4 + $0xb8] sm:$0xff]
        %v3001 = vld [vmem:[%s4 + $0xc0] sm:$0xff]
        %v3002 = vld [vmem:[%s4 + $0xc8] sm:$0xff]
        %v3003 = vld [vmem:[%s4 + $0xd0] sm:$0xff]
        %v3004 = vld [vmem:[%s4 + $0xd8] sm:$0xff]
        %v3005 = vld [vmem:[%s4 + $0xe0] sm:$0xff]
        %v3006 = vld [vmem:[%s4 + $0xe8] sm:$0xff]
        %v3007 = vld [vmem:[%s4 + $0xf0] sm:$0xff]
        %v3008 = vld [vmem:[%s4 + $0xf8] sm:$0xff]
        %v3009 = vld [vmem:[%s4 + $0x100] sm:$0xff]
        %v3010 = vld [vmem:[%s4 + $0x108] sm:$0xff]
        %v3011 = vld [vmem:[%s4 + $0x110] sm:$0xff]
        %v3012 = vld [vmem:[%s4 + $0x118] sm:$0xff]
        %v3013 = vld [vmem:[%s4 + $0x120] sm:$0xff]
        %v3014 = vld [vmem:[%s4 + $0x128] sm:$0xff]
        %v3015 = vld [vmem:[%s4 + $0x130] sm:$0xff]
        %v3016 = vld [vmem:[%s4 + $0x138] sm:$0xff]
        %v3017 = vld [vmem:[%s4 + $0x140] sm:$0xff]
        %v3018 = vld [vmem:[%s4 + $0x148] sm:$0xff]
        %v3019 = vld [vmem:[%s4 + $0x150] sm:$0xff]
        %v3020 = vld [vmem:[%s4 + $0x158] sm:$0xff]
        %v3021 = vld [vmem:[%s4 + $0x160] sm:$0xff]
        %v3022 = vld [vmem:[%s4 + $0x168] sm:$0xff]
        %v3023 = vld [vmem:[%s4 + $0x170] sm:$0xff]
        %v3024 = vld [vmem:[%s4 + $0x178] sm:$0xff]
        %v3025 = vld [vmem:[%s4 + $0x180] sm:$0xff]
        %v3026 = vld [vmem:[%s4 + $0x188] sm:$0xff]
        %v3027 = vld [vmem:[%s4 + $0x190] sm:$0xff]
        %v3028 = vld [vmem:[%s4 + $0x198] sm:$0xff]
        %v3029 = vld [vmem:[%s4 + $0x1a0] sm:$0xff]
        %v3030 = vld [vmem:[%s4 + $0x1a8] sm:$0xff]
        %v3031 = vld [vmem:[%s4 + $0x1b0] sm:$0xff]
        %v3032 = vld [vmem:[%s4 + $0x1b8] sm:$0xff]
        %v3033 = vld [vmem:[%s4 + $0x1c0] sm:$0xff]
        %v3034 = vld [vmem:[%s4 + $0x1c8] sm:$0xff]
        %v3035 = vld [vmem:[%s4 + $0x1d0] sm:$0xff]
        %v3036 = vld [vmem:[%s4 + $0x1d8] sm:$0xff]
        %v3037 = vld [vmem:[%s4 + $0x1e0] sm:$0xff]
        %v3038 = vld [vmem:[%s4 + $0x1e8] sm:$0xff]
        %v3039 = vld [vmem:[%s4 + $0x1f0] sm:$0xff]
        %v3040 = vld [vmem:[%s4 + $0x1f8] sm:$0xff]
        %v3041 = vld [vmem:[%s4 + $0x200] sm:$0xff]
        %v3042 = vld [vmem:[%s4 + $0x208] sm:$0xff]
        %v3043 = vld [vmem:[%s4 + $0x210] sm:$0xff]
        %v3044 = vld [vmem:[%s4 + $0x218] sm:$0xff]
        %v3045 = vld [vmem:[%s4 + $0x220] sm:$0xff]
        %v3046 = vld [vmem:[%s4 + $0x228] sm:$0xff]
        %v3047 = vld [vmem:[%s4 + $0x230] sm:$0xff]
        %v3048 = vld [vmem:[%s4 + $0x238] sm:$0xff]
        %v3049 = vld [vmem:[%s4 + $0x240] sm:$0xff]
        %v3050 = vld [vmem:[%s4 + $0x248] sm:$0xff]
        %v3051 = vld [vmem:[%s4 + $0x250] sm:$0xff]
        %v3052 = vld [vmem:[%s4 + $0x258] sm:$0xff]
        %v3053 = vld [vmem:[%s4 + $0x260] sm:$0xff]
        %v3054 = vld [vmem:[%s4 + $0x268] sm:$0xff]
        %v3055 = vld [vmem:[%s4 + $0x270] sm:$0xff]
        %v3056 = vld [vmem:[%s4 + $0x278] sm:$0xff]
        %v3057 = vld [vmem:[%s4 + $0x280] sm:$0xff]
        %v3058 = vld [vmem:[%s4 + $0x288] sm:$0xff]
        %v3059 = vld [vmem:[%s4 + $0x290] sm:$0xff]
        %v3060 = vld [vmem:[%s4 + $0x298] sm:$0xff]
        %v3061 = vld [vmem:[%s4 + $0x2a0] sm:$0xff]
        %v3062 = vld [vmem:[%s4 + $0x2a8] sm:$0xff]
        %v3063 = vld [vmem:[%s4 + $0x2b0] sm:$0xff]
        %v3064 = vld [vmem:[%s4 + $0x2b8] sm:$0xff]
        %v3065 = vld [vmem:[%s4 + $0x2c0] sm:$0xff]
        %v3066 = vld [vmem:[%s4 + $0x2c8] sm:$0xff]
        %v3067 = vld [vmem:[%s4 + $0x2d0] sm:$0xff]
        %v3068 = vld [vmem:[%s4 + $0x2d8] sm:$0xff]
        %v3069 = vld [vmem:[%s4 + $0x2e0] sm:$0xff]
        %v3070 = vld [vmem:[%s4 + $0x2e8] sm:$0xff]
        %v3071 = vld [vmem:[%s4 + $0x2f0] sm:$0xff]
        %v3072 = vld [vmem:[%s4 + $0x2f8] sm:$0xff]
        %v3073 = vld [vmem:[%s4 + $0x300] sm:$0xff]
        %v3074 = vld [vmem:[%s4 + $0x308] sm:$0xff]
        %v3075 = vld [vmem:[%s4 + $0x310] sm:$0xff]
        %v3076 = vld [vmem:[%s4 + $0x318] sm:$0xff]
        %v3077 = vld [vmem:[%s4 + $0x320] sm:$0xff]
        %v3078 = vld [vmem:[%s4 + $0x328] sm:$0xff]
        %v3079 = vld [vmem:[%s4 + $0x330] sm:$0xff]
        %v3080 = vld [vmem:[%s4 + $0x338] sm:$0xff]
        %v3081 = vld [vmem:[%s4 + $0x340] sm:$0xff]
        %v3082 = vld [vmem:[%s4 + $0x348] sm:$0xff]
        %v3083 = vld [vmem:[%s4 + $0x350] sm:$0xff]
        %v3084 = vld [vmem:[%s4 + $0x358] sm:$0xff]
        %v3085 = vld [vmem:[%s4 + $0x360] sm:$0xff]
        %v3086 = vld [vmem:[%s4 + $0x368] sm:$0xff]
        %v3087 = vld [vmem:[%s4 + $0x370] sm:$0xff]
        %v3088 = vld [vmem:[%s4 + $0x378] sm:$0xff]
        %v3089 = vld [vmem:[%s4 + $0x380] sm:$0xff]
        %v3090 = vld [vmem:[%s4 + $0x388] sm:$0xff]
        %v3091 = vld [vmem:[%s4 + $0x390] sm:$0xff]
        %v3092 = vld [vmem:[%s4 + $0x398] sm:$0xff]
        %v3093 = vld [vmem:[%s4 + $0x3a0] sm:$0xff]
        %v3094 = vld [vmem:[%s4 + $0x3a8] sm:$0xff]
        %v3095 = vld [vmem:[%s4 + $0x3b0] sm:$0xff]
        %v3096 = vld [vmem:[%s4 + $0x3b8] sm:$0xff]
        %v3097 = vld [vmem:[%s4 + $0x3c0] sm:$0xff]
        %v3098 = vld [vmem:[%s4 + $0x3c8] sm:$0xff]
        %v3099 = vld [vmem:[%s4 + $0x3d0] sm:$0xff]
        %v3100 = vld [vmem:[%s4 + $0x3d8] sm:$0xff]
        %v3101 = vld [vmem:[%s4 + $0x3e0] sm:$0xff]
        %v3102 = vld [vmem:[%s4 + $0x3e8] sm:$0xff]
        %v3103 = vld [vmem:[%s4 + $0x3f0] sm:$0xff]
        %v3104 = vld [vmem:[%s4 + $0x3f8] sm:$0xff]
        %v3105 = vld [vmem:[%s4 + $0x400] sm:$0xff]
        %v3106 = vld [vmem:[%s4 + $0x408] sm:$0xff]
        %v3107 = vld [vmem:[%s4 + $0x410] sm:$0xff]
        %v3108 = vld [vmem:[%s4 + $0x418] sm:$0xff]
        %v3109 = vld [vmem:[%s4 + $0x420] sm:$0xff]
        %v3110 = vld [vmem:[%s4 + $0x428] sm:$0xff]
        %v3111 = vld [vmem:[%s4 + $0x430] sm:$0xff]
        %v3112 = vld [vmem:[%s4 + $0x438] sm:$0xff]
        %v3113 = vld [vmem:[%s4 + $0x440] sm:$0xff]
        %v3114 = vld [vmem:[%s4 + $0x448] sm:$0xff]
        %v3115 = vld [vmem:[%s4 + $0x450] sm:$0xff]
        %v3116 = vld [vmem:[%s4 + $0x458] sm:$0xff]
        %v3117 = vld [vmem:[%s4 + $0x460] sm:$0xff]
        %v3118 = vld [vmem:[%s4 + $0x468] sm:$0xff]
        %v3119 = vld [vmem:[%s4 + $0x470] sm:$0xff]
        %v3120 = vld [vmem:[%s4 + $0x478] sm:$0xff]
        %v3121 = vld [vmem:[%s4 + $0x480] sm:$0xff]
        %v3122 = vld [vmem:[%s4 + $0x488] sm:$0xff]
        %v3123 = vld [vmem:[%s4 + $0x490] sm:$0xff]
        %v3124 = vld [vmem:[%s4 + $0x498] sm:$0xff]
        %v3125 = vld [vmem:[%s4 + $0x4a0] sm:$0xff]
        %v3126 = vld [vmem:[%s4 + $0x4a8] sm:$0xff]
        %v3127 = vld [vmem:[%s4 + $0x4b0] sm:$0xff]
        %v3128 = vld [vmem:[%s4 + $0x4b8] sm:$0xff]
        %v3129 = vld [vmem:[%s4 + $0x4c0] sm:$0xff]
        %v3130 = vld [vmem:[%s4 + $0x4c8] sm:$0xff]
        %v3131 = vld [vmem:[%s4 + $0x4d0] sm:$0xff]
        %v3132 = vld [vmem:[%s4 + $0x4d8] sm:$0xff]
        %v3133 = vld [vmem:[%s4 + $0x4e0] sm:$0xff]
        %v3134 = vld [vmem:[%s4 + $0x4e8] sm:$0xff]
        %v3135 = vld [vmem:[%s4 + $0x4f0] sm:$0xff]
        %v3136 = vld [vmem:[%s4 + $0x4f8] sm:$0xff]
        %v3137 = vld [vmem:[%s5] sm:$0x3]
        %v3139 = vlaneseq
        %v3140 = vshrl.u32 %v3139, 7
        %v3141 = vsub.s32 0, %v3140
        %v3142 = vrot.slane %v3137, %v3141
        %v3143 = vlaneseq
        %v3144 = vshrl.u32 %v3143, 7
        %v3145 = vsub.s32 1, %v3144
        %v3146 = vrot.slane %v3137, %v3145
        %3149 = vmatprep.subr.mxu0 %v2978
        %3150 = vmatpush1.msra.mxu0 %v2977
        %3151 = vmatprep.subr.mxu0 %v2980
        %3152 = vmatpush1.msra.mxu0 %v2979
        %3153 = vmatprep.subr.mxu0 %v2982
        %3154 = vmatpush1.msra.mxu0 %v2981
        %3155 = vmatprep.subr.mxu0 %v2984
        %3156 = vmatpush1.msra.mxu0 %v2983
        %3157 = vmatprep.subr.mxu0 %v2986
        %3158 = vmatpush1.msra.mxu0 %v2985
        %3159 = vmatprep.subr.mxu0 %v2988
        %3160 = vmatpush1.msra.mxu0 %v2987
        %3161 = vmatprep.subr.mxu0 %v2990
        %3162 = vmatpush1.msra.mxu0 %v2989
        %3163 = vmatprep.subr.mxu0 %v2992
        %3164 = vmatpush1.msra.mxu0 %v2991
        %3165 = vmatprep.subr.mxu0 %v2994
        %3166 = vmatpush1.msra.mxu0 %v2993
        %3167 = vmatprep.subr.mxu0 %v2996
        %3168 = vmatpush1.msra.mxu0 %v2995
        %3169 = vmatprep.subr.mxu0 %v2998
        %3170 = vmatpush1.msra.mxu0 %v2997
        %3171 = vmatprep.subr.mxu0 %v3000
        %3172 = vmatpush1.msra.mxu0 %v2999
        %3173 = vmatprep.subr.mxu0 %v3002
        %3174 = vmatpush1.msra.mxu0 %v3001
        %3175 = vmatprep.subr.mxu0 %v3004
        %3176 = vmatpush1.msra.mxu0 %v3003
        %3177 = vmatprep.subr.mxu0 %v3006
        %3178 = vmatpush1.msra.mxu0 %v3005
        %3179 = vmatprep.subr.mxu0 %v3008
        %3180 = vmatpush1.msra.mxu0 %v3007
        %3181 = vmatprep.subr.mxu0 %v3010
        %3182 = vmatpush1.msra.mxu0 %v3009
        %3183 = vmatprep.subr.mxu0 %v3012
        %3184 = vmatpush1.msra.mxu0 %v3011
        %3185 = vmatprep.subr.mxu0 %v3014
        %3186 = vmatpush1.msra.mxu0 %v3013
        %3187 = vmatprep.subr.mxu0 %v3016
        %3188 = vmatpush1.msra.mxu0 %v3015
        %3189 = vmatprep.subr.mxu0 %v3018
        %3190 = vmatpush1.msra.mxu0 %v3017
        %3191 = vmatprep.subr.mxu0 %v3020
        %3192 = vmatpush1.msra.mxu0 %v3019
        %3193 = vmatprep.subr.mxu0 %v3022
        %3194 = vmatpush1.msra.mxu0 %v3021
        %3195 = vmatprep.subr.mxu0 %v3024
        %3196 = vmatpush1.msra.mxu0 %v3023
        %3197 = vmatprep.subr.mxu0 %v3026
        %3198 = vmatpush1.msra.mxu0 %v3025
        %3199 = vmatprep.subr.mxu0 %v3028
        %3200 = vmatpush1.msra.mxu0 %v3027
        %3201 = vmatprep.subr.mxu0 %v3030
        %3202 = vmatpush1.msra.mxu0 %v3029
        %3203 = vmatprep.subr.mxu0 %v3032
        %3204 = vmatpush1.msra.mxu0 %v3031
        %3205 = vmatprep.subr.mxu0 %v3034
        %3206 = vmatpush1.msra.mxu0 %v3033
        %3207 = vmatprep.subr.mxu0 %v3036
        %3208 = vmatpush1.msra.mxu0 %v3035
        %3209 = vmatprep.subr.mxu0 %v3038
        %3210 = vmatpush1.msra.mxu0 %v3037
        %3211 = vmatprep.subr.mxu0 %v3040
        %3212 = vmatpush1.msra.mxu0 %v3039
        %3213 = vmatprep.mubr.f32.mxu0 %v2933
        %3214 = vmatmul.mubr.f32.gmra.mrb[0].mxu0 %v2929
        %v3215 = vpop.f32.mrb[0].mxu0
        %v3216 = vadd.f32 %v3142, %v3215
        %v3217 = vpop.f32.mrb[0].mxu0
        %v3218 = vadd.f32 %v3146, %v3217
        %3219 = vmatprep.mubr.f32.mxu0 %v2934
        %3220 = vmatmul.mubr.f32.gmra.mrb[0].mxu0 %v2930
        %v3221 = vpop.f32.mrb[0].mxu0
        %v3222 = vadd.f32 %v3142, %v3221
        %v3223 = vpop.f32.mrb[0].mxu0
        %v3224 = vadd.f32 %v3146, %v3223
        %3225 = vmatprep.mubr.f32.mxu0 %v2935
        %3226 = vmatmul.mubr.f32.gmra.mrb[0].mxu0 %v2931
        %v3227 = vpop.f32.mrb[0].mxu0
        %v3228 = vadd.f32 %v3142, %v3227
        %v3229 = vpop.f32.mrb[0].mxu0
        %v3230 = vadd.f32 %v3146, %v3229
        %3231 = vmatprep.mubr.f32.mxu0 %v2936
        %3232 = vmatmul.mubr.f32.gmra.mrb[0].mxu0 %v2932
        %v3233 = vpop.f32.mrb[0].mxu0
        %v3234 = vadd.f32 %v3142, %v3233
        %v3235 = vpop.f32.mrb[0].mxu0
        %v3236 = vadd.f32 %v3146, %v3235
        %3237 = vmatprep.mubr.f32.mxu0 %v2937
        %3238 = vmatmul.mubr.f32.gmra.mrb[0].mxu0 %v2933
        %v3239 = vpop.f32.mrb[0].mxu0
        %v3240 = vadd.f32 %v3142, %v3239
        %v3241 = vpop.f32.mrb[0].mxu0
        %v3242 = vadd.f32 %v3146, %v3241
        %3243 = vmatprep.mubr.f32.mxu0 %v2938
        %3244 = vmatmul.mubr.f32.gmra.mrb[0].mxu0 %v2934
        %v3245 = vpop.f32.mrb[0].mxu0
        %v3246 = vadd.f32 %v3142, %v3245
        %v3247 = vpop.f32.mrb[0].mxu0
        %v3248 = vadd.f32 %v3146, %v3247
        %3249 = vmatprep.mubr.f32.mxu0 %v2939
        %3250 = vmatmul.mubr.f32.gmra.mrb[0].mxu0 %v2935
        %v3251 = vpop.f32.mrb[0].mxu0
        %v3252 = vadd.f32 %v3142, %v3251
        %v3253 = vpop.f32.mrb[0].mxu0
        %v3254 = vadd.f32 %v3146, %v3253
        %3255 = vmatprep.mubr.f32.mxu0 %v2940
        %3256 = vmatmul.mubr.f32.gmra.mrb[0].mxu0 %v2936
        %v3257 = vpop.f32.mrb[0].mxu0
        %v3258 = vadd.f32 %v3142, %v3257
        %v3259 = vpop.f32.mrb[0].mxu0
        %v3260 = vadd.f32 %v3146, %v3259
        %3261 = vmatprep.mubr.f32.mxu0 %v2941
        %3262 = vmatmul.mubr.f32.gmra.mrb[0].mxu0 %v2937
        %v3263 = vpop.f32.mrb[0].mxu0
        %v3264 = vadd.f32 %v3142, %v3263
        %v3265 = vpop.f32.mrb[0].mxu0
        %v3266 = vadd.f32 %v3146, %v3265
        %3267 = vmatprep.mubr.f32.mxu0 %v2942
        %3268 = vmatmul.mubr.f32.gmra.mrb[0].mxu0 %v2938
        %v3269 = vpop.f32.mrb[0].mxu0
        %v3270 = vadd.f32 %v3142, %v3269
        %v3271 = vpop.f32.mrb[0].mxu0
        %v3272 = vadd.f32 %v3146, %v3271
        %3273 = vmatprep.mubr.f32.mxu0 %v2943
        %3274 = vmatmul.mubr.f32.gmra.mrb[0].mxu0 %v2939
        %v3275 = vpop.f32.mrb[0].mxu0
        %v3276 = vadd.f32 %v3142, %v3275
        %v3277 = vpop.f32.mrb[0].mxu0
        %v3278 = vadd.f32 %v3146, %v3277
        %3279 = vmatprep.mubr.f32.mxu0 %v2944
        %3280 = vmatmul.mubr.f32.gmra.mrb[0].mxu0 %v2940
        %v3281 = vpop.f32.mrb[0].mxu0
        %v3282 = vadd.f32 %v3142, %v3281
        %v3283 = vpop.f32.mrb[0].mxu0
        %v3284 = vadd.f32 %v3146, %v3283
        %3285 = vmatprep.mubr.f32.mxu0 %v2945
        %3286 = vmatmul.mubr.f32.gmra.mrb[0].mxu0 %v2941
        %v3287 = vpop.f32.mrb[0].mxu0
        %v3288 = vadd.f32 %v3142, %v3287
        %v3289 = vpop.f32.mrb[0].mxu0
        %v3290 = vadd.f32 %v3146, %v3289
        %3291 = vmatprep.mubr.f32.mxu0 %v2946
        %3292 = vmatmul.mubr.f32.gmra.mrb[0].mxu0 %v2942
        %v3293 = vpop.f32.mrb[0].mxu0
        %v3294 = vadd.f32 %v3142, %v3293
        %v3295 = vpop.f32.mrb[0].mxu0
        %v3296 = vadd.f32 %v3146, %v3295
        %3297 = vmatprep.mubr.f32.mxu0 %v2947
        %3298 = vmatmul.mubr.f32.gmra.mrb[0].mxu0 %v2943
        %v3299 = vpop.f32.mrb[0].mxu0
        %v3300 = vadd.f32 %v3142, %v3299
        %v3301 = vpop.f32.mrb[0].mxu0
        %v3302 = vadd.f32 %v3146, %v3301
        %3303 = vmatprep.mubr.f32.mxu0 %v2948
        %3304 = vmatmul.mubr.f32.gmra.mrb[0].mxu0 %v2944
        %v3305 = vpop.f32.mrb[0].mxu0
        %v3306 = vadd.f32 %v3142, %v3305
        %v3307 = vpop.f32.mrb[0].mxu0
        %v3308 = vadd.f32 %v3146, %v3307
        %3309 = vmatprep.mubr.f32.mxu0 %v2949
        %3310 = vmatmul.mubr.f32.gmra.mrb[0].mxu0 %v2945
        %v3311 = vpop.f32.mrb[0].mxu0
        %v3312 = vadd.f32 %v3142, %v3311
        %v3313 = vpop.f32.mrb[0].mxu0
        %v3314 = vadd.f32 %v3146, %v3313
        %3315 = vmatprep.mubr.f32.mxu0 %v2950
        %3316 = vmatmul.mubr.f32.gmra.mrb[0].mxu0 %v2946
        %v3317 = vpop.f32.mrb[0].mxu0
        %v3318 = vadd.f32 %v3142, %v3317
        %v3319 = vpop.f32.mrb[0].mxu0
        %v3320 = vadd.f32 %v3146, %v3319
        %3321 = vmatprep.mubr.f32.mxu0 %v2951
        %3322 = vmatmul.mubr.f32.gmra.mrb[0].mxu0 %v2947
        %v3323 = vpop.f32.mrb[0].mxu0
        %v3324 = vadd.f32 %v3142, %v3323
        %v3325 = vpop.f32.mrb[0].mxu0
        %v3326 = vadd.f32 %v3146, %v3325
        %3327 = vmatprep.mubr.f32.mxu0 %v2952
        %3328 = vmatmul.mubr.f32.gmra.mrb[0].mxu0 %v2948
        %v3329 = vpop.f32.mrb[0].mxu0
        %v3330 = vadd.f32 %v3142, %v3329
        %v3331 = vpop.f32.mrb[0].mxu0
        %v3332 = vadd.f32 %v3146, %v3331
        %3333 = vmatprep.mubr.f32.mxu0 %v2953
        %3334 = vmatmul.mubr.f32.gmra.mrb[0].mxu0 %v2949
        %v3335 = vpop.f32.mrb[0].mxu0
        %v3336 = vadd.f32 %v3142, %v3335
        %v3337 = vpop.f32.mrb[0].mxu0
        %v3338 = vadd.f32 %v3146, %v3337
        %3339 = vmatprep.mubr.f32.mxu0 %v2954
        %3340 = vmatmul.mubr.f32.gmra.mrb[0].mxu0 %v2950
        %v3341 = vpop.f32.mrb[0].mxu0
        %v3342 = vadd.f32 %v3142, %v3341
        %v3343 = vpop.f32.mrb[0].mxu0
        %v3344 = vadd.f32 %v3146, %v3343
        %3345 = vmatprep.mubr.f32.mxu0 %v2955
        %3346 = vmatmul.mubr.f32.gmra.mrb[0].mxu0 %v2951
        %v3347 = vpop.f32.mrb[0].mxu0
        %v3348 = vadd.f32 %v3142, %v3347
        %v3349 = vpop.f32.mrb[0].mxu0
        %v3350 = vadd.f32 %v3146, %v3349
        %3351 = vmatprep.mubr.f32.mxu0 %v2956
        %3352 = vmatmul.mubr.f32.gmra.mrb[0].mxu0 %v2952
        %v3353 = vpop.f32.mrb[0].mxu0
        %v3354 = vadd.f32 %v3142, %v3353
        %v3355 = vpop.f32.mrb[0].mxu0
        %v3356 = vadd.f32 %v3146, %v3355
        %3357 = vmatprep.mubr.f32.mxu0 %v2957
        %3358 = vmatmul.mubr.f32.gmra.mrb[0].mxu0 %v2953
        %v3359 = vpop.f32.mrb[0].mxu0
        %v3360 = vadd.f32 %v3142, %v3359
        %v3361 = vpop.f32.mrb[0].mxu0
        %v3362 = vadd.f32 %v3146, %v3361
        %3363 = vmatprep.mubr.f32.mxu0 %v2958
        %3364 = vmatmul.mubr.f32.gmra.mrb[0].mxu0 %v2954
        %v3365 = vpop.f32.mrb[0].mxu0
        %v3366 = vadd.f32 %v3142, %v3365
        %v3367 = vpop.f32.mrb[0].mxu0
        %v3368 = vadd.f32 %v3146, %v3367
        %3369 = vmatprep.mubr.f32.mxu0 %v2959
        %3370 = vmatmul.mubr.f32.gmra.mrb[0].mxu0 %v2955
        %v3371 = vpop.f32.mrb[0].mxu0
        %v3372 = vadd.f32 %v3142, %v3371
        %v3373 = vpop.f32.mrb[0].mxu0
        %v3374 = vadd.f32 %v3146, %v3373
        %3375 = vmatprep.mubr.f32.mxu0 %v2960
        %3376 = vmatmul.mubr.f32.gmra.mrb[0].mxu0 %v2956
        %v3377 = vpop.f32.mrb[0].mxu0
        %v3378 = vadd.f32 %v3142, %v3377
        %v3379 = vpop.f32.mrb[0].mxu0
        %v3380 = vadd.f32 %v3146, %v3379
        %3381 = vmatprep.mubr.f32.mxu0 %v2961
        %3382 = vmatmul.mubr.f32.gmra.mrb[0].mxu0 %v2957
        %v3383 = vpop.f32.mrb[0].mxu0
        %v3384 = vadd.f32 %v3142, %v3383
        %v3385 = vpop.f32.mrb[0].mxu0
        %v3386 = vadd.f32 %v3146, %v3385
        %3387 = vmatprep.mubr.f32.mxu0 %v2962
        %3388 = vmatmul.mubr.f32.gmra.mrb[0].mxu0 %v2958
        %v3389 = vpop.f32.mrb[0].mxu0
        %v3390 = vadd.f32 %v3142, %v3389
        %v3391 = vpop.f32.mrb[0].mxu0
        %v3392 = vadd.f32 %v3146, %v3391
        %3393 = vmatprep.mubr.f32.mxu0 %v2963
        %3394 = vmatmul.mubr.f32.gmra.mrb[0].mxu0 %v2959
        %v3395 = vpop.f32.mrb[0].mxu0
        %v3396 = vadd.f32 %v3142, %v3395
        %v3397 = vpop.f32.mrb[0].mxu0
        %v3398 = vadd.f32 %v3146, %v3397
        %3399 = vmatprep.mubr.f32.mxu0 %v2964
        %3400 = vmatmul.mubr.f32.gmra.mrb[0].mxu0 %v2960
        %v3401 = vpop.f32.mrb[0].mxu0
        %v3402 = vadd.f32 %v3142, %v3401
        %v3403 = vpop.f32.mrb[0].mxu0
        %v3404 = vadd.f32 %v3146, %v3403
        %3405 = vdwg.mxu0
        %3406 = vmatprep.subr.mxu0 %v3042
        %3407 = vmatpush1.msra.mxu0 %v3041
        %3408 = vmatprep.subr.mxu0 %v3044
        %3409 = vmatpush1.msra.mxu0 %v3043
        %3410 = vmatprep.subr.mxu0 %v3046
        %3411 = vmatpush1.msra.mxu0 %v3045
        %3412 = vmatprep.subr.mxu0 %v3048
        %3413 = vmatpush1.msra.mxu0 %v3047
        %3414 = vmatprep.subr.mxu0 %v3050
        %3415 = vmatpush1.msra.mxu0 %v3049
        %3416 = vmatprep.subr.mxu0 %v3052
        %3417 = vmatpush1.msra.mxu0 %v3051
        %3418 = vmatprep.subr.mxu0 %v3054
        %3419 = vmatpush1.msra.mxu0 %v3053
        %3420 = vmatprep.subr.mxu0 %v3056
        %3421 = vmatpush1.msra.mxu0 %v3055
        %3422 = vmatprep.subr.mxu0 %v3058
        %3423 = vmatpush1.msra.mxu0 %v3057
        %3424 = vmatprep.subr.mxu0 %v3060
        %3425 = vmatpush1.msra.mxu0 %v3059
        %3426 = vmatprep.subr.mxu0 %v3062
        %3427 = vmatpush1.msra.mxu0 %v3061
        %3428 = vmatprep.subr.mxu0 %v3064
        %3429 = vmatpush1.msra.mxu0 %v3063
        %3430 = vmatprep.subr.mxu0 %v3066
        %3431 = vmatpush1.msra.mxu0 %v3065
        %3432 = vmatprep.subr.mxu0 %v3068
        %3433 = vmatpush1.msra.mxu0 %v3067
        %3434 = vmatprep.subr.mxu0 %v3070
        %3435 = vmatpush1.msra.mxu0 %v3069
        %3436 = vmatprep.subr.mxu0 %v3072
        %3437 = vmatpush1.msra.mxu0 %v3071
        %3438 = vmatprep.subr.mxu0 %v3074
        %3439 = vmatpush1.msra.mxu0 %v3073
        %3440 = vmatprep.subr.mxu0 %v3076
        %3441 = vmatpush1.msra.mxu0 %v3075
        %3442 = vmatprep.subr.mxu0 %v3078
        %3443 = vmatpush1.msra.mxu0 %v3077
        %3444 = vmatprep.subr.mxu0 %v3080
        %3445 = vmatpush1.msra.mxu0 %v3079
        %3446 = vmatprep.subr.mxu0 %v3082
        %3447 = vmatpush1.msra.mxu0 %v3081
        %3448 = vmatprep.subr.mxu0 %v3084
        %3449 = vmatpush1.msra.mxu0 %v3083
        %3450 = vmatprep.subr.mxu0 %v3086
        %3451 = vmatpush1.msra.mxu0 %v3085
        %3452 = vmatprep.subr.mxu0 %v3088
        %3453 = vmatpush1.msra.mxu0 %v3087
        %3454 = vmatprep.subr.mxu0 %v3090
        %3455 = vmatpush1.msra.mxu0 %v3089
        %3456 = vmatprep.subr.mxu0 %v3092
        %3457 = vmatpush1.msra.mxu0 %v3091
        %3458 = vmatprep.subr.mxu0 %v3094
        %3459 = vmatpush1.msra.mxu0 %v3093
        %3460 = vmatprep.subr.mxu0 %v3096
        %3461 = vmatpush1.msra.mxu0 %v3095
        %3462 = vmatprep.subr.mxu0 %v3098
        %3463 = vmatpush1.msra.mxu0 %v3097
        %3464 = vmatprep.subr.mxu0 %v3100
        %3465 = vmatpush1.msra.mxu0 %v3099
        %3466 = vmatprep.subr.mxu0 %v3102
        %3467 = vmatpush1.msra.mxu0 %v3101
        %3468 = vmatprep.subr.mxu0 %v3104
        %3469 = vmatpush1.msra.mxu0 %v3103
        %3470 = vmatprep.mubr.f32.mxu0 %v2941
        %3471 = vmatmul.mubr.f32.gmra.mrb[0].mxu0 %v2937
        %v3472 = vpop.f32.mrb[0].mxu0
        %v3473 = vadd.f32 %v3216, %v3472
        %v3474 = vpop.f32.mrb[0].mxu0
        %v3475 = vadd.f32 %v3218, %v3474
        %3476 = vmatprep.mubr.f32.mxu0 %v2942
        %3477 = vmatmul.mubr.f32.gmra.mrb[0].mxu0 %v2938
        %v3478 = vpop.f32.mrb[0].mxu0
        %v3479 = vadd.f32 %v3222, %v3478
        %v3480 = vpop.f32.mrb[0].mxu0
        %v3481 = vadd.f32 %v3224, %v3480
        %3482 = vmatprep.mubr.f32.mxu0 %v2943
        %3483 = vmatmul.mubr.f32.gmra.mrb[0].mxu0 %v2939
        %v3484 = vpop.f32.mrb[0].mxu0
        %v3485 = vadd.f32 %v3228, %v3484
        %v3486 = vpop.f32.mrb[0].mxu0
        %v3487 = vadd.f32 %v3230, %v3486
        %3488 = vmatprep.mubr.f32.mxu0 %v2944
        %3489 = vmatmul.mubr.f32.gmra.mrb[0].mxu0 %v2940
        %v3490 = vpop.f32.mrb[0].mxu0
        %v3491 = vadd.f32 %v3234, %v3490
        %v3492 = vpop.f32.mrb[0].mxu0
        %v3493 = vadd.f32 %v3236, %v3492
        %3494 = vmatprep.mubr.f32.mxu0 %v2945
        %3495 = vmatmul.mubr.f32.gmra.mrb[0].mxu0 %v2941
        %v3496 = vpop.f32.mrb[0].mxu0
        %v3497 = vadd.f32 %v3240, %v3496
        %v3498 = vpop.f32.mrb[0].mxu0
        %v3499 = vadd.f32 %v3242, %v3498
        %3500 = vmatprep.mubr.f32.mxu0 %v2946
        %3501 = vmatmul.mubr.f32.gmra.mrb[0].mxu0 %v2942
        %v3502 = vpop.f32.mrb[0].mxu0
        %v3503 = vadd.f32 %v3246, %v3502
        %v3504 = vpop.f32.mrb[0].mxu0
        %v3505 = vadd.f32 %v3248, %v3504
        %3506 = vmatprep.mubr.f32.mxu0 %v2947
        %3507 = vmatmul.mubr.f32.gmra.mrb[0].mxu0 %v2943
        %v3508 = vpop.f32.mrb[0].mxu0
        %v3509 = vadd.f32 %v3252, %v3508
        %v3510 = vpop.f32.mrb[0].mxu0
        %v3511 = vadd.f32 %v3254, %v3510
        %3512 = vmatprep.mubr.f32.mxu0 %v2948
        %3513 = vmatmul.mubr.f32.gmra.mrb[0].mxu0 %v2944
        %v3514 = vpop.f32.mrb[0].mxu0
        %v3515 = vadd.f32 %v3258, %v3514
        %v3516 = vpop.f32.mrb[0].mxu0
        %v3517 = vadd.f32 %v3260, %v3516
        %3518 = vmatprep.mubr.f32.mxu0 %v2949
        %3519 = vmatmul.mubr.f32.gmra.mrb[0].mxu0 %v2945
        %v3520 = vpop.f32.mrb[0].mxu0
        %v3521 = vadd.f32 %v3264, %v3520
        %v3522 = vpop.f32.mrb[0].mxu0
        %v3523 = vadd.f32 %v3266, %v3522
        %3524 = vmatprep.mubr.f32.mxu0 %v2950
        %3525 = vmatmul.mubr.f32.gmra.mrb[0].mxu0 %v2946
        %v3526 = vpop.f32.mrb[0].mxu0
        %v3527 = vadd.f32 %v3270, %v3526
        %v3528 = vpop.f32.mrb[0].mxu0
        %v3529 = vadd.f32 %v3272, %v3528
        %3530 = vmatprep.mubr.f32.mxu0 %v2951
        %3531 = vmatmul.mubr.f32.gmra.mrb[0].mxu0 %v2947
        %v3532 = vpop.f32.mrb[0].mxu0
        %v3533 = vadd.f32 %v3276, %v3532
        %v3534 = vpop.f32.mrb[0].mxu0
        %v3535 = vadd.f32 %v3278, %v3534
        %3536 = vmatprep.mubr.f32.mxu0 %v2952
        %3537 = vmatmul.mubr.f32.gmra.mrb[0].mxu0 %v2948
        %v3538 = vpop.f32.mrb[0].mxu0
        %v3539 = vadd.f32 %v3282, %v3538
        %v3540 = vpop.f32.mrb[0].mxu0
        %v3541 = vadd.f32 %v3284, %v3540
        %3542 = vmatprep.mubr.f32.mxu0 %v2953
        %3543 = vmatmul.mubr.f32.gmra.mrb[0].mxu0 %v2949
        %v3544 = vpop.f32.mrb[0].mxu0
        %v3545 = vadd.f32 %v3288, %v3544
        %v3546 = vpop.f32.mrb[0].mxu0
        %v3547 = vadd.f32 %v3290, %v3546
        %3548 = vmatprep.mubr.f32.mxu0 %v2954
        %3549 = vmatmul.mubr.f32.gmra.mrb[0].mxu0 %v2950
        %v3550 = vpop.f32.mrb[0].mxu0
        %v3551 = vadd.f32 %v3294, %v3550
        %v3552 = vpop.f32.mrb[0].mxu0
        %v3553 = vadd.f32 %v3296, %v3552
        %3554 = vmatprep.mubr.f32.mxu0 %v2955
        %3555 = vmatmul.mubr.f32.gmra.mrb[0].mxu0 %v2951
        %v3556 = vpop.f32.mrb[0].mxu0
        %v3557 = vadd.f32 %v3300, %v3556
        %v3558 = vpop.f32.mrb[0].mxu0
        %v3559 = vadd.f32 %v3302, %v3558
        %3560 = vmatprep.mubr.f32.mxu0 %v2956
        %3561 = vmatmul.mubr.f32.gmra.mrb[0].mxu0 %v2952
        %v3562 = vpop.f32.mrb[0].mxu0
        %v3563 = vadd.f32 %v3306, %v3562
        %v3564 = vpop.f32.mrb[0].mxu0
        %v3565 = vadd.f32 %v3308, %v3564
        %3566 = vmatprep.mubr.f32.mxu0 %v2957
        %3567 = vmatmul.mubr.f32.gmra.mrb[0].mxu0 %v2953
        %v3568 = vpop.f32.mrb[0].mxu0
        %v3569 = vadd.f32 %v3312, %v3568
        %v3570 = vpop.f32.mrb[0].mxu0
        %v3571 = vadd.f32 %v3314, %v3570
        %3572 = vmatprep.mubr.f32.mxu0 %v2958
        %3573 = vmatmul.mubr.f32.gmra.mrb[0].mxu0 %v2954
        %v3574 = vpop.f32.mrb[0].mxu0
        %v3575 = vadd.f32 %v3318, %v3574
        %v3576 = vpop.f32.mrb[0].mxu0
        %v3577 = vadd.f32 %v3320, %v3576
        %3578 = vmatprep.mubr.f32.mxu0 %v2959
        %3579 = vmatmul.mubr.f32.gmra.mrb[0].mxu0 %v2955
        %v3580 = vpop.f32.mrb[0].mxu0
        %v3581 = vadd.f32 %v3324, %v3580
        %v3582 = vpop.f32.mrb[0].mxu0
        %v3583 = vadd.f32 %v3326, %v3582
        %3584 = vmatprep.mubr.f32.mxu0 %v2960
        %3585 = vmatmul.mubr.f32.gmra.mrb[0].mxu0 %v2956
        %v3586 = vpop.f32.mrb[0].mxu0
        %v3587 = vadd.f32 %v3330, %v3586
        %v3588 = vpop.f32.mrb[0].mxu0
        %v3589 = vadd.f32 %v3332, %v3588
        %3590 = vmatprep.mubr.f32.mxu0 %v2961
        %3591 = vmatmul.mubr.f32.gmra.mrb[0].mxu0 %v2957
        %v3592 = vpop.f32.mrb[0].mxu0
        %v3593 = vadd.f32 %v3336, %v3592
        %v3594 = vpop.f32.mrb[0].mxu0
        %v3595 = vadd.f32 %v3338, %v3594
        %3596 = vmatprep.mubr.f32.mxu0 %v2962
        %3597 = vmatmul.mubr.f32.gmra.mrb[0].mxu0 %v2958
        %v3598 = vpop.f32.mrb[0].mxu0
        %v3599 = vadd.f32 %v3342, %v3598
        %v3600 = vpop.f32.mrb[0].mxu0
        %v3601 = vadd.f32 %v3344, %v3600
        %3602 = vmatprep.mubr.f32.mxu0 %v2963
        %3603 = vmatmul.mubr.f32.gmra.mrb[0].mxu0 %v2959
        %v3604 = vpop.f32.mrb[0].mxu0
        %v3605 = vadd.f32 %v3348, %v3604
        %v3606 = vpop.f32.mrb[0].mxu0
        %v3607 = vadd.f32 %v3350, %v3606
        %3608 = vmatprep.mubr.f32.mxu0 %v2964
        %3609 = vmatmul.mubr.f32.gmra.mrb[0].mxu0 %v2960
        %v3610 = vpop.f32.mrb[0].mxu0
        %v3611 = vadd.f32 %v3354, %v3610
        %v3612 = vpop.f32.mrb[0].mxu0
        %v3613 = vadd.f32 %v3356, %v3612
        %3614 = vmatprep.mubr.f32.mxu0 %v2965
        %3615 = vmatmul.mubr.f32.gmra.mrb[0].mxu0 %v2961
        %v3616 = vpop.f32.mrb[0].mxu0
        %v3617 = vadd.f32 %v3360, %v3616
        %v3618 = vpop.f32.mrb[0].mxu0
        %v3619 = vadd.f32 %v3362, %v3618
        %3620 = vmatprep.mubr.f32.mxu0 %v2966
        %3621 = vmatmul.mubr.f32.gmra.mrb[0].mxu0 %v2962
        %v3622 = vpop.f32.mrb[0].mxu0
        %v3623 = vadd.f32 %v3366, %v3622
        %v3624 = vpop.f32.mrb[0].mxu0
        %v3625 = vadd.f32 %v3368, %v3624
        %3626 = vmatprep.mubr.f32.mxu0 %v2967
        %3627 = vmatmul.mubr.f32.gmra.mrb[0].mxu0 %v2963
        %v3628 = vpop.f32.mrb[0].mxu0
        %v3629 = vadd.f32 %v3372, %v3628
        %v3630 = vpop.f32.mrb[0].mxu0
        %v3631 = vadd.f32 %v3374, %v3630
        %3632 = vmatprep.mubr.f32.mxu0 %v2968
        %3633 = vmatmul.mubr.f32.gmra.mrb[0].mxu0 %v2964
        %v3634 = vpop.f32.mrb[0].mxu0
        %v3635 = vadd.f32 %v3378, %v3634
        %v3636 = vpop.f32.mrb[0].mxu0
        %v3637 = vadd.f32 %v3380, %v3636
        %3638 = vmatprep.mubr.f32.mxu0 %v2969
        %3639 = vmatmul.mubr.f32.gmra.mrb[0].mxu0 %v2965
        %v3640 = vpop.f32.mrb[0].mxu0
        %v3641 = vadd.f32 %v3384, %v3640
        %v3642 = vpop.f32.mrb[0].mxu0
        %v3643 = vadd.f32 %v3386, %v3642
        %3644 = vmatprep.mubr.f32.mxu0 %v2970
        %3645 = vmatmul.mubr.f32.gmra.mrb[0].mxu0 %v2966
        %v3646 = vpop.f32.mrb[0].mxu0
        %v3647 = vadd.f32 %v3390, %v3646
        %v3648 = vpop.f32.mrb[0].mxu0
        %v3649 = vadd.f32 %v3392, %v3648
        %3650 = vmatprep.mubr.f32.mxu0 %v2971
        %3651 = vmatmul.mubr.f32.gmra.mrb[0].mxu0 %v2967
        %v3652 = vpop.f32.mrb[0].mxu0
        %v3653 = vadd.f32 %v3396, %v3652
        %v3654 = vpop.f32.mrb[0].mxu0
        %v3655 = vadd.f32 %v3398, %v3654
        %3656 = vmatprep.mubr.f32.mxu0 %v2972
        %3657 = vmatmul.mubr.f32.gmra.mrb[0].mxu0 %v2968
        %v3658 = vpop.f32.mrb[0].mxu0
        %v3659 = vadd.f32 %v3402, %v3658
        %v3660 = vpop.f32.mrb[0].mxu0
        %v3661 = vadd.f32 %v3404, %v3660
        %3662 = vdwg.mxu0
        %3663 = vmatprep.subr.mxu0 %v3106
        %3664 = vmatpush1.msra.mxu0 %v3105
        %3665 = vmatprep.subr.mxu0 %v3108
        %3666 = vmatpush1.msra.mxu0 %v3107
        %3667 = vmatprep.subr.mxu0 %v3110
        %3668 = vmatpush1.msra.mxu0 %v3109
        %3669 = vmatprep.subr.mxu0 %v3112
        %3670 = vmatpush1.msra.mxu0 %v3111
        %3671 = vmatprep.subr.mxu0 %v3114
        %3672 = vmatpush1.msra.mxu0 %v3113
        %3673 = vmatprep.subr.mxu0 %v3116
        %3674 = vmatpush1.msra.mxu0 %v3115
        %3675 = vmatprep.subr.mxu0 %v3118
        %3676 = vmatpush1.msra.mxu0 %v3117
        %3677 = vmatprep.subr.mxu0 %v3120
        %3678 = vmatpush1.msra.mxu0 %v3119
        %3679 = vmatprep.subr.mxu0 %v3122
        %3680 = vmatpush1.msra.mxu0 %v3121
        %3681 = vmatprep.subr.mxu0 %v3124
        %3682 = vmatpush1.msra.mxu0 %v3123
        %3683 = vmatprep.subr.mxu0 %v3126
        %3684 = vmatpush1.msra.mxu0 %v3125
        %3685 = vmatprep.subr.mxu0 %v3128
        %3686 = vmatpush1.msra.mxu0 %v3127
        %3687 = vmatprep.subr.mxu0 %v3130
        %3688 = vmatpush1.msra.mxu0 %v3129
        %3689 = vmatprep.subr.mxu0 %v3132
        %3690 = vmatpush1.msra.mxu0 %v3131
        %3691 = vmatprep.subr.mxu0 %v3134
        %3692 = vmatpush1.msra.mxu0 %v3133
        %3693 = vmatprep.subr.mxu0 %v3136
        %3694 = vmatpush1.msra.mxu0 %v3135
        %3695 = vmatprep.subr.mxu0 0.0
        %3696 = vmatpush1.msra.mxu0 0.0
        %3697 = vmatprep.subr.mxu0 0.0
        %3698 = vmatpush1.msra.mxu0 0.0
        %3699 = vmatprep.subr.mxu0 0.0
        %3700 = vmatpush1.msra.mxu0 0.0
        %3701 = vmatprep.subr.mxu0 0.0
        %3702 = vmatpush1.msra.mxu0 0.0
        %3703 = vmatprep.subr.mxu0 0.0
        %3704 = vmatpush1.msra.mxu0 0.0
        %3705 = vmatprep.subr.mxu0 0.0
        %3706 = vmatpush1.msra.mxu0 0.0
        %3707 = vmatprep.subr.mxu0 0.0
        %3708 = vmatpush1.msra.mxu0 0.0
        %3709 = vmatprep.subr.mxu0 0.0
        %3710 = vmatpush1.msra.mxu0 0.0
        %3711 = vmatprep.subr.mxu0 0.0
        %3712 = vmatpush1.msra.mxu0 0.0
        %3713 = vmatprep.subr.mxu0 0.0
        %3714 = vmatpush1.msra.mxu0 0.0
        %3715 = vmatprep.subr.mxu0 0.0
        %3716 = vmatpush1.msra.mxu0 0.0
        %3717 = vmatprep.subr.mxu0 0.0
        %3718 = vmatpush1.msra.mxu0 0.0
        %3719 = vmatprep.subr.mxu0 0.0
        %3720 = vmatpush1.msra.mxu0 0.0
        %3721 = vmatprep.subr.mxu0 0.0
        %3722 = vmatpush1.msra.mxu0 0.0
        %3723 = vmatprep.subr.mxu0 0.0
        %3724 = vmatpush1.msra.mxu0 0.0
        %3725 = vmatprep.subr.mxu0 0.0
        %3726 = vmatpush1.msra.mxu0 0.0
        %3727 = vmatprep.mubr.f32.mxu0 0.0
        %3728 = vmatmul.mubr.f32.gmra.mrb[0].mxu0 %v2945
        %v3729 = vpop.f32.mrb[0].mxu0
        %v3730 = vadd.f32 %v3473, %v3729
        %v3731 = vpop.f32.mrb[0].mxu0
        %v3732 = vadd.f32 %v3475, %v3731
        %3733 = vmatprep.mubr.f32.mxu0 0.0
        %3734 = vmatmul.mubr.f32.gmra.mrb[0].mxu0 %v2946
        %v3735 = vpop.f32.mrb[0].mxu0
        %v3736 = vadd.f32 %v3479, %v3735
        %v3737 = vpop.f32.mrb[0].mxu0
        %v3738 = vadd.f32 %v3481, %v3737
        %3739 = vmatprep.mubr.f32.mxu0 0.0
        %3740 = vmatmul.mubr.f32.gmra.mrb[0].mxu0 %v2947
        %v3741 = vpop.f32.mrb[0].mxu0
        %v3742 = vadd.f32 %v3485, %v3741
        %v3743 = vpop.f32.mrb[0].mxu0
        %v3744 = vadd.f32 %v3487, %v3743
        %3745 = vmatprep.mubr.f32.mxu0 0.0
        %3746 = vmatmul.mubr.f32.gmra.mrb[0].mxu0 %v2948
        %v3747 = vpop.f32.mrb[0].mxu0
        %v3748 = vadd.f32 %v3491, %v3747
        %v3749 = vpop.f32.mrb[0].mxu0
        %v3750 = vadd.f32 %v3493, %v3749
        %3751 = vmatprep.mubr.f32.mxu0 0.0
        %3752 = vmatmul.mubr.f32.gmra.mrb[0].mxu0 %v2949
        %v3753 = vpop.f32.mrb[0].mxu0
        %v3754 = vadd.f32 %v3497, %v3753
        %v3755 = vpop.f32.mrb[0].mxu0
        %v3756 = vadd.f32 %v3499, %v3755
        %3757 = vmatprep.mubr.f32.mxu0 0.0
        %3758 = vmatmul.mubr.f32.gmra.mrb[0].mxu0 %v2950
        %v3759 = vpop.f32.mrb[0].mxu0
        %v3760 = vadd.f32 %v3503, %v3759
        %v3761 = vpop.f32.mrb[0].mxu0
        %v3762 = vadd.f32 %v3505, %v3761
        %3763 = vmatprep.mubr.f32.mxu0 0.0
        %3764 = vmatmul.mubr.f32.gmra.mrb[0].mxu0 %v2951
        %v3765 = vpop.f32.mrb[0].mxu0
        %v3766 = vadd.f32 %v3509, %v3765
        %v3767 = vpop.f32.mrb[0].mxu0
        %v3768 = vadd.f32 %v3511, %v3767
        %3769 = vmatprep.mubr.f32.mxu0 0.0
        %3770 = vmatmul.mubr.f32.gmra.mrb[0].mxu0 %v2952
        %v3771 = vpop.f32.mrb[0].mxu0
        %v3772 = vadd.f32 %v3515, %v3771
        %v3773 = vpop.f32.mrb[0].mxu0
        %v3774 = vadd.f32 %v3517, %v3773
        %3775 = vmatprep.mubr.f32.mxu0 0.0
        %3776 = vmatmul.mubr.f32.gmra.mrb[0].mxu0 %v2953
        %v3777 = vpop.f32.mrb[0].mxu0
        %v3778 = vadd.f32 %v3521, %v3777
        %v3779 = vpop.f32.mrb[0].mxu0
        %v3780 = vadd.f32 %v3523, %v3779
        %3781 = vmatprep.mubr.f32.mxu0 0.0
        %3782 = vmatmul.mubr.f32.gmra.mrb[0].mxu0 %v2954
        %v3783 = vpop.f32.mrb[0].mxu0
        %v3784 = vadd.f32 %v3527, %v3783
        %v3785 = vpop.f32.mrb[0].mxu0
        %v3786 = vadd.f32 %v3529, %v3785
        %3787 = vmatprep.mubr.f32.mxu0 0.0
        %3788 = vmatmul.mubr.f32.gmra.mrb[0].mxu0 %v2955
        %v3789 = vpop.f32.mrb[0].mxu0
        %v3790 = vadd.f32 %v3533, %v3789
        %v3791 = vpop.f32.mrb[0].mxu0
        %v3792 = vadd.f32 %v3535, %v3791
        %3793 = vmatprep.mubr.f32.mxu0 0.0
        %3794 = vmatmul.mubr.f32.gmra.mrb[0].mxu0 %v2956
        %v3795 = vpop.f32.mrb[0].mxu0
        %v3796 = vadd.f32 %v3539, %v3795
        %v3797 = vpop.f32.mrb[0].mxu0
        %v3798 = vadd.f32 %v3541, %v3797
        %3799 = vmatprep.mubr.f32.mxu0 0.0
        %3800 = vmatmul.mubr.f32.gmra.mrb[0].mxu0 %v2957
        %v3801 = vpop.f32.mrb[0].mxu0
        %v3802 = vadd.f32 %v3545, %v3801
        %v3803 = vpop.f32.mrb[0].mxu0
        %v3804 = vadd.f32 %v3547, %v3803
        %3805 = vmatprep.mubr.f32.mxu0 0.0
        %3806 = vmatmul.mubr.f32.gmra.mrb[0].mxu0 %v2958
        %v3807 = vpop.f32.mrb[0].mxu0
        %v3808 = vadd.f32 %v3551, %v3807
        %v3809 = vpop.f32.mrb[0].mxu0
        %v3810 = vadd.f32 %v3553, %v3809
        %3811 = vmatprep.mubr.f32.mxu0 0.0
        %3812 = vmatmul.mubr.f32.gmra.mrb[0].mxu0 %v2959
        %v3813 = vpop.f32.mrb[0].mxu0
        %v3814 = vadd.f32 %v3557, %v3813
        %v3815 = vpop.f32.mrb[0].mxu0
        %v3816 = vadd.f32 %v3559, %v3815
        %3817 = vmatprep.mubr.f32.mxu0 0.0
        %3818 = vmatmul.mubr.f32.gmra.mrb[0].mxu0 %v2960
        %v3819 = vpop.f32.mrb[0].mxu0
        %v3820 = vadd.f32 %v3563, %v3819
        %v3821 = vpop.f32.mrb[0].mxu0
        %v3822 = vadd.f32 %v3565, %v3821
        %3823 = vmatprep.mubr.f32.mxu0 0.0
        %3824 = vmatmul.mubr.f32.gmra.mrb[0].mxu0 %v2961
        %v3825 = vpop.f32.mrb[0].mxu0
        %v3826 = vadd.f32 %v3569, %v3825
        %v3827 = vpop.f32.mrb[0].mxu0
        %v3828 = vadd.f32 %v3571, %v3827
        %3829 = vmatprep.mubr.f32.mxu0 0.0
        %3830 = vmatmul.mubr.f32.gmra.mrb[0].mxu0 %v2962
        %v3831 = vpop.f32.mrb[0].mxu0
        %v3832 = vadd.f32 %v3575, %v3831
        %v3833 = vpop.f32.mrb[0].mxu0
        %v3834 = vadd.f32 %v3577, %v3833
        %3835 = vmatprep.mubr.f32.mxu0 0.0
        %3836 = vmatmul.mubr.f32.gmra.mrb[0].mxu0 %v2963
        %v3837 = vpop.f32.mrb[0].mxu0
        %v3838 = vadd.f32 %v3581, %v3837
        %v3839 = vpop.f32.mrb[0].mxu0
        %v3840 = vadd.f32 %v3583, %v3839
        %3841 = vmatprep.mubr.f32.mxu0 0.0
        %3842 = vmatmul.mubr.f32.gmra.mrb[0].mxu0 %v2964
        %v3843 = vpop.f32.mrb[0].mxu0
        %v3844 = vadd.f32 %v3587, %v3843
        %v3845 = vpop.f32.mrb[0].mxu0
        %v3846 = vadd.f32 %v3589, %v3845
        %3847 = vmatprep.mubr.f32.mxu0 0.0
        %3848 = vmatmul.mubr.f32.gmra.mrb[0].mxu0 %v2965
        %v3849 = vpop.f32.mrb[0].mxu0
        %v3850 = vadd.f32 %v3593, %v3849
        %v3851 = vpop.f32.mrb[0].mxu0
        %v3852 = vadd.f32 %v3595, %v3851
        %3853 = vmatprep.mubr.f32.mxu0 0.0
        %3854 = vmatmul.mubr.f32.gmra.mrb[0].mxu0 %v2966
        %v3855 = vpop.f32.mrb[0].mxu0
        %v3856 = vadd.f32 %v3599, %v3855
        %v3857 = vpop.f32.mrb[0].mxu0
        %v3858 = vadd.f32 %v3601, %v3857
        %3859 = vmatprep.mubr.f32.mxu0 0.0
        %3860 = vmatmul.mubr.f32.gmra.mrb[0].mxu0 %v2967
        %v3861 = vpop.f32.mrb[0].mxu0
        %v3862 = vadd.f32 %v3605, %v3861
        %v3863 = vpop.f32.mrb[0].mxu0
        %v3864 = vadd.f32 %v3607, %v3863
        %3865 = vmatprep.mubr.f32.mxu0 0.0
        %3866 = vmatmul.mubr.f32.gmra.mrb[0].mxu0 %v2968
        %v3867 = vpop.f32.mrb[0].mxu0
        %v3868 = vadd.f32 %v3611, %v3867
        %v3869 = vpop.f32.mrb[0].mxu0
        %v3870 = vadd.f32 %v3613, %v3869
        %3871 = vmatprep.mubr.f32.mxu0 0.0
        %3872 = vmatmul.mubr.f32.gmra.mrb[0].mxu0 %v2969
        %v3873 = vpop.f32.mrb[0].mxu0
        %v3874 = vadd.f32 %v3617, %v3873
        %v3875 = vpop.f32.mrb[0].mxu0
        %v3876 = vadd.f32 %v3619, %v3875
        %3877 = vmatprep.mubr.f32.mxu0 0.0
        %3878 = vmatmul.mubr.f32.gmra.mrb[0].mxu0 %v2970
        %v3879 = vpop.f32.mrb[0].mxu0
        %v3880 = vadd.f32 %v3623, %v3879
        %v3881 = vpop.f32.mrb[0].mxu0
        %v3882 = vadd.f32 %v3625, %v3881
        %3883 = vmatprep.mubr.f32.mxu0 0.0
        %3884 = vmatmul.mubr.f32.gmra.mrb[0].mxu0 %v2971
        %v3885 = vpop.f32.mrb[0].mxu0
        %v3886 = vadd.f32 %v3629, %v3885
        %v3887 = vpop.f32.mrb[0].mxu0
        %v3888 = vadd.f32 %v3631, %v3887
        %3889 = vmatprep.mubr.f32.mxu0 0.0
        %3890 = vmatmul.mubr.f32.gmra.mrb[0].mxu0 %v2972
        %v3891 = vpop.f32.mrb[0].mxu0
        %v3892 = vadd.f32 %v3635, %v3891
        %v3893 = vpop.f32.mrb[0].mxu0
        %v3894 = vadd.f32 %v3637, %v3893
        %3895 = vmatprep.mubr.f32.mxu0 0.0
        %3896 = vmatmul.mubr.f32.gmra.mrb[0].mxu0 %v2973
        %v3897 = vpop.f32.mrb[0].mxu0
        %v3898 = vadd.f32 %v3641, %v3897
        %v3899 = vpop.f32.mrb[0].mxu0
        %v3900 = vadd.f32 %v3643, %v3899
        %3901 = vmatprep.mubr.f32.mxu0 0.0
        %3902 = vmatmul.mubr.f32.gmra.mrb[0].mxu0 %v2974
        %v3903 = vpop.f32.mrb[0].mxu0
        %v3904 = vadd.f32 %v3647, %v3903
        %v3905 = vpop.f32.mrb[0].mxu0
        %v3906 = vadd.f32 %v3649, %v3905
        %3907 = vmatprep.mubr.f32.mxu0 0.0
        %3908 = vmatmul.mubr.f32.gmra.mrb[0].mxu0 %v2975
        %v3909 = vpop.f32.mrb[0].mxu0
        %v3910 = vadd.f32 %v3653, %v3909
        %v3911 = vpop.f32.mrb[0].mxu0
        %v3912 = vadd.f32 %v3655, %v3911
        %3913 = vmatprep.mubr.f32.mxu0 0.0
        %3914 = vmatmul.mubr.f32.gmra.mrb[0].mxu0 %v2976
        %v3915 = vpop.f32.mrb[0].mxu0
        %v3916 = vadd.f32 %v3659, %v3915
        %v3917 = vpop.f32.mrb[0].mxu0
        %v3918 = vadd.f32 %v3661, %v3917
        %3919 = vdwg.mxu0
        %v3920 = vmax.f32 %v3730, %v3754
        %v3921 = vmax.f32 %v3732, %v3756
        %v3922 = vmax.f32 %v3736, %v3760
        %v3923 = vmax.f32 %v3738, %v3762
        %v3924 = vmax.f32 %v3742, %v3766
        %v3925 = vmax.f32 %v3744, %v3768
        %v3926 = vmax.f32 %v3748, %v3772
        %v3927 = vmax.f32 %v3750, %v3774
        %v3928 = vmax.f32 %v3778, %v3802
        %v3929 = vmax.f32 %v3780, %v3804
        %v3930 = vmax.f32 %v3784, %v3808
        %v3931 = vmax.f32 %v3786, %v3810
        %v3932 = vmax.f32 %v3790, %v3814
        %v3933 = vmax.f32 %v3792, %v3816
        %v3934 = vmax.f32 %v3796, %v3820
        %v3935 = vmax.f32 %v3798, %v3822
        %v3936 = vmax.f32 %v3826, %v3850
        %v3937 = vmax.f32 %v3828, %v3852
        %v3938 = vmax.f32 %v3832, %v3856
        %v3939 = vmax.f32 %v3834, %v3858
        %v3940 = vmax.f32 %v3838, %v3862
        %v3941 = vmax.f32 %v3840, %v3864
        %v3942 = vmax.f32 %v3844, %v3868
        %v3943 = vmax.f32 %v3846, %v3870
        %v3944 = vmax.f32 %v3874, %v3898
        %v3945 = vmax.f32 %v3876, %v3900
        %v3946 = vmax.f32 %v3880, %v3904
        %v3947 = vmax.f32 %v3882, %v3906
        %v3948 = vmax.f32 %v3886, %v3910
        %v3949 = vmax.f32 %v3888, %v3912
        %v3950 = vmax.f32 %v3892, %v3916
        %v3951 = vmax.f32 %v3894, %v3918
        %v3952 = vld [vmem:[%s6] sm:$0xff]
        %v3953 = vld [vmem:[%s6 + $0x8] sm:$0xff]
        %v3954 = vld [vmem:[%s6 + $0x10] sm:$0xff]
        %v3955 = vld [vmem:[%s6 + $0x18] sm:$0xff]
        %v3956 = vld [vmem:[%s6 + $0x20] sm:$0xff]
        %v3957 = vld [vmem:[%s6 + $0x28] sm:$0xff]
        %v3958 = vld [vmem:[%s6 + $0x30] sm:$0xff]
        %v3959 = vld [vmem:[%s6 + $0x38] sm:$0xff]
        %v3960 = vld [vmem:[%s6 + $0x40] sm:$0xff]
        %v3961 = vld [vmem:[%s6 + $0x48] sm:$0xff]
        %v3962 = vld [vmem:[%s6 + $0x50] sm:$0xff]
        %v3963 = vld [vmem:[%s6 + $0x58] sm:$0xff]
        %v3964 = vld [vmem:[%s6 + $0x60] sm:$0xff]
        %v3965 = vld [vmem:[%s6 + $0x68] sm:$0xff]
        %v3966 = vld [vmem:[%s6 + $0x70] sm:$0xff]
        %v3967 = vld [vmem:[%s6 + $0x78] sm:$0xff]
        %v3968 = vld [vmem:[%s6 + $0x80] sm:$0xff]
        %v3969 = vld [vmem:[%s6 + $0x88] sm:$0xff]
        %v3970 = vld [vmem:[%s6 + $0x90] sm:$0xff]
        %v3971 = vld [vmem:[%s6 + $0x98] sm:$0xff]
        %vm3972 = vcmask 261120
        %v3974 = vsel %vm3972, %v3921, 0
        %v3977 = vsel %vm3972, %v3923, 0
        %v3980 = vsel %vm3972, %v3925, 0
        %v3983 = vsel %vm3972, %v3927, 0
        %v3986 = vsel %vm3972, %v3929, 0
        %v3989 = vsel %vm3972, %v3931, 0
        %v3992 = vsel %vm3972, %v3933, 0
        %v3995 = vsel %vm3972, %v3935, 0
        %v3998 = vsel %vm3972, %v3937, 0
        %v4001 = vsel %vm3972, %v3939, 0
        %v4004 = vsel %vm3972, %v3941, 0
        %v4007 = vsel %vm3972, %v3943, 0
        %v4010 = vsel %vm3972, %v3945, 0
        %v4013 = vsel %vm3972, %v3947, 0
        %v4016 = vsel %vm3972, %v3949, 0
        %v4019 = vsel %vm3972, %v3951, 0
        %4021 = vmatprep.subr.mxu0 0.0
        %4022 = vmatpush1.msra.mxu0 %v3952
        %4023 = vmatprep.subr.mxu0 0.0
        %4024 = vmatpush1.msra.mxu0 %v3953
        %4025 = vmatprep.subr.mxu0 0.0
        %4026 = vmatpush1.msra.mxu0 %v3954
        %4027 = vmatprep.subr.mxu0 0.0
        %4028 = vmatpush1.msra.mxu0 %v3955
        %4029 = vmatprep.subr.mxu0 0.0
        %4030 = vmatpush1.msra.mxu0 %v3956
        %4031 = vmatprep.subr.mxu0 0.0
        %4032 = vmatpush1.msra.mxu0 %v3957
        %4033 = vmatprep.subr.mxu0 0.0
        %4034 = vmatpush1.msra.mxu0 %v3958
        %4035 = vmatprep.subr.mxu0 0.0
        %4036 = vmatpush1.msra.mxu0 %v3959
        %4037 = vmatprep.subr.mxu0 0.0
        %4038 = vmatpush1.msra.mxu0 %v3960
        %4039 = vmatprep.subr.mxu0 0.0
        %4040 = vmatpush1.msra.mxu0 %v3961
        %4041 = vmatprep.subr.mxu0 0.0
        %4042 = vmatpush1.msra.mxu0 %v3962
        %4043 = vmatprep.subr.mxu0 0.0
        %4044 = vmatpush1.msra.mxu0 %v3963
        %4045 = vmatprep.subr.mxu0 0.0
        %4046 = vmatpush1.msra.mxu0 %v3964
        %4047 = vmatprep.subr.mxu0 0.0
        %4048 = vmatpush1.msra.mxu0 %v3965
        %4049 = vmatprep.subr.mxu0 0.0
        %4050 = vmatpush1.msra.mxu0 %v3966
        %4051 = vmatprep.subr.mxu0 0.0
        %4052 = vmatpush1.msra.mxu0 %v3967
        %4053 = vmatprep.subr.mxu0 0.0
        %4054 = vmatpush1.msra.mxu0 %v3968
        %4055 = vmatprep.subr.mxu0 0.0
        %4056 = vmatpush1.msra.mxu0 %v3969
        %4057 = vmatprep.subr.mxu0 0.0
        %4058 = vmatpush1.msra.mxu0 %v3970
        %4059 = vmatprep.subr.mxu0 0.0
        %4060 = vmatpush1.msra.mxu0 %v3971
        %4061 = vmatprep.subr.mxu0 0.0
        %4062 = vmatpush1.msra.mxu0 0.0
        %4063 = vmatprep.subr.mxu0 0.0
        %4064 = vmatpush1.msra.mxu0 0.0
        %4065 = vmatprep.subr.mxu0 0.0
        %4066 = vmatpush1.msra.mxu0 0.0
        %4067 = vmatprep.subr.mxu0 0.0
        %4068 = vmatpush1.msra.mxu0 0.0
        %4069 = vmatprep.subr.mxu0 0.0
        %4070 = vmatpush1.msra.mxu0 0.0
        %4071 = vmatprep.subr.mxu0 0.0
        %4072 = vmatpush1.msra.mxu0 0.0
        %4073 = vmatprep.subr.mxu0 0.0
        %4074 = vmatpush1.msra.mxu0 0.0
        %4075 = vmatprep.subr.mxu0 0.0
        %4076 = vmatpush1.msra.mxu0 0.0
        %4077 = vmatprep.subr.mxu0 0.0
        %4078 = vmatpush1.msra.mxu0 0.0
        %4079 = vmatprep.subr.mxu0 0.0
        %4080 = vmatpush1.msra.mxu0 0.0
        %4081 = vmatprep.subr.mxu0 0.0
        %4082 = vmatpush1.msra.mxu0 0.0
        %4083 = vmatprep.subr.mxu0 0.0
        %4084 = vmatpush1.msra.mxu0 0.0
        %4085 = vmatprep.mubr.f32.mxu0 %v3974
        %4086 = vmatmul.mubr.f32.gmra.mrb[0].mxu0 %v3920
        %v4087 = vpop.f32.mrb[0].mxu0
        %v4088 = vadd.f32 0.0, %v4087
        %v4089 = vpop.f32.mrb[0].mxu0
        %4090 = vmatprep.mubr.f32.mxu0 %v3977
        %4091 = vmatmul.mubr.f32.gmra.mrb[0].mxu0 %v3922
        %v4092 = vpop.f32.mrb[0].mxu0
        %v4093 = vadd.f32 0.0, %v4092
        %v4094 = vpop.f32.mrb[0].mxu0
        %4095 = vmatprep.mubr.f32.mxu0 %v3980
        %4096 = vmatmul.mubr.f32.gmra.mrb[0].mxu0 %v3924
        %v4097 = vpop.f32.mrb[0].mxu0
        %v4098 = vadd.f32 0.0, %v4097
        %v4099 = vpop.f32.mrb[0].mxu0
        %4100 = vmatprep.mubr.f32.mxu0 %v3983
        %4101 = vmatmul.mubr.f32.gmra.mrb[0].mxu0 %v3926
        %v4102 = vpop.f32.mrb[0].mxu0
        %v4103 = vadd.f32 0.0, %v4102
        %v4104 = vpop.f32.mrb[0].mxu0
        %4105 = vmatprep.mubr.f32.mxu0 %v3986
        %4106 = vmatmul.mubr.f32.gmra.mrb[0].mxu0 %v3928
        %v4107 = vpop.f32.mrb[0].mxu0
        %v4108 = vadd.f32 0.0, %v4107
        %v4109 = vpop.f32.mrb[0].mxu0
        %4110 = vmatprep.mubr.f32.mxu0 %v3989
        %4111 = vmatmul.mubr.f32.gmra.mrb[0].mxu0 %v3930
        %v4112 = vpop.f32.mrb[0].mxu0
        %v4113 = vadd.f32 0.0, %v4112
        %v4114 = vpop.f32.mrb[0].mxu0
        %4115 = vmatprep.mubr.f32.mxu0 %v3992
        %4116 = vmatmul.mubr.f32.gmra.mrb[0].mxu0 %v3932
        %v4117 = vpop.f32.mrb[0].mxu0
        %v4118 = vadd.f32 0.0, %v4117
        %v4119 = vpop.f32.mrb[0].mxu0
        %4120 = vmatprep.mubr.f32.mxu0 %v3995
        %4121 = vmatmul.mubr.f32.gmra.mrb[0].mxu0 %v3934
        %v4122 = vpop.f32.mrb[0].mxu0
        %v4123 = vadd.f32 0.0, %v4122
        %v4124 = vpop.f32.mrb[0].mxu0
        %4125 = vmatprep.mubr.f32.mxu0 %v3998
        %4126 = vmatmul.mubr.f32.gmra.mrb[0].mxu0 %v3936
        %v4127 = vpop.f32.mrb[0].mxu0
        %v4128 = vadd.f32 0.0, %v4127
        %v4129 = vpop.f32.mrb[0].mxu0
        %4130 = vmatprep.mubr.f32.mxu0 %v4001
        %4131 = vmatmul.mubr.f32.gmra.mrb[0].mxu0 %v3938
        %v4132 = vpop.f32.mrb[0].mxu0
        %v4133 = vadd.f32 0.0, %v4132
        %v4134 = vpop.f32.mrb[0].mxu0
        %4135 = vmatprep.mubr.f32.mxu0 %v4004
        %4136 = vmatmul.mubr.f32.gmra.mrb[0].mxu0 %v3940
        %v4137 = vpop.f32.mrb[0].mxu0
        %v4138 = vadd.f32 0.0, %v4137
        %v4139 = vpop.f32.mrb[0].mxu0
        %4140 = vmatprep.mubr.f32.mxu0 %v4007
        %4141 = vmatmul.mubr.f32.gmra.mrb[0].mxu0 %v3942
        %v4142 = vpop.f32.mrb[0].mxu0
        %v4143 = vadd.f32 0.0, %v4142
        %v4144 = vpop.f32.mrb[0].mxu0
        %4145 = vmatprep.mubr.f32.mxu0 %v4010
        %4146 = vmatmul.mubr.f32.gmra.mrb[0].mxu0 %v3944
        %v4147 = vpop.f32.mrb[0].mxu0
        %v4148 = vadd.f32 0.0, %v4147
        %v4149 = vpop.f32.mrb[0].mxu0
        %4150 = vmatprep.mubr.f32.mxu0 %v4013
        %4151 = vmatmul.mubr.f32.gmra.mrb[0].mxu0 %v3946
        %v4152 = vpop.f32.mrb[0].mxu0
        %v4153 = vadd.f32 0.0, %v4152
        %v4154 = vpop.f32.mrb[0].mxu0
        %4155 = vmatprep.mubr.f32.mxu0 %v4016
        %4156 = vmatmul.mubr.f32.gmra.mrb[0].mxu0 %v3948
        %v4157 = vpop.f32.mrb[0].mxu0
        %v4158 = vadd.f32 0.0, %v4157
        %v4159 = vpop.f32.mrb[0].mxu0
        %4160 = vmatprep.mubr.f32.mxu0 %v4019
        %4161 = vmatmul.mubr.f32.gmra.mrb[0].mxu0 %v3950
        %v4162 = vpop.f32.mrb[0].mxu0
        %v4163 = vadd.f32 0.0, %v4162
        %v4164 = vpop.f32.mrb[0].mxu0
        %4165 = vdwg.mxu0
        %s4166 = scalar_lea.vmem %s6, 160
        %v4167 = vld [vmem:[%s4166] sm:$0xff]
        %v4168 = vld [vmem:[%s4166 + $0x8] sm:$0xff]
        %v4169 = vld [vmem:[%s4166 + $0x10] sm:$0xff]
        %v4170 = vld [vmem:[%s4166 + $0x18] sm:$0xff]
        %v4171 = vld [vmem:[%s4166 + $0x20] sm:$0xff]
        %v4172 = vld [vmem:[%s4166 + $0x28] sm:$0xff]
        %v4173 = vld [vmem:[%s4166 + $0x30] sm:$0xff]
        %v4174 = vld [vmem:[%s4166 + $0x38] sm:$0xff]
        %v4175 = vld [vmem:[%s4166 + $0x40] sm:$0xff]
        %v4176 = vld [vmem:[%s4166 + $0x48] sm:$0xff]
        %v4177 = vld [vmem:[%s4166 + $0x50] sm:$0xff]
        %v4178 = vld [vmem:[%s4166 + $0x58] sm:$0xff]
        %v4179 = vld [vmem:[%s4166 + $0x60] sm:$0xff]
        %v4180 = vld [vmem:[%s4166 + $0x68] sm:$0xff]
        %v4181 = vld [vmem:[%s4166 + $0x70] sm:$0xff]
        %v4182 = vld [vmem:[%s4166 + $0x78] sm:$0xff]
        %v4183 = vld [vmem:[%s4166 + $0x80] sm:$0xff]
        %v4184 = vld [vmem:[%s4166 + $0x88] sm:$0xff]
        %v4185 = vld [vmem:[%s4166 + $0x90] sm:$0xff]
        %v4186 = vld [vmem:[%s4166 + $0x98] sm:$0xff]
        %4187 = vmatprep.subr.mxu0 0.0
        %4188 = vmatpush1.msra.mxu0 %v4167
        %4189 = vmatprep.subr.mxu0 0.0
        %4190 = vmatpush1.msra.mxu0 %v4168
        %4191 = vmatprep.subr.mxu0 0.0
        %4192 = vmatpush1.msra.mxu0 %v4169
        %4193 = vmatprep.subr.mxu0 0.0
        %4194 = vmatpush1.msra.mxu0 %v4170
        %4195 = vmatprep.subr.mxu0 0.0
        %4196 = vmatpush1.msra.mxu0 %v4171
        %4197 = vmatprep.subr.mxu0 0.0
        %4198 = vmatpush1.msra.mxu0 %v4172
        %4199 = vmatprep.subr.mxu0 0.0
        %4200 = vmatpush1.msra.mxu0 %v4173
        %4201 = vmatprep.subr.mxu0 0.0
        %4202 = vmatpush1.msra.mxu0 %v4174
        %4203 = vmatprep.subr.mxu0 0.0
        %4204 = vmatpush1.msra.mxu0 %v4175
        %4205 = vmatprep.subr.mxu0 0.0
        %4206 = vmatpush1.msra.mxu0 %v4176
        %4207 = vmatprep.subr.mxu0 0.0
        %4208 = vmatpush1.msra.mxu0 %v4177
        %4209 = vmatprep.subr.mxu0 0.0
        %4210 = vmatpush1.msra.mxu0 %v4178
        %4211 = vmatprep.subr.mxu0 0.0
        %4212 = vmatpush1.msra.mxu0 %v4179
        %4213 = vmatprep.subr.mxu0 0.0
        %4214 = vmatpush1.msra.mxu0 %v4180
        %4215 = vmatprep.subr.mxu0 0.0
        %4216 = vmatpush1.msra.mxu0 %v4181
        %4217 = vmatprep.subr.mxu0 0.0
        %4218 = vmatpush1.msra.mxu0 %v4182
        %4219 = vmatprep.subr.mxu0 0.0
        %4220 = vmatpush1.msra.mxu0 %v4183
        %4221 = vmatprep.subr.mxu0 0.0
        %4222 = vmatpush1.msra.mxu0 %v4184
        %4223 = vmatprep.subr.mxu0 0.0
        %4224 = vmatpush1.msra.mxu0 %v4185
        %4225 = vmatprep.subr.mxu0 0.0
        %4226 = vmatpush1.msra.mxu0 %v4186
        %4227 = vmatprep.subr.mxu0 0.0
        %4228 = vmatpush1.msra.mxu0 0.0
        %4229 = vmatprep.subr.mxu0 0.0
        %4230 = vmatpush1.msra.mxu0 0.0
        %4231 = vmatprep.subr.mxu0 0.0
        %4232 = vmatpush1.msra.mxu0 0.0
        %4233 = vmatprep.subr.mxu0 0.0
        %4234 = vmatpush1.msra.mxu0 0.0
        %4235 = vmatprep.subr.mxu0 0.0
        %4236 = vmatpush1.msra.mxu0 0.0
        %4237 = vmatprep.subr.mxu0 0.0
        %4238 = vmatpush1.msra.mxu0 0.0
        %4239 = vmatprep.subr.mxu0 0.0
        %4240 = vmatpush1.msra.mxu0 0.0
        %4241 = vmatprep.subr.mxu0 0.0
        %4242 = vmatpush1.msra.mxu0 0.0
        %4243 = vmatprep.subr.mxu0 0.0
        %4244 = vmatpush1.msra.mxu0 0.0
        %4245 = vmatprep.subr.mxu0 0.0
        %4246 = vmatpush1.msra.mxu0 0.0
        %4247 = vmatprep.subr.mxu0 0.0
        %4248 = vmatpush1.msra.mxu0 0.0
        %4249 = vmatprep.subr.mxu0 0.0
        %4250 = vmatpush1.msra.mxu0 0.0
        %4251 = vmatprep.mubr.f32.mxu0 %v3974
        %4252 = vmatmul.mubr.f32.gmra.mrb[0].mxu0 %v3920
        %v4253 = vpop.f32.mrb[0].mxu0
        %v4254 = vadd.f32 0.0, %v4253
        %v4255 = vpop.f32.mrb[0].mxu0
        %4256 = vmatprep.mubr.f32.mxu0 %v3977
        %4257 = vmatmul.mubr.f32.gmra.mrb[0].mxu0 %v3922
        %v4258 = vpop.f32.mrb[0].mxu0
        %v4259 = vadd.f32 0.0, %v4258
        %v4260 = vpop.f32.mrb[0].mxu0
        %4261 = vmatprep.mubr.f32.mxu0 %v3980
        %4262 = vmatmul.mubr.f32.gmra.mrb[0].mxu0 %v3924
        %v4263 = vpop.f32.mrb[0].mxu0
        %v4264 = vadd.f32 0.0, %v4263
        %v4265 = vpop.f32.mrb[0].mxu0
        %4266 = vmatprep.mubr.f32.mxu0 %v3983
        %4267 = vmatmul.mubr.f32.gmra.mrb[0].mxu0 %v3926
        %v4268 = vpop.f32.mrb[0].mxu0
        %v4269 = vadd.f32 0.0, %v4268
        %v4270 = vpop.f32.mrb[0].mxu0
        %4271 = vmatprep.mubr.f32.mxu0 %v3986
        %4272 = vmatmul.mubr.f32.gmra.mrb[0].mxu0 %v3928
        %v4273 = vpop.f32.mrb[0].mxu0
        %v4274 = vadd.f32 0.0, %v4273
        %v4275 = vpop.f32.mrb[0].mxu0
        %4276 = vmatprep.mubr.f32.mxu0 %v3989
        %4277 = vmatmul.mubr.f32.gmra.mrb[0].mxu0 %v3930
        %v4278 = vpop.f32.mrb[0].mxu0
        %v4279 = vadd.f32 0.0, %v4278
        %v4280 = vpop.f32.mrb[0].mxu0
        %4281 = vmatprep.mubr.f32.mxu0 %v3992
        %4282 = vmatmul.mubr.f32.gmra.mrb[0].mxu0 %v3932
        %v4283 = vpop.f32.mrb[0].mxu0
        %v4284 = vadd.f32 0.0, %v4283
        %v4285 = vpop.f32.mrb[0].mxu0
        %4286 = vmatprep.mubr.f32.mxu0 %v3995
        %4287 = vmatmul.mubr.f32.gmra.mrb[0].mxu0 %v3934
        %v4288 = vpop.f32.mrb[0].mxu0
        %v4289 = vadd.f32 0.0, %v4288
        %v4290 = vpop.f32.mrb[0].mxu0
        %4291 = vmatprep.mubr.f32.mxu0 %v3998
        %4292 = vmatmul.mubr.f32.gmra.mrb[0].mxu0 %v3936
        %v4293 = vpop.f32.mrb[0].mxu0
        %v4294 = vadd.f32 0.0, %v4293
        %v4295 = vpop.f32.mrb[0].mxu0
        %4296 = vmatprep.mubr.f32.mxu0 %v4001
        %4297 = vmatmul.mubr.f32.gmra.mrb[0].mxu0 %v3938
        %v4298 = vpop.f32.mrb[0].mxu0
        %v4299 = vadd.f32 0.0, %v4298
        %v4300 = vpop.f32.mrb[0].mxu0
        %4301 = vmatprep.mubr.f32.mxu0 %v4004
        %4302 = vmatmul.mubr.f32.gmra.mrb[0].mxu0 %v3940
        %v4303 = vpop.f32.mrb[0].mxu0
        %v4304 = vadd.f32 0.0, %v4303
        %v4305 = vpop.f32.mrb[0].mxu0
        %4306 = vmatprep.mubr.f32.mxu0 %v4007
        %4307 = vmatmul.mubr.f32.gmra.mrb[0].mxu0 %v3942
        %v4308 = vpop.f32.mrb[0].mxu0
        %v4309 = vadd.f32 0.0, %v4308
        %v4310 = vpop.f32.mrb[0].mxu0
        %4311 = vmatprep.mubr.f32.mxu0 %v4010
        %4312 = vmatmul.mubr.f32.gmra.mrb[0].mxu0 %v3944
        %v4313 = vpop.f32.mrb[0].mxu0
        %v4314 = vadd.f32 0.0, %v4313
        %v4315 = vpop.f32.mrb[0].mxu0
        %4316 = vmatprep.mubr.f32.mxu0 %v4013
        %4317 = vmatmul.mubr.f32.gmra.mrb[0].mxu0 %v3946
        %v4318 = vpop.f32.mrb[0].mxu0
        %v4319 = vadd.f32 0.0, %v4318
        %v4320 = vpop.f32.mrb[0].mxu0
        %4321 = vmatprep.mubr.f32.mxu0 %v4016
        %4322 = vmatmul.mubr.f32.gmra.mrb[0].mxu0 %v3948
        %v4323 = vpop.f32.mrb[0].mxu0
        %v4324 = vadd.f32 0.0, %v4323
        %v4325 = vpop.f32.mrb[0].mxu0
        %4326 = vmatprep.mubr.f32.mxu0 %v4019
        %4327 = vmatmul.mubr.f32.gmra.mrb[0].mxu0 %v3950
        %v4328 = vpop.f32.mrb[0].mxu0
        %v4329 = vadd.f32 0.0, %v4328
        %v4330 = vpop.f32.mrb[0].mxu0
        %4331 = vdwg.mxu0
        %v4332 = vmax.f32 %v4088, %v4254
        %v4333 = vmax.f32 %v4093, %v4259
        %v4334 = vmax.f32 %v4098, %v4264
        %v4335 = vmax.f32 %v4103, %v4269
        %v4336 = vmax.f32 %v4108, %v4274
        %v4337 = vmax.f32 %v4113, %v4279
        %v4338 = vmax.f32 %v4118, %v4284
        %v4339 = vmax.f32 %v4123, %v4289
        %v4340 = vmax.f32 %v4128, %v4294
        %v4341 = vmax.f32 %v4133, %v4299
        %v4342 = vmax.f32 %v4138, %v4304
        %v4343 = vmax.f32 %v4143, %v4309
        %v4344 = vmax.f32 %v4148, %v4314
        %v4345 = vmax.f32 %v4153, %v4319
        %v4346 = vmax.f32 %v4158, %v4324
        %v4347 = vmax.f32 %v4163, %v4329
        %v4348 = vmax.f32 %v4332, 0.0
        %v4349 = vmax.f32 %v4333, 0.0
        %v4350 = vmax.f32 %v4334, 0.0
        %v4351 = vmax.f32 %v4335, 0.0
        %v4352 = vmax.f32 %v4336, 0.0
        %v4353 = vmax.f32 %v4337, 0.0
        %v4354 = vmax.f32 %v4338, 0.0
        %v4355 = vmax.f32 %v4339, 0.0
        %v4356 = vmax.f32 %v4340, 0.0
        %v4357 = vmax.f32 %v4341, 0.0
        %v4358 = vmax.f32 %v4342, 0.0
        %v4359 = vmax.f32 %v4343, 0.0
        %v4360 = vmax.f32 %v4344, 0.0
        %v4361 = vmax.f32 %v4345, 0.0
        %v4362 = vmax.f32 %v4346, 0.0
        %v4363 = vmax.f32 %v4347, 0.0
        %v4364 = vld [vmem:[%s7] sm:$0xff]
        %v4365 = vld [vmem:[%s7 + $0x8] sm:$0xff]
        %v4366 = vld [vmem:[%s7 + $0x10] sm:$0xff]
        %v4367 = vld [vmem:[%s7 + $0x18] sm:$0xff]
        %v4368 = vld [vmem:[%s7 + $0x20] sm:$0xff]
        %v4369 = vld [vmem:[%s7 + $0x28] sm:$0xff]
        %v4370 = vld [vmem:[%s7 + $0x30] sm:$0xff]
        %v4371 = vld [vmem:[%s7 + $0x38] sm:$0xff]
        %v4372 = vld [vmem:[%s7 + $0x40] sm:$0xff]
        %v4373 = vld [vmem:[%s7 + $0x48] sm:$0xff]
        %v4374 = vld [vmem:[%s7 + $0x50] sm:$0xff]
        %v4375 = vld [vmem:[%s7 + $0x58] sm:$0xff]
        %v4376 = vld [vmem:[%s7 + $0x60] sm:$0xff]
        %v4377 = vld [vmem:[%s7 + $0x68] sm:$0xff]
        %v4378 = vld [vmem:[%s7 + $0x70] sm:$0xff]
        %v4379 = vld [vmem:[%s7 + $0x78] sm:$0xff]
        %v4380 = vld [vmem:[%s7 + $0x80] sm:$0xff]
        %v4381 = vld [vmem:[%s7 + $0x88] sm:$0xff]
        %v4382 = vld [vmem:[%s7 + $0x90] sm:$0xff]
        %v4383 = vld [vmem:[%s7 + $0x98] sm:$0xff]
        %v4384 = vld [vmem:[%s7 + $0xa0] sm:$0xff]
        %v4385 = vld [vmem:[%s7 + $0xa8] sm:$0xff]
        %v4386 = vld [vmem:[%s7 + $0xb0] sm:$0xff]
        %v4387 = vld [vmem:[%s7 + $0xb8] sm:$0xff]
        %v4388 = vld [vmem:[%s7 + $0xc0] sm:$0xff]
        %v4389 = vld [vmem:[%s7 + $0xc8] sm:$0xff]
        %v4390 = vld [vmem:[%s7 + $0xd0] sm:$0xff]
        %v4391 = vld [vmem:[%s7 + $0xd8] sm:$0xff]
        %v4392 = vld [vmem:[%s7 + $0xe0] sm:$0xff]
        %v4393 = vld [vmem:[%s7 + $0xe8] sm:$0xff]
        %v4394 = vld [vmem:[%s7 + $0xf0] sm:$0xff]
        %v4395 = vld [vmem:[%s7 + $0xf8] sm:$0xff]
        %v4396 = vld [vmem:[%s7 + $0x100] sm:$0xff]
        %v4397 = vld [vmem:[%s7 + $0x108] sm:$0xff]
        %v4398 = vld [vmem:[%s7 + $0x110] sm:$0xff]
        %v4399 = vld [vmem:[%s7 + $0x118] sm:$0xff]
        %v4400 = vld [vmem:[%s7 + $0x120] sm:$0xff]
        %v4401 = vld [vmem:[%s7 + $0x128] sm:$0xff]
        %v4402 = vld [vmem:[%s7 + $0x130] sm:$0xff]
        %v4403 = vld [vmem:[%s7 + $0x138] sm:$0xff]
        %v4404 = vld [vmem:[%s7 + $0x140] sm:$0xff]
        %v4405 = vld [vmem:[%s7 + $0x148] sm:$0xff]
        %v4406 = vld [vmem:[%s7 + $0x150] sm:$0xff]
        %v4407 = vld [vmem:[%s7 + $0x158] sm:$0xff]
        %v4408 = vld [vmem:[%s7 + $0x160] sm:$0xff]
        %v4409 = vld [vmem:[%s7 + $0x168] sm:$0xff]
        %v4410 = vld [vmem:[%s7 + $0x170] sm:$0xff]
        %v4411 = vld [vmem:[%s7 + $0x178] sm:$0xff]
        %v4412 = vld [vmem:[%s7 + $0x180] sm:$0xff]
        %v4413 = vld [vmem:[%s7 + $0x188] sm:$0xff]
        %v4414 = vld [vmem:[%s7 + $0x190] sm:$0xff]
        %v4415 = vld [vmem:[%s7 + $0x198] sm:$0xff]
        %v4416 = vld [vmem:[%s7 + $0x1a0] sm:$0xff]
        %v4417 = vld [vmem:[%s7 + $0x1a8] sm:$0xff]
        %v4418 = vld [vmem:[%s7 + $0x1b0] sm:$0xff]
        %v4419 = vld [vmem:[%s7 + $0x1b8] sm:$0xff]
        %v4420 = vld [vmem:[%s7 + $0x1c0] sm:$0xff]
        %v4421 = vld [vmem:[%s7 + $0x1c8] sm:$0xff]
        %v4422 = vld [vmem:[%s7 + $0x1d0] sm:$0xff]
        %v4423 = vld [vmem:[%s7 + $0x1d8] sm:$0xff]
        %v4424 = vld [vmem:[%s7 + $0x1e0] sm:$0xff]
        %v4425 = vld [vmem:[%s7 + $0x1e8] sm:$0xff]
        %v4426 = vld [vmem:[%s7 + $0x1f0] sm:$0xff]
        %v4427 = vld [vmem:[%s7 + $0x1f8] sm:$0xff]
        %v4428 = vld [vmem:[%s8] sm:$0x1]
        %v4430 = vlaneseq
        %v4431 = vshrl.u32 %v4430, 7
        %v4432 = vsub.s32 0, %v4431
        %v4433 = vrot.slane %v4428, %v4432
        %4435 = vmatprep.subr.mxu0 0.0
        %4436 = vmatpush1.msra.mxu0 %v4364
        %4437 = vmatprep.subr.mxu0 0.0
        %4438 = vmatpush1.msra.mxu0 %v4365
        %4439 = vmatprep.subr.mxu0 0.0
        %4440 = vmatpush1.msra.mxu0 %v4366
        %4441 = vmatprep.subr.mxu0 0.0
        %4442 = vmatpush1.msra.mxu0 %v4367
        %4443 = vmatprep.subr.mxu0 0.0
        %4444 = vmatpush1.msra.mxu0 %v4368
        %4445 = vmatprep.subr.mxu0 0.0
        %4446 = vmatpush1.msra.mxu0 %v4369
        %4447 = vmatprep.subr.mxu0 0.0
        %4448 = vmatpush1.msra.mxu0 %v4370
        %4449 = vmatprep.subr.mxu0 0.0
        %4450 = vmatpush1.msra.mxu0 %v4371
        %4451 = vmatprep.subr.mxu0 0.0
        %4452 = vmatpush1.msra.mxu0 %v4372
        %4453 = vmatprep.subr.mxu0 0.0
        %4454 = vmatpush1.msra.mxu0 %v4373
        %4455 = vmatprep.subr.mxu0 0.0
        %4456 = vmatpush1.msra.mxu0 %v4374
        %4457 = vmatprep.subr.mxu0 0.0
        %4458 = vmatpush1.msra.mxu0 %v4375
        %4459 = vmatprep.subr.mxu0 0.0
        %4460 = vmatpush1.msra.mxu0 %v4376
        %4461 = vmatprep.subr.mxu0 0.0
        %4462 = vmatpush1.msra.mxu0 %v4377
        %4463 = vmatprep.subr.mxu0 0.0
        %4464 = vmatpush1.msra.mxu0 %v4378
        %4465 = vmatprep.subr.mxu0 0.0
        %4466 = vmatpush1.msra.mxu0 %v4379
        %4467 = vmatprep.subr.mxu0 0.0
        %4468 = vmatpush1.msra.mxu0 %v4380
        %4469 = vmatprep.subr.mxu0 0.0
        %4470 = vmatpush1.msra.mxu0 %v4381
        %4471 = vmatprep.subr.mxu0 0.0
        %4472 = vmatpush1.msra.mxu0 %v4382
        %4473 = vmatprep.subr.mxu0 0.0
        %4474 = vmatpush1.msra.mxu0 %v4383
        %4475 = vmatprep.subr.mxu0 0.0
        %4476 = vmatpush1.msra.mxu0 %v4384
        %4477 = vmatprep.subr.mxu0 0.0
        %4478 = vmatpush1.msra.mxu0 %v4385
        %4479 = vmatprep.subr.mxu0 0.0
        %4480 = vmatpush1.msra.mxu0 %v4386
        %4481 = vmatprep.subr.mxu0 0.0
        %4482 = vmatpush1.msra.mxu0 %v4387
        %4483 = vmatprep.subr.mxu0 0.0
        %4484 = vmatpush1.msra.mxu0 %v4388
        %4485 = vmatprep.subr.mxu0 0.0
        %4486 = vmatpush1.msra.mxu0 %v4389
        %4487 = vmatprep.subr.mxu0 0.0
        %4488 = vmatpush1.msra.mxu0 %v4390
        %4489 = vmatprep.subr.mxu0 0.0
        %4490 = vmatpush1.msra.mxu0 %v4391
        %4491 = vmatprep.subr.mxu0 0.0
        %4492 = vmatpush1.msra.mxu0 %v4392
        %4493 = vmatprep.subr.mxu0 0.0
        %4494 = vmatpush1.msra.mxu0 %v4393
        %4495 = vmatprep.subr.mxu0 0.0
        %4496 = vmatpush1.msra.mxu0 %v4394
        %4497 = vmatprep.subr.mxu0 0.0
        %4498 = vmatpush1.msra.mxu0 %v4395
        %4499 = vmatprep.mubr.f32.mxu0 %v4352
        %4500 = vmatmul.mubr.f32.gmra.mrb[0].mxu0 %v4348
        %v4501 = vpop.f32.mrb[0].mxu0
        %v4502 = vadd.f32 %v4433, %v4501
        %v4503 = vpop.f32.mrb[0].mxu0
        %4504 = vmatprep.mubr.f32.mxu0 %v4353
        %4505 = vmatmul.mubr.f32.gmra.mrb[0].mxu0 %v4349
        %v4506 = vpop.f32.mrb[0].mxu0
        %v4507 = vadd.f32 %v4433, %v4506
        %v4508 = vpop.f32.mrb[0].mxu0
        %4509 = vmatprep.mubr.f32.mxu0 %v4354
        %4510 = vmatmul.mubr.f32.gmra.mrb[0].mxu0 %v4350
        %v4511 = vpop.f32.mrb[0].mxu0
        %v4512 = vadd.f32 %v4433, %v4511
        %v4513 = vpop.f32.mrb[0].mxu0
        %4514 = vmatprep.mubr.f32.mxu0 %v4355
        %4515 = vmatmul.mubr.f32.gmra.mrb[0].mxu0 %v4351
        %v4516 = vpop.f32.mrb[0].mxu0
        %v4517 = vadd.f32 %v4433, %v4516
        %v4518 = vpop.f32.mrb[0].mxu0
        %4519 = vdwg.mxu0
        %4520 = vmatprep.subr.mxu0 0.0
        %4521 = vmatpush1.msra.mxu0 %v4396
        %4522 = vmatprep.subr.mxu0 0.0
        %4523 = vmatpush1.msra.mxu0 %v4397
        %4524 = vmatprep.subr.mxu0 0.0
        %4525 = vmatpush1.msra.mxu0 %v4398
        %4526 = vmatprep.subr.mxu0 0.0
        %4527 = vmatpush1.msra.mxu0 %v4399
        %4528 = vmatprep.subr.mxu0 0.0
        %4529 = vmatpush1.msra.mxu0 %v4400
        %4530 = vmatprep.subr.mxu0 0.0
        %4531 = vmatpush1.msra.mxu0 %v4401
        %4532 = vmatprep.subr.mxu0 0.0
        %4533 = vmatpush1.msra.mxu0 %v4402
        %4534 = vmatprep.subr.mxu0 0.0
        %4535 = vmatpush1.msra.mxu0 %v4403
        %4536 = vmatprep.subr.mxu0 0.0
        %4537 = vmatpush1.msra.mxu0 %v4404
        %4538 = vmatprep.subr.mxu0 0.0
        %4539 = vmatpush1.msra.mxu0 %v4405
        %4540 = vmatprep.subr.mxu0 0.0
        %4541 = vmatpush1.msra.mxu0 %v4406
        %4542 = vmatprep.subr.mxu0 0.0
        %4543 = vmatpush1.msra.mxu0 %v4407
        %4544 = vmatprep.subr.mxu0 0.0
        %4545 = vmatpush1.msra.mxu0 %v4408
        %4546 = vmatprep.subr.mxu0 0.0
        %4547 = vmatpush1.msra.mxu0 %v4409
        %4548 = vmatprep.subr.mxu0 0.0
        %4549 = vmatpush1.msra.mxu0 %v4410
        %4550 = vmatprep.subr.mxu0 0.0
        %4551 = vmatpush1.msra.mxu0 %v4411
        %4552 = vmatprep.subr.mxu0 0.0
        %4553 = vmatpush1.msra.mxu0 %v4412
        %4554 = vmatprep.subr.mxu0 0.0
        %4555 = vmatpush1.msra.mxu0 %v4413
        %4556 = vmatprep.subr.mxu0 0.0
        %4557 = vmatpush1.msra.mxu0 %v4414
        %4558 = vmatprep.subr.mxu0 0.0
        %4559 = vmatpush1.msra.mxu0 %v4415
        %4560 = vmatprep.subr.mxu0 0.0
        %4561 = vmatpush1.msra.mxu0 %v4416
        %4562 = vmatprep.subr.mxu0 0.0
        %4563 = vmatpush1.msra.mxu0 %v4417
        %4564 = vmatprep.subr.mxu0 0.0
        %4565 = vmatpush1.msra.mxu0 %v4418
        %4566 = vmatprep.subr.mxu0 0.0
        %4567 = vmatpush1.msra.mxu0 %v4419
        %4568 = vmatprep.subr.mxu0 0.0
        %4569 = vmatpush1.msra.mxu0 %v4420
        %4570 = vmatprep.subr.mxu0 0.0
        %4571 = vmatpush1.msra.mxu0 %v4421
        %4572 = vmatprep.subr.mxu0 0.0
        %4573 = vmatpush1.msra.mxu0 %v4422
        %4574 = vmatprep.subr.mxu0 0.0
        %4575 = vmatpush1.msra.mxu0 %v4423
        %4576 = vmatprep.subr.mxu0 0.0
        %4577 = vmatpush1.msra.mxu0 %v4424
        %4578 = vmatprep.subr.mxu0 0.0
        %4579 = vmatpush1.msra.mxu0 %v4425
        %4580 = vmatprep.subr.mxu0 0.0
        %4581 = vmatpush1.msra.mxu0 %v4426
        %4582 = vmatprep.subr.mxu0 0.0
        %4583 = vmatpush1.msra.mxu0 %v4427
        %4584 = vmatprep.mubr.f32.mxu0 %v4360
        %4585 = vmatmul.mubr.f32.gmra.mrb[0].mxu0 %v4356
        %v4586 = vpop.f32.mrb[0].mxu0
        %v4587 = vadd.f32 %v4502, %v4586
        %v4588 = vpop.f32.mrb[0].mxu0
        %4589 = vmatprep.mubr.f32.mxu0 %v4361
        %4590 = vmatmul.mubr.f32.gmra.mrb[0].mxu0 %v4357
        %v4591 = vpop.f32.mrb[0].mxu0
        %v4592 = vadd.f32 %v4507, %v4591
        %v4593 = vpop.f32.mrb[0].mxu0
        %4594 = vmatprep.mubr.f32.mxu0 %v4362
        %4595 = vmatmul.mubr.f32.gmra.mrb[0].mxu0 %v4358
        %v4596 = vpop.f32.mrb[0].mxu0
        %v4597 = vadd.f32 %v4512, %v4596
        %v4598 = vpop.f32.mrb[0].mxu0
        %4599 = vmatprep.mubr.f32.mxu0 %v4363
        %4600 = vmatmul.mubr.f32.gmra.mrb[0].mxu0 %v4359
        %v4601 = vpop.f32.mrb[0].mxu0
        %v4602 = vadd.f32 %v4517, %v4601
        %v4603 = vpop.f32.mrb[0].mxu0
        %4604 = vdwg.mxu0
        %v4605 = vmax.f32 %v4587, 0.0
        %v4606 = vmax.f32 %v4592, 0.0
        %v4607 = vmax.f32 %v4597, 0.0
        %v4608 = vmax.f32 %v4602, 0.0
        %v4609 = vld [vmem:[%s9] sm:$0xff]
        %v4610 = vld [vmem:[%s9 + $0x8] sm:$0xff]
        %v4611 = vld [vmem:[%s9 + $0x10] sm:$0xff]
        %v4612 = vld [vmem:[%s9 + $0x18] sm:$0xff]
        %v4613 = vld [vmem:[%s9 + $0x20] sm:$0xff]
        %v4614 = vld [vmem:[%s9 + $0x28] sm:$0xff]
        %v4615 = vld [vmem:[%s9 + $0x30] sm:$0x3]
        %v4616 = vld [vmem:[%s10] sm:$0x1]
        %v4618 = vlaneseq
        %v4619 = vshrl.u32 %v4618, 7
        %v4620 = vsub.s32 0, %v4619
        %v4621 = vrot.slane %v4616, %v4620
        %vm4623 = vcmask 408576
        %v4625 = vsel %vm4623, %v4605, 0
        %v4628 = vsel %vm4623, %v4606, 0
        %v4631 = vsel %vm4623, %v4607, 0
        %v4634 = vsel %vm4623, %v4608, 0
        %vm4636 = vcmask 1041408
        %v4638 = vsel %vm4636, %v4615, 0
        %4640 = vmatprep.subr.mxu0 0.0
        %4641 = vmatpush1.msra.mxu0 %v4609
        %4642 = vmatprep.subr.mxu0 0.0
        %4643 = vmatpush1.msra.mxu0 %v4610
        %4644 = vmatprep.subr.mxu0 0.0
        %4645 = vmatpush1.msra.mxu0 %v4611
        %4646 = vmatprep.subr.mxu0 0.0
        %4647 = vmatpush1.msra.mxu0 %v4612
        %4648 = vmatprep.subr.mxu0 0.0
        %4649 = vmatpush1.msra.mxu0 %v4613
        %4650 = vmatprep.subr.mxu0 0.0
        %4651 = vmatpush1.msra.mxu0 %v4614
        %4652 = vmatprep.subr.mxu0 0.0
        %4653 = vmatpush1.msra.mxu0 %v4638
        %4654 = vmatprep.subr.mxu0 0.0
        %4655 = vmatpush1.msra.mxu0 0.0
        %4656 = vmatprep.subr.mxu0 0.0
        %4657 = vmatpush1.msra.mxu0 0.0
        %4658 = vmatprep.subr.mxu0 0.0
        %4659 = vmatpush1.msra.mxu0 0.0
        %4660 = vmatprep.subr.mxu0 0.0
        %4661 = vmatpush1.msra.mxu0 0.0
        %4662 = vmatprep.subr.mxu0 0.0
        %4663 = vmatpush1.msra.mxu0 0.0
        %4664 = vmatprep.subr.mxu0 0.0
        %4665 = vmatpush1.msra.mxu0 0.0
        %4666 = vmatprep.subr.mxu0 0.0
        %4667 = vmatpush1.msra.mxu0 0.0
        %4668 = vmatprep.subr.mxu0 0.0
        %4669 = vmatpush1.msra.mxu0 0.0
        %4670 = vmatprep.subr.mxu0 0.0
        %4671 = vmatpush1.msra.mxu0 0.0
        %4672 = vmatprep.subr.mxu0 0.0
        %4673 = vmatpush1.msra.mxu0 0.0
        %4674 = vmatprep.subr.mxu0 0.0
        %4675 = vmatpush1.msra.mxu0 0.0
        %4676 = vmatprep.subr.mxu0 0.0
        %4677 = vmatpush1.msra.mxu0 0.0
        %4678 = vmatprep.subr.mxu0 0.0
        %4679 = vmatpush1.msra.mxu0 0.0
        %4680 = vmatprep.subr.mxu0 0.0
        %4681 = vmatpush1.msra.mxu0 0.0
        %4682 = vmatprep.subr.mxu0 0.0
        %4683 = vmatpush1.msra.mxu0 0.0
        %4684 = vmatprep.subr.mxu0 0.0
        %4685 = vmatpush1.msra.mxu0 0.0
        %4686 = vmatprep.subr.mxu0 0.0
        %4687 = vmatpush1.msra.mxu0 0.0
        %4688 = vmatprep.subr.mxu0 0.0
        %4689 = vmatpush1.msra.mxu0 0.0
        %4690 = vmatprep.subr.mxu0 0.0
        %4691 = vmatpush1.msra.mxu0 0.0
        %4692 = vmatprep.subr.mxu0 0.0
        %4693 = vmatpush1.msra.mxu0 0.0
        %4694 = vmatprep.subr.mxu0 0.0
        %4695 = vmatpush1.msra.mxu0 0.0
        %4696 = vmatprep.subr.mxu0 0.0
        %4697 = vmatpush1.msra.mxu0 0.0
        %4698 = vmatprep.subr.mxu0 0.0
        %4699 = vmatpush1.msra.mxu0 0.0
        %4700 = vmatprep.subr.mxu0 0.0
        %4701 = vmatpush1.msra.mxu0 0.0
        %4702 = vmatprep.subr.mxu0 0.0
        %4703 = vmatpush1.msra.mxu0 0.0
        %4704 = vmatprep.mubr.f32.mxu0 0.0
        %4705 = vmatmul.mubr.f32.gmra.mrb[0].mxu0 %v4625
        %v4706 = vpop.f32.mrb[0].mxu0
        %v4707 = vadd.f32 %v4621, %v4706
        %v4708 = vpop.f32.mrb[0].mxu0
        %4709 = vmatprep.mubr.f32.mxu0 0.0
        %4710 = vmatmul.mubr.f32.gmra.mrb[0].mxu0 %v4628
        %v4711 = vpop.f32.mrb[0].mxu0
        %v4712 = vadd.f32 %v4621, %v4711
        %v4713 = vpop.f32.mrb[0].mxu0
        %4714 = vmatprep.mubr.f32.mxu0 0.0
        %4715 = vmatmul.mubr.f32.gmra.mrb[0].mxu0 %v4631
        %v4716 = vpop.f32.mrb[0].mxu0
        %v4717 = vadd.f32 %v4621, %v4716
        %v4718 = vpop.f32.mrb[0].mxu0
        %4719 = vmatprep.mubr.f32.mxu0 0.0
        %4720 = vmatmul.mubr.f32.gmra.mrb[0].mxu0 %v4634
        %v4721 = vpop.f32.mrb[0].mxu0
        %v4722 = vadd.f32 %v4621, %v4721
        %v4723 = vpop.f32.mrb[0].mxu0
        %4724 = vdwg.mxu0
        %vm4725 = vcmask 80896
        %4726 = vst.msk [vmem:[%s790] sm:$0xff] %vm4725, %v4707
        %4727 = vst.msk [vmem:[%s790 + $0x8] sm:$0xff] %vm4725, %v4712
        %4728 = vst.msk [vmem:[%s790 + $0x10] sm:$0xff] %vm4725, %v4717
        %4729 = vst.msk [vmem:[%s790 + $0x18] sm:$0xff] %vm4725, %v4722
        %s4730 = smul.u32 4, %s22
        %p4731 = scmp.lt.s32.totalorder %s4730, 7
        %s4732 = scalar_select %p4731, %s4730, 7
        %s4733 = smul.addr %s4732, 8
        %s4734 = scalar_lea.vmem %s11, %s4733
        // Predicated region
        $region88: #{lenet_forward.1} parent=82 // pred_check
          %p4735 = pneg %p276
        $region89: #{lenet_forward.1} parent=82 // pred_check_branch
          %4737 = sbr.rel (%p4735) target = $region91
        $region90: #{lenet_forward.1} parent=82 // pred_region
          %s4738 = smul.u32 4, %s22
        $region91: #{lenet_forward.1} parent=82 // pred_fallthru
          _
      $region83: #{lenet_forward.1} parent=5 // pred_fallthru
        _
      %p4739 = scmp.le.s32.totalorder 2, %s17
      // Predicated region
      $region92: #{lenet_forward.1} parent=5 // pred_check
        %p4740 = pneg %p4739
      $region93: #{lenet_forward.1} parent=5 // pred_check_branch
        %4742 = sbr.rel (%p4740) target = $region95
      $region94: #{lenet_forward.1} parent=5 // pred_region
        %s4743 = ssub.s32 %s17, 2
        // Predicated region
        $region96: #{lenet_forward.1} parent=94 // pred_check
          %p4744 = pneg %p282
        $region97: #{lenet_forward.1} parent=94 // pred_check_branch
          %4746 = sbr.rel (%p4744) target = $region99
        $region98: #{lenet_forward.1} parent=94 // pred_region
          %s4747 = smul.u32 4, %s23
          %p4748 = scmp.lt.s32.totalorder %s4747, 7
          %s4749 = scalar_select %p4748, %s4747, 7
          %s4750 = smul.addr %s4749, 8
          %s4751 = scalar_lea.vmem %s11, %s4750
        $region99: #{lenet_forward.1} parent=94 // pred_fallthru
          _
      $region95: #{lenet_forward.1} parent=5 // pred_fallthru
        _
    $region6: #{lenet_forward.1} parent=1 // loop_footer
      %s21 = sadd.s32 1, %s17
    $region7: #{lenet_forward.1} parent=1 // loop_footer_branch
      %16 = sbr.rel target = $region3
    $region8: #{lenet_forward.1} parent=1 // loop_exit
      _

</llo_original>
